<compile_context>
chip_gen: v6e
topology: v6e:2x2x1
jax: 0.10.0
libtpu: 0.0.40
codegen_flags: <defaults>
</compile_context>

<pallas_src>
import functools

import jax
import jax.numpy as jnp
from jax import lax
from jax.experimental import pallas as pl
from jax.experimental.pallas import tpu as pltpu

EPS = 1e-12
POWER_ITERATIONS = 1

# bf16 MXU inputs on all current TPU gens; accumulation stays f32 in-kernel.
MATMUL_INPUT_DTYPE = jnp.bfloat16


def _round_up(x, m):
    return ((x + m - 1) // m) * m


# ----------------------------- Pallas kernels ------------------------------ #

def spectral_norm_kernel(wt_ref, u_ref, v_ref, isig_ref, u_out_ref, v_out_ref):
    """Power iteration on the flattened weight, entirely in VMEM (f32, exact).

    wt_ref: (Kp, Hp) = W^T, zero-padded (Hp = padded Cout, Kp = padded Cin*kh*kw)
    u_ref : (1, Hp)  left singular-vector estimate (row vector)
    v_ref : (1, Kp)  right singular-vector estimate (row vector)

    Outputs 1/sigma (== ||W v||^-1, which is exactly u's normalization factor,
    so no extra matmul / reduction is needed) plus the updated u, v.
    Note: this kernel is tiny and VMEM-load bound (M=1 matvecs); it is kept
    deliberately minimal — the real work is the conv kernel.
    """
    u = u_ref[...]
    v = v_ref[...]

    if POWER_ITERATIONS == 0:
        # Match PyTorch: sigma = u . (W v) computed from the stored u, v.
        wv = jnp.dot(v, wt_ref[...], preferred_element_type=jnp.float32)   # (1, Hp) = W v
        sigma = jnp.sum(u * wv, axis=1, keepdims=True)
        inv_sigma = (1.0 / sigma).astype(jnp.float32)
    else:
        inv_sigma = jnp.ones((1, 1), jnp.float32)
        for _ in range(POWER_ITERATIONS):
            # v = l2normalize(W^T u): contract u dim1 with wt dim1 -> (1, Kp);
            # the weight ref is read directly (no materialized copy / transpose).
            wtu = lax.dot_general(u, wt_ref[...], (((1,), (1,)), ((), ())),
                                  preferred_element_type=jnp.float32)
            v = wtu * lax.rsqrt(
                jnp.maximum(jnp.sum(wtu * wtu, axis=1, keepdims=True), EPS * EPS))
            # u = l2normalize(W v): v @ (W^T) = (1, Hp)
            wv = jnp.dot(v, wt_ref[...], preferred_element_type=jnp.float32)
            # sigma = u . (W v) = ||W v||  =>  1/sigma is u's normalization factor.
            inv_sigma = lax.rsqrt(
                jnp.maximum(jnp.sum(wv * wv, axis=1, keepdims=True), EPS * EPS))
            u = wv * inv_sigma

    isig_ref[...] = inv_sigma
    u_out_ref[...] = u.astype(u_out_ref.dtype)
    v_out_ref[...] = v.astype(v_out_ref.dtype)


def _conv_taps_kernel(isig_ref, xp_ref, w_ref, b_ref, o_ref, *,
                      H, W, kh, kw, Cinp, block_co):
    """Direct 'same' conv for one image / one Cout block, as kh*kw shifted matmuls.

    isig_ref: (1, 1) f32 in SMEM — 1/sigma; scaling the accumulator is exactly
              convolving with w/sigma (conv is linear).
    xp_ref  : (1, H+2p, W+2p, Cinp) halo'd padded NHWC image (bf16)
    w_ref   : (kh*kw, Cinp, block_co) per-tap weight matrices (bf16)
    b_ref   : (1, block_co) f32 bias
    o_ref   : (H*W, block_co) f32, lane-dense
    """
    inv_sigma = isig_ref[0, 0]
    band = xp_ref[0]                                   # (H+2p, W+2p, Cinp)
    acc = jnp.zeros((H * W, block_co), jnp.float32)
    for t in range(kh * kw):                           # static, unrolled tap loop
        i, j = t // kw, t % kw
        tap = band[i:i + H, j:j + W, :].reshape(H * W, Cinp)   # VMEM-only reshape
        acc = acc + jnp.dot(tap, w_ref[t], preferred_element_type=jnp.float32)
    o_ref[...] = (acc * inv_sigma + b_ref[...].astype(jnp.float32)).astype(o_ref.dtype)


# ------------------------------ JAX wrappers ------------------------------- #

def spectral_normalize(wt_pad, u_pad, v_pad):
    """Returns (inv_sigma (1,1), u_new (1,Hp), v_new (1,Kp)); whole arrays in VMEM."""
    Kp, Hp = wt_pad.shape
    return pl.pallas_call(
        spectral_norm_kernel,
        out_shape=(
            jax.ShapeDtypeStruct((1, 1), jnp.float32),
            jax.ShapeDtypeStruct((1, Hp), jnp.float32),
            jax.ShapeDtypeStruct((1, Kp), jnp.float32),
        ),
    )(wt_pad, u_pad, v_pad)


def conv2d_direct_pallas(inv_sigma, xp, w_taps, bias_row, *, H, W, kh, kw):
    """Direct (shifted-matmul) conv with fused 1/sigma + bias; no im2col.

    xp:     (N, H+2p, W+2p, Cinp)  spatially padded NHWC activations (bf16)
    w_taps: (kh*kw, Cinp, Coutp)   per-tap weight matrices (bf16)
    Returns (N*H*W, Coutp) f32, row-major over (n, h, w).
    """
    N, Hp, Wp, Cinp = xp.shape
    ntaps, _, Coutp = w_taps.shape

    block_co = 256 if Coutp % 256 == 0 else 128        # full-width MXU tiles when possible
    block_co = min(block_co, Coutp)
    nj = Coutp // block_co
    M = N * H * W

    kernel = functools.partial(_conv_taps_kernel, H=H, W=W, kh=kh, kw=kw,
                               Cinp=Cinp, block_co=block_co)

    itemsize = jnp.dtype(MATMUL_INPUT_DTYPE).itemsize
    cost = pl.CostEstimate(
        flops=2 * M * ntaps * Cinp * Coutp,
        transcendentals=0,
        bytes_accessed=(xp.size * itemsize + w_taps.size * itemsize
                        + bias_row.size * 4 + M * Coutp * 4),
    )
    # Double-buffered per-step footprint; clamp for v7x's 64 MiB/TC physical VMEM.
    block_bytes = (Hp * Wp * Cinp * itemsize
                   + ntaps * Cinp * block_co * itemsize
                   + block_co * 4
                   + H * W * block_co * 4)
    vmem_limit = int(min(max(8 * block_bytes, 16 << 20), 48 << 20))

    return pl.pallas_call(
        kernel,
        out_shape=jax.ShapeDtypeStruct((M, Coutp), jnp.float32),
        # co-block outer, batch inner: the tap-weight block index is constant
        # across the inner axis, so Pallas keeps it VMEM-resident (no refetch).
        grid=(nj, N),
        in_specs=[
            pl.BlockSpec(memory_space=pltpu.MemorySpace.SMEM),              # 1/sigma (1,1)
            pl.BlockSpec((1, Hp, Wp, Cinp), lambda j, n: (n, 0, 0, 0)),     # padded image
            pl.BlockSpec((ntaps, Cinp, block_co), lambda j, n: (0, 0, j)),  # tap weights
            pl.BlockSpec((1, block_co), lambda j, n: (0, j)),               # bias
        ],
        out_specs=pl.BlockSpec((H * W, block_co), lambda j, n: (n, j)),
        compiler_params=pltpu.CompilerParams(
            dimension_semantics=("parallel", "parallel"),                   # 2 TCs on v7x
            vmem_limit_bytes=vmem_limit),
        cost_estimate=cost,
    )(inv_sigma, xp, w_taps, bias_row)


def spectral_norm_conv_forward(x, w_bar, bias, u, v):
    """Forward of SpectralNorm(Conv2d): power iteration -> conv(x, w)/sigma + b."""
    N, Cin, H, W = x.shape
    Cout, _, kh, kw = w_bar.shape
    K = Cin * kh * kw
    pad = kh // 2

    Kp = _round_up(K, 8)                    # sublane-aligned (f32 power iteration)
    Coutp = _round_up(Cout, 128)            # lane-dense output / MXU lanes
    Cinp = _round_up(Cin, 16)               # bf16 sublane packing of the tap contraction

    # --- power iteration on the flattened weight (kept f32 for exact u,v,sigma) ---
    w_mat_t = jnp.transpose(w_bar.reshape(Cout, K)).astype(jnp.float32)     # (K, Cout) = W^T
    wt_pad = jnp.pad(w_mat_t, ((0, Kp - K), (0, Coutp - Cout)))
    u_pad = jnp.pad(u.reshape(1, Cout).astype(jnp.float32), ((0, 0), (0, Coutp - Cout)))
    v_pad = jnp.pad(v.reshape(1, K).astype(jnp.float32), ((0, 0), (0, Kp - K)))
    inv_sigma, u_new, v_new = spectral_normalize(wt_pad, u_pad, v_pad)

    # --- conv operands: bf16, channel-last, spatially padded; NO im2col intermediate ---
    w_taps = jnp.transpose(w_bar, (2, 3, 1, 0)).reshape(kh * kw, Cin, Cout)  # (taps, Cin, Cout)
    w_taps = jnp.pad(w_taps, ((0, 0), (0, Cinp - Cin), (0, Coutp - Cout)))
    w_taps = w_taps.astype(MATMUL_INPUT_DTYPE)

    xp = jnp.transpose(x, (0, 2, 3, 1)).astype(MATMUL_INPUT_DTYPE)           # NHWC, bf16
    xp = jnp.pad(xp, ((0, 0), (pad, pad), (pad, pad), (0, Cinp - Cin)))

    bias_row = jnp.pad(bias.reshape(1, Cout).astype(jnp.float32),
                       ((0, 0), (0, Coutp - Cout)))

    out_flat = conv2d_direct_pallas(inv_sigma, xp, w_taps, bias_row,
                                    H=H, W=W, kh=kh, kw=kw)                  # (N*H*W, Coutp)

    # Back to NCHW to match the PyTorch module contract. NHWC consumers should
    # use out_flat[:, :Cout].reshape(N, H, W, Cout) directly and skip this pass.
    out = out_flat[:, :Cout].reshape(N, H, W, Cout).transpose(0, 3, 1, 2)
    return out, u_new[0, :Cout], v_new[0, :K]


# ------------------------------- reference --------------------------------- #

def reference_forward(x, w_bar, bias, u, v):
    Cout, _, kh, kw = w_bar.shape
    w_mat = w_bar.reshape(Cout, -1)
    for _ in range(POWER_ITERATIONS):
        v = w_mat.T @ u
        v = v / (jnp.linalg.norm(v) + EPS)
        u = w_mat @ v
        u = u / (jnp.linalg.norm(u) + EPS)
    sigma = u @ (w_mat @ v)
    w_sn = w_bar / sigma
    out = lax.conv_general_dilated(
        x, w_sn, window_strides=(1, 1),
        padding=((kh // 2, kh // 2), (kw // 2, kw // 2)),
        dimension_numbers=("NCHW", "OIHW", "NCHW"),
    )
    out = out + bias.reshape(1, Cout, 1, 1)
    return out, u, v


# --------------------------------- main ------------------------------------ #

if __name__ == "__main__":
    key = jax.random.PRNGKey(0)
    kx, kw_, kb, ku, kv = jax.random.split(key, 5)

    N, Cin, Cout, H, W, K = 2, 4, 8, 16, 16, 3

    x = jax.random.normal(kx, (N, Cin, H, W), dtype=jnp.float32)
    w_bar = 0.1 * jax.random.normal(kw_, (Cout, Cin, K, K), dtype=jnp.float32)
    bias = 0.1 * jax.random.normal(kb, (Cout,), dtype=jnp.float32)

    # u, v as in _make_params: normal(0,1) then l2-normalized.
    u0 = jax.random.normal(ku, (Cout,), dtype=jnp.float32)
    v0 = jax.random.normal(kv, (Cin * K * K,), dtype=jnp.float32)
    u0 = u0 / (jnp.linalg.norm(u0) + EPS)
    v0 = v0 / (jnp.linalg.norm(v0) + EPS)

    fwd = jax.jit(spectral_norm_conv_forward)
    out, u_new, v_new = fwd(x, w_bar, bias, u0, v0)
    out = jax.block_until_ready(out)

    ref_out, ref_u, ref_v = reference_forward(x, w_bar, bias, u0, v0)
    # Conv runs with bf16 MXU inputs (f32 accumulation) -> looser tolerance than
    # a pure-f32 run; the power-iteration path (u, v, sigma) stays f32/tight.
    assert jnp.allclose(out, ref_out, atol=5e-2, rtol=5e-2), "output mismatch vs reference"
    assert jnp.allclose(u_new, ref_u, atol=1e-5, rtol=1e-5), "u mismatch vs reference"
    assert jnp.allclose(v_new, ref_v, atol=1e-5, rtol=1e-5), "v mismatch vs reference"

    print("KERNEL_OK")
</pallas_src>

<mosaic_0001>
module attributes {stable_mosaic.version = 11 : i64} {
  func.func @spectral_norm_kernel(%arg0: memref<40x128xf32, #tpu.memory_space<vmem>>, %arg1: memref<1x128xf32, #tpu.memory_space<vmem>>, %arg2: memref<1x40xf32, #tpu.memory_space<vmem>>, %arg3: memref<1x1xf32, #tpu.memory_space<vmem>>, %arg4: memref<1x128xf32, #tpu.memory_space<vmem>>, %arg5: memref<1x40xf32, #tpu.memory_space<vmem>>) attributes {dimension_semantics = [], scalar_prefetch = 0 : i64, scratch_operands = 0 : i64, tpu.core_type = #tpu.core_type<tc>} {
    %c0 = arith.constant 0 : index
    %c0_0 = arith.constant 0 : index
    %0 = vector.load %arg1[%c0, %c0_0] : memref<1x128xf32, #tpu.memory_space<vmem>>, vector<1x128xf32>
    %c0_1 = arith.constant 0 : index
    %c0_2 = arith.constant 0 : index
    %1 = vector.load %arg0[%c0_1, %c0_2] : memref<40x128xf32, #tpu.memory_space<vmem>>, vector<40x128xf32>
    %cst = arith.constant dense<0.000000e+00> : vector<1x40xf32>
    %2 = tpu.matmul %0, %1, %cst {dimension_numbers = #tpu.dot_dimension_numbers<[1], [1], [0], [0], [0, 0, 1, 0], [], []>} : vector<1x128xf32>, vector<40x128xf32>, vector<1x40xf32> -> vector<1x40xf32>
    %3 = arith.mulf %2, %2 : vector<1x40xf32>
    %cst_3 = arith.constant dense<0.000000e+00> : vector<1xf32>
    %4 = vector.multi_reduction <add>, %3, %cst_3 [1] : vector<1x40xf32> to vector<1xf32>
    %5 = vector.shape_cast %4 : vector<1xf32> to vector<1x1xf32>
    %cst_4 = arith.constant 1.000000e-24 : f32
    %6 = vector.broadcast %cst_4 : f32 to vector<1x1xf32>
    %7 = arith.maximumf %5, %6 : vector<1x1xf32>
    %8 = math.rsqrt %7 : vector<1x1xf32>
    %9 = vector.broadcast %8 : vector<1x1xf32> to vector<1x40xf32>
    %10 = arith.mulf %2, %9 : vector<1x40xf32>
    %c0_5 = arith.constant 0 : index
    %c0_6 = arith.constant 0 : index
    %11 = vector.load %arg0[%c0_5, %c0_6] : memref<40x128xf32, #tpu.memory_space<vmem>>, vector<40x128xf32>
    %cst_7 = arith.constant dense<0.000000e+00> : vector<1x128xf32>
    %12 = tpu.matmul %10, %11, %cst_7 {dimension_numbers = #tpu.dot_dimension_numbers<[1], [0], [0], [1], [0, 0, 1, 1], [], []>} : vector<1x40xf32>, vector<40x128xf32>, vector<1x128xf32> -> vector<1x128xf32>
    %13 = arith.mulf %12, %12 : vector<1x128xf32>
    %cst_8 = arith.constant dense<0.000000e+00> : vector<1xf32>
    %14 = vector.multi_reduction <add>, %13, %cst_8 [1] : vector<1x128xf32> to vector<1xf32>
    %15 = vector.shape_cast %14 : vector<1xf32> to vector<1x1xf32>
    %cst_9 = arith.constant 1.000000e-24 : f32
    %16 = vector.broadcast %cst_9 : f32 to vector<1x1xf32>
    %17 = arith.maximumf %15, %16 : vector<1x1xf32>
    %18 = math.rsqrt %17 : vector<1x1xf32>
    %19 = vector.broadcast %18 : vector<1x1xf32> to vector<1x128xf32>
    %20 = arith.mulf %12, %19 : vector<1x128xf32>
    %c0_10 = arith.constant 0 : index
    %c0_11 = arith.constant 0 : index
    %21 = vector.load %arg3[%c0_10, %c0_11] : memref<1x1xf32, #tpu.memory_space<vmem>>, vector<1x1xf32>
    tpu.vector_store %arg3[%c0_10, %c0_11], %18 {strides = array<i32>} : memref<1x1xf32, #tpu.memory_space<vmem>>, vector<1x1xf32>,
    %c0_12 = arith.constant 0 : index
    %c0_13 = arith.constant 0 : index
    %22 = vector.load %arg4[%c0_12, %c0_13] : memref<1x128xf32, #tpu.memory_space<vmem>>, vector<1x128xf32>
    tpu.vector_store %arg4[%c0_12, %c0_13], %20 {strides = array<i32>} : memref<1x128xf32, #tpu.memory_space<vmem>>, vector<1x128xf32>,
    %c0_14 = arith.constant 0 : index
    %c0_15 = arith.constant 0 : index
    %23 = vector.load %arg5[%c0_14, %c0_15] : memref<1x40xf32, #tpu.memory_space<vmem>>, vector<1x40xf32>
    tpu.vector_store %arg5[%c0_14, %c0_15], %10 {strides = array<i32>} : memref<1x40xf32, #tpu.memory_space<vmem>>, vector<1x40xf32>,
    return
  }
}

module attributes {stable_mosaic.version = 11 : i64} {
  func.func @_conv_taps_kernel(%arg0: i32, %arg1: i32, %arg2: memref<1x1xf32, #tpu.memory_space<smem>>, %arg3: memref<1x18x18x16xbf16, #tpu.memory_space<vmem>>, %arg4: memref<9x16x128xbf16, #tpu.memory_space<vmem>>, %arg5: memref<1x128xf32, #tpu.memory_space<vmem>>, %arg6: memref<256x128xf32, #tpu.memory_space<vmem>>) attributes {dimension_semantics = [#tpu.dimension_semantics<parallel>, #tpu.dimension_semantics<parallel>], iteration_bounds = array<i64: 1, 2>, scalar_prefetch = 0 : i64, scratch_operands = 0 : i64, tpu.core_type = #tpu.core_type<tc>, window_params = [{transform_indices = @transform_0, window_bounds = array<i64: 1, 1>}, {transform_indices = @transform_1, window_bounds = array<i64: 1, 18, 18, 16>}, {transform_indices = @transform_2, window_bounds = array<i64: 9, 16, 128>}, {transform_indices = @transform_3, window_bounds = array<i64: 1, 128>}, {transform_indices = @transform_4, window_bounds = array<i64: 256, 128>}]} {
    %c0 = arith.constant 0 : index
    %c0_0 = arith.constant 0 : index
    %0 = memref.load %arg2[%c0, %c0_0] : memref<1x1xf32, #tpu.memory_space<smem>>
    %c0_1 = arith.constant 0 : index
    %c0_2 = arith.constant 0 : index
    %c0_3 = arith.constant 0 : index
    %c0_4 = arith.constant 0 : index
    %1 = vector.load %arg3[%c0_1, %c0_2, %c0_3, %c0_4] : memref<1x18x18x16xbf16, #tpu.memory_space<vmem>>, vector<1x18x18x16xbf16>
    %2 = vector.shape_cast %1 : vector<1x18x18x16xbf16> to vector<18x18x16xbf16>
    %cst = arith.constant 0.000000e+00 : f32
    %3 = vector.broadcast %cst : f32 to vector<256x128xf32>
    %4 = vector.extract_strided_slice %2 {offsets = [0, 0, 0], sizes = [16, 16, 16], strides = [1, 1, 1]} : vector<18x18x16xbf16> to vector<16x16x16xbf16>
    %5 = vector.shape_cast %4 : vector<16x16x16xbf16> to vector<256x16xbf16>
    %c0_5 = arith.constant 0 : index
    %c0_6 = arith.constant 0 : index
    %c0_7 = arith.constant 0 : index
    %6 = vector.load %arg4[%c0_5, %c0_6, %c0_7] : memref<9x16x128xbf16, #tpu.memory_space<vmem>>, vector<1x16x128xbf16>
    %7 = vector.shape_cast %6 : vector<1x16x128xbf16> to vector<16x128xbf16>
    %cst_8 = arith.constant dense<0.000000e+00> : vector<256x128xf32>
    %8 = tpu.matmul %5, %7, %cst_8 {dimension_numbers = #tpu.dot_dimension_numbers<[1], [0], [0], [1], [0, 0, 1, 1], [], []>} : vector<256x16xbf16>, vector<16x128xbf16>, vector<256x128xf32> -> vector<256x128xf32>
    %9 = arith.addf %3, %8 : vector<256x128xf32>
    %10 = vector.extract_strided_slice %2 {offsets = [0, 1, 0], sizes = [16, 16, 16], strides = [1, 1, 1]} : vector<18x18x16xbf16> to vector<16x16x16xbf16>
    %11 = vector.shape_cast %10 : vector<16x16x16xbf16> to vector<256x16xbf16>
    %c1 = arith.constant 1 : index
    %c0_9 = arith.constant 0 : index
    %c0_10 = arith.constant 0 : index
    %12 = vector.load %arg4[%c1, %c0_9, %c0_10] : memref<9x16x128xbf16, #tpu.memory_space<vmem>>, vector<1x16x128xbf16>
    %13 = vector.shape_cast %12 : vector<1x16x128xbf16> to vector<16x128xbf16>
    %cst_11 = arith.constant dense<0.000000e+00> : vector<256x128xf32>
    %14 = tpu.matmul %11, %13, %cst_11 {dimension_numbers = #tpu.dot_dimension_numbers<[1], [0], [0], [1], [0, 0, 1, 1], [], []>} : vector<256x16xbf16>, vector<16x128xbf16>, vector<256x128xf32> -> vector<256x128xf32>
    %15 = arith.addf %9, %14 : vector<256x128xf32>
    %16 = vector.extract_strided_slice %2 {offsets = [0, 2, 0], sizes = [16, 16, 16], strides = [1, 1, 1]} : vector<18x18x16xbf16> to vector<16x16x16xbf16>
    %17 = vector.shape_cast %16 : vector<16x16x16xbf16> to vector<256x16xbf16>
    %c2 = arith.constant 2 : index
    %c0_12 = arith.constant 0 : index
    %c0_13 = arith.constant 0 : index
    %18 = vector.load %arg4[%c2, %c0_12, %c0_13] : memref<9x16x128xbf16, #tpu.memory_space<vmem>>, vector<1x16x128xbf16>
    %19 = vector.shape_cast %18 : vector<1x16x128xbf16> to vector<16x128xbf16>
    %cst_14 = arith.constant dense<0.000000e+00> : vector<256x128xf32>
    %20 = tpu.matmul %17, %19, %cst_14 {dimension_numbers = #tpu.dot_dimension_numbers<[1], [0], [0], [1], [0, 0, 1, 1], [], []>} : vector<256x16xbf16>, vector<16x128xbf16>, vector<256x128xf32> -> vector<256x128xf32>
    %21 = arith.addf %15, %20 : vector<256x128xf32>
    %22 = vector.extract_strided_slice %2 {offsets = [1, 0, 0], sizes = [16, 16, 16], strides = [1, 1, 1]} : vector<18x18x16xbf16> to vector<16x16x16xbf16>
    %23 = vector.shape_cast %22 : vector<16x16x16xbf16> to vector<256x16xbf16>
    %c3 = arith.constant 3 : index
    %c0_15 = arith.constant 0 : index
    %c0_16 = arith.constant 0 : index
    %24 = vector.load %arg4[%c3, %c0_15, %c0_16] : memref<9x16x128xbf16, #tpu.memory_space<vmem>>, vector<1x16x128xbf16>
    %25 = vector.shape_cast %24 : vector<1x16x128xbf16> to vector<16x128xbf16>
    %cst_17 = arith.constant dense<0.000000e+00> : vector<256x128xf32>
    %26 = tpu.matmul %23, %25, %cst_17 {dimension_numbers = #tpu.dot_dimension_numbers<[1], [0], [0], [1], [0, 0, 1, 1], [], []>} : vector<256x16xbf16>, vector<16x128xbf16>, vector<256x128xf32> -> vector<256x128xf32>
    %27 = arith.addf %21, %26 : vector<256x128xf32>
    %28 = vector.extract_strided_slice %2 {offsets = [1, 1, 0], sizes = [16, 16, 16], strides = [1, 1, 1]} : vector<18x18x16xbf16> to vector<16x16x16xbf16>
    %29 = vector.shape_cast %28 : vector<16x16x16xbf16> to vector<256x16xbf16>
    %c4 = arith.constant 4 : index
    %c0_18 = arith.constant 0 : index
    %c0_19 = arith.constant 0 : index
    %30 = vector.load %arg4[%c4, %c0_18, %c0_19] : memref<9x16x128xbf16, #tpu.memory_space<vmem>>, vector<1x16x128xbf16>
    %31 = vector.shape_cast %30 : vector<1x16x128xbf16> to vector<16x128xbf16>
    %cst_20 = arith.constant dense<0.000000e+00> : vector<256x128xf32>
    %32 = tpu.matmul %29, %31, %cst_20 {dimension_numbers = #tpu.dot_dimension_numbers<[1], [0], [0], [1], [0, 0, 1, 1], [], []>} : vector<256x16xbf16>, vector<16x128xbf16>, vector<256x128xf32> -> vector<256x128xf32>
    %33 = arith.addf %27, %32 : vector<256x128xf32>
    %34 = vector.extract_strided_slice %2 {offsets = [1, 2, 0], sizes = [16, 16, 16], strides = [1, 1, 1]} : vector<18x18x16xbf16> to vector<16x16x16xbf16>
    %35 = vector.shape_cast %34 : vector<16x16x16xbf16> to vector<256x16xbf16>
    %c5 = arith.constant 5 : index
    %c0_21 = arith.constant 0 : index
    %c0_22 = arith.constant 0 : index
    %36 = vector.load %arg4[%c5, %c0_21, %c0_22] : memref<9x16x128xbf16, #tpu.memory_space<vmem>>, vector<1x16x128xbf16>
    %37 = vector.shape_cast %36 : vector<1x16x128xbf16> to vector<16x128xbf16>
    %cst_23 = arith.constant dense<0.000000e+00> : vector<256x128xf32>
    %38 = tpu.matmul %35, %37, %cst_23 {dimension_numbers = #tpu.dot_dimension_numbers<[1], [0], [0], [1], [0, 0, 1, 1], [], []>} : vector<256x16xbf16>, vector<16x128xbf16>, vector<256x128xf32> -> vector<256x128xf32>
    %39 = arith.addf %33, %38 : vector<256x128xf32>
    %40 = vector.extract_strided_slice %2 {offsets = [2, 0, 0], sizes = [16, 16, 16], strides = [1, 1, 1]} : vector<18x18x16xbf16> to vector<16x16x16xbf16>
    %41 = vector.shape_cast %40 : vector<16x16x16xbf16> to vector<256x16xbf16>
    %c6 = arith.constant 6 : index
    %c0_24 = arith.constant 0 : index
    %c0_25 = arith.constant 0 : index
    %42 = vector.load %arg4[%c6, %c0_24, %c0_25] : memref<9x16x128xbf16, #tpu.memory_space<vmem>>, vector<1x16x128xbf16>
    %43 = vector.shape_cast %42 : vector<1x16x128xbf16> to vector<16x128xbf16>
    %cst_26 = arith.constant dense<0.000000e+00> : vector<256x128xf32>
    %44 = tpu.matmul %41, %43, %cst_26 {dimension_numbers = #tpu.dot_dimension_numbers<[1], [0], [0], [1], [0, 0, 1, 1], [], []>} : vector<256x16xbf16>, vector<16x128xbf16>, vector<256x128xf32> -> vector<256x128xf32>
    %45 = arith.addf %39, %44 : vector<256x128xf32>
    %46 = vector.extract_strided_slice %2 {offsets = [2, 1, 0], sizes = [16, 16, 16], strides = [1, 1, 1]} : vector<18x18x16xbf16> to vector<16x16x16xbf16>
    %47 = vector.shape_cast %46 : vector<16x16x16xbf16> to vector<256x16xbf16>
    %c7 = arith.constant 7 : index
    %c0_27 = arith.constant 0 : index
    %c0_28 = arith.constant 0 : index
    %48 = vector.load %arg4[%c7, %c0_27, %c0_28] : memref<9x16x128xbf16, #tpu.memory_space<vmem>>, vector<1x16x128xbf16>
    %49 = vector.shape_cast %48 : vector<1x16x128xbf16> to vector<16x128xbf16>
    %cst_29 = arith.constant dense<0.000000e+00> : vector<256x128xf32>
    %50 = tpu.matmul %47, %49, %cst_29 {dimension_numbers = #tpu.dot_dimension_numbers<[1], [0], [0], [1], [0, 0, 1, 1], [], []>} : vector<256x16xbf16>, vector<16x128xbf16>, vector<256x128xf32> -> vector<256x128xf32>
    %51 = arith.addf %45, %50 : vector<256x128xf32>
    %52 = vector.extract_strided_slice %2 {offsets = [2, 2, 0], sizes = [16, 16, 16], strides = [1, 1, 1]} : vector<18x18x16xbf16> to vector<16x16x16xbf16>
    %53 = vector.shape_cast %52 : vector<16x16x16xbf16> to vector<256x16xbf16>
    %c8 = arith.constant 8 : index
    %c0_30 = arith.constant 0 : index
    %c0_31 = arith.constant 0 : index
    %54 = vector.load %arg4[%c8, %c0_30, %c0_31] : memref<9x16x128xbf16, #tpu.memory_space<vmem>>, vector<1x16x128xbf16>
    %55 = vector.shape_cast %54 : vector<1x16x128xbf16> to vector<16x128xbf16>
    %cst_32 = arith.constant dense<0.000000e+00> : vector<256x128xf32>
    %56 = tpu.matmul %53, %55, %cst_32 {dimension_numbers = #tpu.dot_dimension_numbers<[1], [0], [0], [1], [0, 0, 1, 1], [], []>} : vector<256x16xbf16>, vector<16x128xbf16>, vector<256x128xf32> -> vector<256x128xf32>
    %57 = arith.addf %51, %56 : vector<256x128xf32>
    %58 = vector.broadcast %0 : f32 to vector<256x128xf32>
    %59 = arith.mulf %57, %58 : vector<256x128xf32>
    %c0_33 = arith.constant 0 : index
    %c0_34 = arith.constant 0 : index
    %60 = vector.load %arg5[%c0_33, %c0_34] : memref<1x128xf32, #tpu.memory_space<vmem>>, vector<1x128xf32>
    %61 = vector.broadcast %60 : vector<1x128xf32> to vector<256x128xf32>
    %62 = arith.addf %59, %61 : vector<256x128xf32>
    %c0_35 = arith.constant 0 : index
    %c0_36 = arith.constant 0 : index
    %63 = vector.load %arg6[%c0_35, %c0_36] : memref<256x128xf32, #tpu.memory_space<vmem>>, vector<256x128xf32>
    tpu.vector_store %arg6[%c0_35, %c0_36], %62 {strides = array<i32>} : memref<256x128xf32, #tpu.memory_space<vmem>>, vector<256x128xf32>,
    return
  }
  func.func @transform_0(%arg0: i32, %arg1: i32) -> (i32, i32) {
    %c0_i32 = arith.constant 0 : i32
    %c0_i32_0 = arith.constant 0 : i32
    %c0_i32_1 = arith.constant 0 : i32
    return %c0_i32, %c0_i32_0 : i32, i32
  }
  func.func @transform_1(%arg0: i32, %arg1: i32) -> (i32, i32, i32, i32) {
    %c0_i32 = arith.constant 0 : i32
    %c0_i32_0 = arith.constant 0 : i32
    %c0_i32_1 = arith.constant 0 : i32
    %c0_i32_2 = arith.constant 0 : i32
    return %arg1, %c0_i32, %c0_i32_0, %c0_i32_1 : i32, i32, i32, i32
  }
  func.func @transform_2(%arg0: i32, %arg1: i32) -> (i32, i32, i32) {
    %c0_i32 = arith.constant 0 : i32
    %c0_i32_0 = arith.constant 0 : i32
    %c0_i32_1 = arith.constant 0 : i32
    return %c0_i32, %c0_i32_0, %arg0 : i32, i32, i32
  }
  func.func @transform_3(%arg0: i32, %arg1: i32) -> (i32, i32) {
    %c0_i32 = arith.constant 0 : i32
    %c0_i32_0 = arith.constant 0 : i32
    return %c0_i32, %arg0 : i32, i32
  }
  func.func @transform_4(%arg0: i32, %arg1: i32) -> (i32, i32) {
    %c0_i32 = arith.constant 0 : i32
    return %arg1, %arg0 : i32, i32
  }
}

</mosaic_0001>

<llo_original>
// kernel: spectral_norm_conv_forward.2
$region0: #{spectral_norm_conv_forward.2}
  #allocation0 [shape = 'u32[]', space=smem, size = 0x4, offset = 0x4, fixed_abs, tag = 'smem constant byte address 0x4 - core index']
  #allocation1 [shape = 'u32[144,128]{1,0:T(1,128)}', space=vmem, size = 0x12000, scoped, tag = 'internal scratch']
  %s0 = inlined_call_operand.vmem [shape: f32[40,128], index: 0, kind: input, shape index: {}]
  %s1 = inlined_call_operand.vmem [shape: f32[1,128], index: 1, kind: input, shape index: {}]
  %s2 = inlined_call_operand.vmem [shape: f32[1,40], index: 2, kind: input, shape index: {}]
  %s3 = inlined_call_operand.hbm [shape: f32[1,1], index: 3, kind: output, shape index: {0}]
  %s4 = inlined_call_operand.vmem [shape: f32[1,128], index: 4, kind: output, shape index: {1}]
  %s5 = inlined_call_operand.vmem [shape: f32[1,40], index: 5, kind: output, shape index: {2}]
  %6 = xla_tuple %s3, %s4, %s5
  %s7 = sld [smem:[#allocation0]]
  $region38: #{spectral_norm_conv_forward.2} parent=0
    _
  %s9 = ssub.s32 1, %s7
  %s10 = scalar_select 0, %s9, %s7
  $region1: #{spectral_norm_conv_forward.2} parent=0
    #allocation2 [shape = 'u8[512]{0}', space=vmem, size = 0x400, scoped, tag = 'output window, operand 0, single buffered']
    #allocation3 [shape = 's32[1]{0}', space=sflag, size = 0x4, scoped, tag = 'scoped memory for spectral_norm_conv_forward.2']
    %11 = vsyncpa [#allocation3], 0
    // Predicated region
    $region2: #{spectral_norm_conv_forward.2} parent=1 // pred_check
      _
    $region3: #{spectral_norm_conv_forward.2} parent=1 // pred_check_branch
      %13 = sbr.rel (0) target = $region5
    $region4: #{spectral_norm_conv_forward.2} parent=1 // pred_region
      _
    $region5: #{spectral_norm_conv_forward.2} parent=1 // pred_fallthru
      _
    // Predicated region
    $region6: #{spectral_norm_conv_forward.2} parent=1 // pred_check
      _
    $region7: #{spectral_norm_conv_forward.2} parent=1 // pred_check_branch
      %15 = sbr.rel (0) target = $region9
    $region8: #{spectral_norm_conv_forward.2} parent=1 // pred_region
      _
    $region9: #{spectral_norm_conv_forward.2} parent=1 // pred_fallthru
      _
    // Predicated region
    $region10: #{spectral_norm_conv_forward.2} parent=1 // pred_check
      _
    $region11: #{spectral_norm_conv_forward.2} parent=1 // pred_check_branch
      %17 = sbr.rel (0) target = $region13
    $region12: #{spectral_norm_conv_forward.2} parent=1 // pred_region
      _
    $region13: #{spectral_norm_conv_forward.2} parent=1 // pred_fallthru
      _
    %v18 = vld [vmem:[%s1] sm:$0x1]
    %v19 = vld [vmem:[%s0] sm:$0xff]
    %v20 = vld [vmem:[%s0 + $0x8] sm:$0xff]
    %v21 = vld [vmem:[%s0 + $0x10] sm:$0xff]
    %v22 = vld [vmem:[%s0 + $0x18] sm:$0xff]
    %v23 = vld [vmem:[%s0 + $0x20] sm:$0xff]
    %24 = vmatprep.subr.mxu0 0.0
    %25 = vmatpush1.xpose.msra.mxu0 0.0
    %26 = vmatprep.subr.mxu0 0.0
    %27 = vmatpush1.xpose.msra.mxu0 0.0
    %28 = vmatprep.subr.mxu0 0.0
    %29 = vmatpush1.xpose.msra.mxu0 0.0
    %30 = vmatprep.subr.mxu0 0.0
    %31 = vmatpush1.xpose.msra.mxu0 0.0
    %32 = vmatprep.subr.mxu0 0.0
    %33 = vmatpush1.xpose.msra.mxu0 0.0
    %34 = vmatprep.subr.mxu0 0.0
    %35 = vmatpush1.xpose.msra.mxu0 0.0
    %36 = vmatprep.subr.mxu0 0.0
    %37 = vmatpush1.xpose.msra.mxu0 0.0
    %38 = vmatprep.subr.mxu0 0.0
    %39 = vmatpush1.xpose.msra.mxu0 0.0
    %40 = vmatprep.subr.mxu0 0.0
    %41 = vmatpush1.xpose.msra.mxu0 0.0
    %42 = vmatprep.subr.mxu0 0.0
    %43 = vmatpush1.xpose.msra.mxu0 0.0
    %44 = vmatprep.subr.mxu0 0.0
    %45 = vmatpush1.xpose.msra.mxu0 0.0
    %46 = vmatprep.subr.mxu0 0.0
    %47 = vmatpush1.xpose.msra.mxu0 %v23
    %48 = vmatprep.subr.mxu0 0.0
    %49 = vmatpush1.xpose.msra.mxu0 %v22
    %50 = vmatprep.subr.mxu0 0.0
    %51 = vmatpush1.xpose.msra.mxu0 %v21
    %52 = vmatprep.subr.mxu0 0.0
    %53 = vmatpush1.xpose.msra.mxu0 %v20
    %54 = vmatprep.subr.mxu0 0.0
    %55 = vmatpush1.xpose.msra.mxu0 %v19
    %56 = vmatprep.subr.mxu0 0.0
    %57 = vmatpush2.xpose.msra.mxu0 0.0
    %58 = vmatprep.subr.mxu0 0.0
    %59 = vmatpush2.xpose.msra.mxu0 0.0
    %60 = vmatprep.subr.mxu0 0.0
    %61 = vmatpush2.xpose.msra.mxu0 0.0
    %62 = vmatprep.subr.mxu0 0.0
    %63 = vmatpush2.xpose.msra.mxu0 0.0
    %64 = vmatprep.subr.mxu0 0.0
    %65 = vmatpush2.xpose.msra.mxu0 0.0
    %66 = vmatprep.subr.mxu0 0.0
    %67 = vmatpush2.xpose.msra.mxu0 0.0
    %68 = vmatprep.subr.mxu0 0.0
    %69 = vmatpush2.xpose.msra.mxu0 0.0
    %70 = vmatprep.subr.mxu0 0.0
    %71 = vmatpush2.xpose.msra.mxu0 0.0
    %72 = vmatprep.subr.mxu0 0.0
    %73 = vmatpush2.xpose.msra.mxu0 0.0
    %74 = vmatprep.subr.mxu0 0.0
    %75 = vmatpush2.xpose.msra.mxu0 0.0
    %76 = vmatprep.subr.mxu0 0.0
    %77 = vmatpush2.xpose.msra.mxu0 0.0
    %78 = vmatprep.subr.mxu0 0.0
    %79 = vmatpush2.xpose.msra.mxu0 0.0
    %80 = vmatprep.subr.mxu0 0.0
    %81 = vmatpush2.xpose.msra.mxu0 0.0
    %82 = vmatprep.subr.mxu0 0.0
    %83 = vmatpush2.xpose.msra.mxu0 0.0
    %84 = vmatprep.subr.mxu0 0.0
    %85 = vmatpush2.xpose.msra.mxu0 0.0
    %86 = vmatprep.subr.mxu0 0.0
    %87 = vmatpush2.xpose.msra.mxu0 0.0
    %88 = vmatprep.mubr.f32.mxu0 0.0
    %89 = vmatmul.mubr.f32.gmra.mxu0 %v18
    %v90 = vpop.f32.mrf.mxu0
    %v91 = vadd.f32 0.0, %v90
    %v92 = vpop.f32.mrf.mxu0
    %93 = vdwg.mxu0
    %v94 = vmul.f32 %v91, %v91
    %vm95 = vcmask 319488
    %v96 = vsel %vm95, %v94, 0.0
    %97 = vadd.xlane.f32.xlu0 %v96
    %v98 = vpop.xlane.xlu0 %97
    %v99 = vmax.f32 %v98, 1e-24
    %v100 = vrsqrt.pop %v99
    %v101 = vmul.f32 %v91, %v100
    %vm102 = vcmask 326656
    %v104 = vsel %vm102, %v101, 0
    %106 = vmatprep.subr.mxu0 0.0
    %107 = vmatpush1.msra.mxu0 0.0
    %108 = vmatprep.subr.mxu0 0.0
    %109 = vmatpush1.msra.mxu0 0.0
    %110 = vmatprep.subr.mxu0 0.0
    %111 = vmatpush1.msra.mxu0 0.0
    %112 = vmatprep.subr.mxu0 0.0
    %113 = vmatpush1.msra.mxu0 0.0
    %114 = vmatprep.subr.mxu0 0.0
    %115 = vmatpush1.msra.mxu0 0.0
    %116 = vmatprep.subr.mxu0 0.0
    %117 = vmatpush1.msra.mxu0 0.0
    %118 = vmatprep.subr.mxu0 0.0
    %119 = vmatpush1.msra.mxu0 0.0
    %120 = vmatprep.subr.mxu0 0.0
    %121 = vmatpush1.msra.mxu0 0.0
    %122 = vmatprep.subr.mxu0 0.0
    %123 = vmatpush1.msra.mxu0 0.0
    %124 = vmatprep.subr.mxu0 0.0
    %125 = vmatpush1.msra.mxu0 0.0
    %126 = vmatprep.subr.mxu0 0.0
    %127 = vmatpush1.msra.mxu0 0.0
    %128 = vmatprep.subr.mxu0 0.0
    %129 = vmatpush1.msra.mxu0 %v23
    %130 = vmatprep.subr.mxu0 0.0
    %131 = vmatpush1.msra.mxu0 %v22
    %132 = vmatprep.subr.mxu0 0.0
    %133 = vmatpush1.msra.mxu0 %v21
    %134 = vmatprep.subr.mxu0 0.0
    %135 = vmatpush1.msra.mxu0 %v20
    %136 = vmatprep.subr.mxu0 0.0
    %137 = vmatpush1.msra.mxu0 %v19
    %138 = vmatprep.subr.mxu0 0.0
    %139 = vmatpush2.msra.mxu0 0.0
    %140 = vmatprep.subr.mxu0 0.0
    %141 = vmatpush2.msra.mxu0 0.0
    %142 = vmatprep.subr.mxu0 0.0
    %143 = vmatpush2.msra.mxu0 0.0
    %144 = vmatprep.subr.mxu0 0.0
    %145 = vmatpush2.msra.mxu0 0.0
    %146 = vmatprep.subr.mxu0 0.0
    %147 = vmatpush2.msra.mxu0 0.0
    %148 = vmatprep.subr.mxu0 0.0
    %149 = vmatpush2.msra.mxu0 0.0
    %150 = vmatprep.subr.mxu0 0.0
    %151 = vmatpush2.msra.mxu0 0.0
    %152 = vmatprep.subr.mxu0 0.0
    %153 = vmatpush2.msra.mxu0 0.0
    %154 = vmatprep.subr.mxu0 0.0
    %155 = vmatpush2.msra.mxu0 0.0
    %156 = vmatprep.subr.mxu0 0.0
    %157 = vmatpush2.msra.mxu0 0.0
    %158 = vmatprep.subr.mxu0 0.0
    %159 = vmatpush2.msra.mxu0 0.0
    %160 = vmatprep.subr.mxu0 0.0
    %161 = vmatpush2.msra.mxu0 0.0
    %162 = vmatprep.subr.mxu0 0.0
    %163 = vmatpush2.msra.mxu0 0.0
    %164 = vmatprep.subr.mxu0 0.0
    %165 = vmatpush2.msra.mxu0 0.0
    %166 = vmatprep.subr.mxu0 0.0
    %167 = vmatpush2.msra.mxu0 0.0
    %168 = vmatprep.subr.mxu0 0.0
    %169 = vmatpush2.msra.mxu0 0.0
    %170 = vmatprep.mubr.f32.mxu0 0.0
    %171 = vmatmul.mubr.f32.gmra.mxu0 %v104
    %v172 = vpop.f32.mrf.mxu0
    %v173 = vadd.f32 0.0, %v172
    %v174 = vpop.f32.mrf.mxu0
    %175 = vdwg.mxu0
    %v176 = vmul.f32 %v173, %v173
    %vm177 = vcmask 1040384
    %v178 = vsel %vm177, %v176, 0.0
    %179 = vadd.xlane.f32.xlu0 %v178
    %v180 = vpop.xlane.xlu0 %179
    %v181 = vmax.f32 %v180, 1e-24
    %v182 = vrsqrt.pop %v181
    %v183 = vmul.f32 %v173, %v182
    %vm184 = vcmask 0
    %185 = vst.msk [vmem:[#allocation2] sm:$0x1] %vm184, %v182
    %186 = vst [vmem:[%s4] sm:$0x1] %v183
    %187 = vst.msk [vmem:[%s5] sm:$0x1] %vm95, %v101
    // Predicated region
    $region14: #{spectral_norm_conv_forward.2} parent=1 // pred_check
      _
    $region15: #{spectral_norm_conv_forward.2} parent=1 // pred_check_branch
      %189 = sbr.rel (0) target = $region17
    $region16: #{spectral_norm_conv_forward.2} parent=1 // pred_region
      %s191 = ssub.s32 16, 16
      %192 = vsyncadd [#allocation3], %s191
      %s194 = sshll.u32 [#allocation2], 4
      %s195 = int_to_ptr.vmem [resolvable:$true] %s194
      %197 = dma.vmem_to_hbm [thread:$0]  %s195, 16, %s3, [#allocation3]
    $region17: #{spectral_norm_conv_forward.2} parent=1 // pred_fallthru
      _
    // Predicated region
    $region18: #{spectral_norm_conv_forward.2} parent=1 // pred_check
      _
    $region19: #{spectral_norm_conv_forward.2} parent=1 // pred_check_branch
      %199 = sbr.rel (0) target = $region21
    $region20: #{spectral_norm_conv_forward.2} parent=1 // pred_region
      _
    $region21: #{spectral_norm_conv_forward.2} parent=1 // pred_fallthru
      _
    // Predicated region
    $region22: #{spectral_norm_conv_forward.2} parent=1 // pred_check
      _
    $region23: #{spectral_norm_conv_forward.2} parent=1 // pred_check_branch
      %201 = sbr.rel (0) target = $region25
    $region24: #{spectral_norm_conv_forward.2} parent=1 // pred_region
      _
    $region25: #{spectral_norm_conv_forward.2} parent=1 // pred_fallthru
      _
    // Predicated region
    $region26: #{spectral_norm_conv_forward.2} parent=1 // pred_check
      _
    $region27: #{spectral_norm_conv_forward.2} parent=1 // pred_check_branch
      %203 = sbr.rel (0) target = $region29
    $region28: #{spectral_norm_conv_forward.2} parent=1 // pred_region
      %204 = dma.done [#allocation3], 16
    $region29: #{spectral_norm_conv_forward.2} parent=1 // pred_fallthru
      _
    // Predicated region
    $region30: #{spectral_norm_conv_forward.2} parent=1 // pred_check
      _
    $region31: #{spectral_norm_conv_forward.2} parent=1 // pred_check_branch
      %206 = sbr.rel (0) target = $region33
    $region32: #{spectral_norm_conv_forward.2} parent=1 // pred_region
      _
    $region33: #{spectral_norm_conv_forward.2} parent=1 // pred_fallthru
      _
    // Predicated region
    $region34: #{spectral_norm_conv_forward.2} parent=1 // pred_check
      _
    $region35: #{spectral_norm_conv_forward.2} parent=1 // pred_check_branch
      %208 = sbr.rel (0) target = $region37
    $region36: #{spectral_norm_conv_forward.2} parent=1 // pred_region
      _
    $region37: #{spectral_norm_conv_forward.2} parent=1 // pred_fallthru
      _
    %209 = vsyncpa [#allocation3], 1

// kernel: spectral_norm_conv_forward.3
$region0: #{spectral_norm_conv_forward.3}
  #allocation0 [shape = 'u32[]', space=smem, size = 0x4, offset = 0x4, fixed_abs, tag = 'smem constant byte address 0x4 - core index']
  #allocation1 [shape = 'u32[144,128]{1,0:T(1,128)}', space=vmem, size = 0x12000, scoped, tag = 'internal scratch']
  #allocation2 [shape = 'f32[1,1]{1,0:T(1,128)S(6)}', space=smem, size = 0x200, scoped, tag = 'scoped memory for spectral_norm_conv_forward.3']
  %s0 = inlined_call_operand.<no memory space> [shape: f32[1,1], index: 0, kind: input, shape index: {}]
  %s1 = inlined_call_operand.vmem [shape: bf16[2,18,18,16], index: 1, kind: input, shape index: {}]
  %s2 = inlined_call_operand.vmem [shape: bf16[9,16,128], index: 2, kind: input, shape index: {}]
  %s3 = inlined_call_operand.vmem [shape: f32[1,128], index: 3, kind: input, shape index: {}]
  %s4 = inlined_call_operand.vmem [shape: f32[512,128], index: 4, kind: output, shape index: {}]
  %s5 = sld [smem:[#allocation0]]
  $region49: #{spectral_norm_conv_forward.3} parent=0
    _
  %s7 = ssub.s32 1, %s5
  %s8 = scalar_select 0, %s7, %s5
  %9 = sst [smem:[#allocation2]] %s0
  loop: start=0, step=1, limit=4
  $region2: #{spectral_norm_conv_forward.3} parent=0 // loop_pre_header
    _
  $region3: #{spectral_norm_conv_forward.3} parent=0 // loop_header
    %s11 = sphi 0, %s15
    %p12 = scmp.ge.s32.totalorder %s11, 4
    %s18 = sphi 0, %s30
    %s19 = sphi 0, %s26
    %s20 = sphi 0, %s18
    %s21 = sphi 0, %s19
    %s22 = sphi 0, %s20
    %s23 = sphi 0, %s21
    %s31 = sphi 0, %s31
    %s33 = sphi 0, %s31
    %s34 = sphi 0, %s33
    %s48 = sphi 0, %s34
    %s54 = sphi 0, %s56
    %s57 = sphi 0, %s54
    %s58 = sphi 0, %s57
    %s74 = sphi 0, %s58
    %s80 = sphi 0, %s82
    %s83 = sphi 0, %s80
    %s84 = sphi 0, %s83
    %s100 = sphi 0, %s84
    %s106 = sphi 0, %s108
    %s109 = sphi 0, %s106
    %s110 = sphi 0, %s109
    %s126 = sphi 0, %s110
    %s134 = sphi 0, %s136
    %s137 = sphi 0, %s134
    %s138 = sphi 0, %s137
    %s154 = sphi 0, %s138
  $region4: #{spectral_norm_conv_forward.3} parent=0 // loop_header_branch
    %14 = sbr.rel (%p12) target = $region8
  $region5: #{spectral_norm_conv_forward.3} parent=0 // loop_body
    %s16 = ssub.s32 %s11, 1
    %s17 = ssub.s32 %s11, 2
    %s24 = sadd.s32 1, %s19
    %p25 = scmp.ge.s32.totalorder %s24, 2
    %s26 = scalar_select %p25, 0, %s24
    %s27 = sadd.s32 1, %s18
    %s28 = scalar_select %p25, %s27, %s18
    %p29 = scmp.ge.s32.totalorder %s28, 1
    %s30 = scalar_select %p29, 0, %s28
    %s32 = sadd.s32 %s31, 1
    %p35 = scmp.eq.s32.totalorder %s11, 1
    %p36 = scmp.ne.s32.totalorder %s31, %s33
    %p37 = scmp.eq.s32.totalorder %s11, 0
    %p38 = por %p36, %p37
    %p39 = scmp.ne.s32.totalorder %s31, %s33
    %p40 = scmp.eq.s32.totalorder %s16, 1
    %p41 = por %p39, %p40
    %p42 = scmp.ne.s32.totalorder %s33, %s34
    %p43 = scmp.eq.s32.totalorder %s16, 0
    %p44 = por %p42, %p43
    %p45 = scmp.ne.s32.totalorder %s33, %s34
    %p46 = scmp.eq.s32.totalorder %s17, 1
    %p47 = por %p45, %p46
    %p49 = scmp.ne.s32.totalorder %s34, %s48
    %p50 = scmp.eq.s32.totalorder %s17, 0
    %p51 = por %p49, %p50
    %s52 = ssub.s32 %s19, %s26
    %p53 = scmp.eq.s32.totalorder %s52, 0
    %s55 = sadd.s32 %s54, 1
    %s56 = scalar_select %p53, %s54, %s55
    %p59 = pneg %p53
    %p60 = scmp.eq.s32.totalorder %s11, 1
    %p61 = por %p59, %p60
    %p62 = scmp.ne.s32.totalorder %s54, %s57
    %p63 = scmp.eq.s32.totalorder %s11, 0
    %p64 = por %p62, %p63
    %p65 = scmp.ne.s32.totalorder %s54, %s57
    %p66 = scmp.eq.s32.totalorder %s16, 1
    %p67 = por %p65, %p66
    %p68 = scmp.ne.s32.totalorder %s57, %s58
    %p69 = scmp.eq.s32.totalorder %s16, 0
    %p70 = por %p68, %p69
    %p71 = scmp.ne.s32.totalorder %s57, %s58
    %p72 = scmp.eq.s32.totalorder %s17, 1
    %p73 = por %p71, %p72
    %p75 = scmp.ne.s32.totalorder %s58, %s74
    %p76 = scmp.eq.s32.totalorder %s17, 0
    %p77 = por %p75, %p76
    %s78 = ssub.s32 %s18, %s30
    %p79 = scmp.eq.s32.totalorder %s78, 0
    %s81 = sadd.s32 %s80, 1
    %s82 = scalar_select %p79, %s80, %s81
    %p85 = pneg %p79
    %p86 = scmp.eq.s32.totalorder %s11, 1
    %p87 = por %p85, %p86
    %p88 = scmp.ne.s32.totalorder %s80, %s83
    %p89 = scmp.eq.s32.totalorder %s11, 0
    %p90 = por %p88, %p89
    %p91 = scmp.ne.s32.totalorder %s80, %s83
    %p92 = scmp.eq.s32.totalorder %s16, 1
    %p93 = por %p91, %p92
    %p94 = scmp.ne.s32.totalorder %s83, %s84
    %p95 = scmp.eq.s32.totalorder %s16, 0
    %p96 = por %p94, %p95
    %p97 = scmp.ne.s32.totalorder %s83, %s84
    %p98 = scmp.eq.s32.totalorder %s17, 1
    %p99 = por %p97, %p98
    %p101 = scmp.ne.s32.totalorder %s84, %s100
    %p102 = scmp.eq.s32.totalorder %s17, 0
    %p103 = por %p101, %p102
    %s104 = ssub.s32 %s18, %s30
    %p105 = scmp.eq.s32.totalorder %s104, 0
    %s107 = sadd.s32 %s106, 1
    %s108 = scalar_select %p105, %s106, %s107
    %p111 = pneg %p105
    %p112 = scmp.eq.s32.totalorder %s11, 1
    %p113 = por %p111, %p112
    %p114 = scmp.ne.s32.totalorder %s106, %s109
    %p115 = scmp.eq.s32.totalorder %s11, 0
    %p116 = por %p114, %p115
    %p117 = scmp.ne.s32.totalorder %s106, %s109
    %p118 = scmp.eq.s32.totalorder %s16, 1
    %p119 = por %p117, %p118
    %p120 = scmp.ne.s32.totalorder %s109, %s110
    %p121 = scmp.eq.s32.totalorder %s16, 0
    %p122 = por %p120, %p121
    %p123 = scmp.ne.s32.totalorder %s109, %s110
    %p124 = scmp.eq.s32.totalorder %s17, 1
    %p125 = por %p123, %p124
    %p127 = scmp.ne.s32.totalorder %s110, %s126
    %p128 = scmp.eq.s32.totalorder %s17, 0
    %p129 = por %p127, %p128
    %s130 = ssub.s32 %s19, %s26
    %s131 = ssub.s32 %s18, %s30
    %s132 = sor.u32 %s130, %s131
    %p133 = scmp.eq.s32.totalorder %s132, 0
    %s135 = sadd.s32 %s134, 1
    %s136 = scalar_select %p133, %s134, %s135
    %p139 = pneg %p133
    %p140 = scmp.eq.s32.totalorder %s11, 1
    %p141 = por %p139, %p140
    %p142 = scmp.ne.s32.totalorder %s134, %s137
    %p143 = scmp.eq.s32.totalorder %s11, 0
    %p144 = por %p142, %p143
    %p145 = scmp.ne.s32.totalorder %s134, %s137
    %p146 = scmp.eq.s32.totalorder %s16, 1
    %p147 = por %p145, %p146
    %p148 = scmp.ne.s32.totalorder %s137, %s138
    %p149 = scmp.eq.s32.totalorder %s16, 0
    %p150 = por %p148, %p149
    %p151 = scmp.ne.s32.totalorder %s137, %s138
    %p152 = scmp.eq.s32.totalorder %s17, 1
    %p153 = por %p151, %p152
    %p155 = scmp.ne.s32.totalorder %s138, %s154
    %p156 = scmp.eq.s32.totalorder %s17, 0
    %p157 = por %p155, %p156
    %p158 = scmp.le.s32.totalorder 1, %s11
    %p159 = scmp.lt.s32.totalorder %s11, 3
    %p160 = pnand %p158, %p159
    %p161 = pneg %p160
    // Predicated region
    $region9: #{spectral_norm_conv_forward.3} parent=5 // pred_check
      _
    $region10: #{spectral_norm_conv_forward.3} parent=5 // pred_check_branch
      %163 = sbr.rel (%p160) target = $region12
    $region11: #{spectral_norm_conv_forward.3} parent=5 // pred_region
      %s164 = ssub.s32 %s11, 1
      // Predicated region
      $region13: #{spectral_norm_conv_forward.3} parent=11 // pred_check
        %p165 = pneg %p44
      $region14: #{spectral_norm_conv_forward.3} parent=11 // pred_check_branch
        %167 = sbr.rel (%p165) target = $region16
      $region15: #{spectral_norm_conv_forward.3} parent=11 // pred_region
        _
      $region16: #{spectral_norm_conv_forward.3} parent=11 // pred_fallthru
        _
      // Predicated region
      $region17: #{spectral_norm_conv_forward.3} parent=11 // pred_check
        %p168 = pneg %p96
      $region18: #{spectral_norm_conv_forward.3} parent=11 // pred_check_branch
        %170 = sbr.rel (%p168) target = $region20
      $region19: #{spectral_norm_conv_forward.3} parent=11 // pred_region
        %p171 = scmp.lt.s32.totalorder %s20, 0
        %s172 = scalar_select %p171, %s20, 0
        %s173 = smul.addr %s172, 4
        %s174 = scalar_lea.vmem %s2, %s173
      $region20: #{spectral_norm_conv_forward.3} parent=11 // pred_fallthru
        _
      // Predicated region
      $region21: #{spectral_norm_conv_forward.3} parent=11 // pred_check
        %p175 = pneg %p122
      $region22: #{spectral_norm_conv_forward.3} parent=11 // pred_check_branch
        %177 = sbr.rel (%p175) target = $region24
      $region23: #{spectral_norm_conv_forward.3} parent=11 // pred_region
        %p178 = scmp.lt.s32.totalorder %s20, 0
        %s179 = scalar_select %p178, %s20, 0
        %s180 = scalar_lea.vmem %s3, %s179
      $region24: #{spectral_norm_conv_forward.3} parent=11 // pred_fallthru
        _
    $region12: #{spectral_norm_conv_forward.3} parent=5 // pred_fallthru
      _
    %p181 = scmp.lt.s32.totalorder %s11, 2
    // Predicated region
    $region25: #{spectral_norm_conv_forward.3} parent=5 // pred_check
      %p182 = pneg %p181
    $region26: #{spectral_norm_conv_forward.3} parent=5 // pred_check_branch
      %184 = sbr.rel (%p182) target = $region28
    $region27: #{spectral_norm_conv_forward.3} parent=5 // pred_region
      // Predicated region
      $region29: #{spectral_norm_conv_forward.3} parent=27 // pred_check
        %p185 = pneg %p64
      $region30: #{spectral_norm_conv_forward.3} parent=27 // pred_check_branch
        %187 = sbr.rel (%p185) target = $region32
      $region31: #{spectral_norm_conv_forward.3} parent=27 // pred_region
        %p188 = scmp.lt.s32.totalorder %s19, 1
        %s189 = scalar_select %p188, %s19, 1
        %s190 = smul.addr %s189, 54
        %s191 = smul.addr %s190, 4
        %s192 = scalar_lea.vmem %s1, %s191
      $region32: #{spectral_norm_conv_forward.3} parent=27 // pred_fallthru
        _
    $region28: #{spectral_norm_conv_forward.3} parent=5 // pred_fallthru
      _
    %p193 = scmp.le.s32.totalorder 1, %s11
    %p194 = scmp.lt.s32.totalorder %s11, 3
    %p195 = pnand %p193, %p194
    %p196 = pneg %p195
    // Predicated region
    $region33: #{spectral_norm_conv_forward.3} parent=5 // pred_check
      _
    $region34: #{spectral_norm_conv_forward.3} parent=5 // pred_check_branch
      %198 = sbr.rel (%p195) target = $region36
    $region35: #{spectral_norm_conv_forward.3} parent=5 // pred_region
      %s199 = ssub.s32 %s11, 1
      %p200 = pneg %p44
      %p201 = pneg %p41
      %p202 = scmp.lt.s32.totalorder %s21, 1
      %s203 = scalar_select %p202, %s21, 1
      %s204 = smul.addr %s203, 54
      %s205 = smul.addr %s204, 4
      %s206 = scalar_lea.vmem %s1, %s205
      %p207 = pneg %p70
      %p208 = pneg %p67
      %p209 = scmp.lt.s32.totalorder %s20, 0
      %s210 = scalar_select %p209, %s20, 0
      %s211 = smul.addr %s210, 4
      %s212 = scalar_lea.vmem %s2, %s211
      %p213 = pneg %p96
      %p214 = pneg %p93
      %p215 = scmp.lt.s32.totalorder %s20, 0
      %s216 = scalar_select %p215, %s20, 0
      %s217 = scalar_lea.vmem %s3, %s216
      %p218 = pneg %p122
      %p219 = pneg %p119
      %p220 = pneg %p150
      %p221 = pneg %p147
      %s222 = smul.u32 32, %s21
      %p223 = scmp.lt.s32.totalorder %s222, 63
      %s224 = scalar_select %p223, %s222, 63
      %p225 = scmp.lt.s32.totalorder %s20, 0
      %s226 = scalar_select %p225, %s20, 0
      %s227 = sadd.s32 %s226, %s224
      %s228 = smul.addr %s227, 8
      %s229 = scalar_lea.vmem %s4, %s228
      %p230 = scmp.lt.s32.totalorder %s21, 1
      %s231 = scalar_select %p230, %s21, 1
      %s232 = smul.addr %s231, 54
      %s233 = smul.addr %s232, 4
      %s234 = scalar_lea.vmem %s1, %s233
      %p235 = scmp.lt.s32.totalorder %s20, 0
      %s236 = scalar_select %p235, %s20, 0
      %s237 = smul.addr %s236, 4
      %s238 = scalar_lea.vmem %s2, %s237
      %p239 = scmp.lt.s32.totalorder %s20, 0
      %s240 = scalar_select %p239, %s20, 0
      %s241 = scalar_lea.vmem %s3, %s240
      %s242 = smul.u32 32, %s21
      %p243 = scmp.lt.s32.totalorder %s242, 63
      %s244 = scalar_select %p243, %s242, 63
      %p245 = scmp.lt.s32.totalorder %s20, 0
      %s246 = scalar_select %p245, %s20, 0
      %s247 = sadd.s32 %s246, %s244
      %s248 = smul.addr %s247, 8
      %s249 = scalar_lea.vmem %s4, %s248
      %s250 = smul.u32 32, %s21
      %s252 = sld [smem:[#allocation2]]
      %v253 = vld [vmem:[%s234] sm:$0xf]
      %v254 = vld [vmem:[%s234 + $0x4] sm:$0xf]
      %v255 = vld [vmem:[%s234 + $0x8] sm:$0x1]
      %v256 = vld [vmem:[%s234 + $0xc] sm:$0xf]
      %v257 = vld [vmem:[%s234 + $0x10] sm:$0xf]
      %v258 = vld [vmem:[%s234 + $0x14] sm:$0x1]
      %v259 = vld [vmem:[%s234 + $0x18] sm:$0xf]
      %v260 = vld [vmem:[%s234 + $0x1c] sm:$0xf]
      %v261 = vld [vmem:[%s234 + $0x20] sm:$0x1]
      %v262 = vld [vmem:[%s234 + $0x24] sm:$0xf]
      %v263 = vld [vmem:[%s234 + $0x28] sm:$0xf]
      %v264 = vld [vmem:[%s234 + $0x2c] sm:$0x1]
      %v265 = vld [vmem:[%s234 + $0x30] sm:$0xf]
      %v266 = vld [vmem:[%s234 + $0x34] sm:$0xf]
      %v267 = vld [vmem:[%s234 + $0x38] sm:$0x1]
      %v268 = vld [vmem:[%s234 + $0x3c] sm:$0xf]
      %v269 = vld [vmem:[%s234 + $0x40] sm:$0xf]
      %v270 = vld [vmem:[%s234 + $0x44] sm:$0x1]
      %v271 = vld [vmem:[%s234 + $0x48] sm:$0xf]
      %v272 = vld [vmem:[%s234 + $0x4c] sm:$0xf]
      %v273 = vld [vmem:[%s234 + $0x50] sm:$0x1]
      %v274 = vld [vmem:[%s234 + $0x54] sm:$0xf]
      %v275 = vld [vmem:[%s234 + $0x58] sm:$0xf]
      %v276 = vld [vmem:[%s234 + $0x5c] sm:$0x1]
      %v277 = vld [vmem:[%s234 + $0x60] sm:$0xf]
      %v278 = vld [vmem:[%s234 + $0x64] sm:$0xf]
      %v279 = vld [vmem:[%s234 + $0x68] sm:$0x1]
      %v280 = vld [vmem:[%s234 + $0x6c] sm:$0xf]
      %v281 = vld [vmem:[%s234 + $0x70] sm:$0xf]
      %v282 = vld [vmem:[%s234 + $0x74] sm:$0x1]
      %v283 = vld [vmem:[%s234 + $0x78] sm:$0xf]
      %v284 = vld [vmem:[%s234 + $0x7c] sm:$0xf]
      %v285 = vld [vmem:[%s234 + $0x80] sm:$0x1]
      %v286 = vld [vmem:[%s234 + $0x84] sm:$0xf]
      %v287 = vld [vmem:[%s234 + $0x88] sm:$0xf]
      %v288 = vld [vmem:[%s234 + $0x8c] sm:$0x1]
      %v289 = vld [vmem:[%s234 + $0x90] sm:$0xf]
      %v290 = vld [vmem:[%s234 + $0x94] sm:$0xf]
      %v291 = vld [vmem:[%s234 + $0x98] sm:$0x1]
      %v292 = vld [vmem:[%s234 + $0x9c] sm:$0xf]
      %v293 = vld [vmem:[%s234 + $0xa0] sm:$0xf]
      %v294 = vld [vmem:[%s234 + $0xa4] sm:$0x1]
      %v295 = vld [vmem:[%s234 + $0xa8] sm:$0xf]
      %v296 = vld [vmem:[%s234 + $0xac] sm:$0xf]
      %v297 = vld [vmem:[%s234 + $0xb0] sm:$0x1]
      %v298 = vld [vmem:[%s234 + $0xb4] sm:$0xf]
      %v299 = vld [vmem:[%s234 + $0xb8] sm:$0xf]
      %v300 = vld [vmem:[%s234 + $0xbc] sm:$0x1]
      %v301 = vld [vmem:[%s234 + $0xc0] sm:$0xf]
      %v302 = vld [vmem:[%s234 + $0xc4] sm:$0xf]
      %v303 = vld [vmem:[%s234 + $0xc8] sm:$0x1]
      %v304 = vld [vmem:[%s234 + $0xcc] sm:$0xf]
      %v305 = vld [vmem:[%s234 + $0xd0] sm:$0xf]
      %v306 = vld [vmem:[%s234 + $0xd4] sm:$0x1]
      %v307 = vld [vmem:[%s238] sm:$0xf]
      %v308 = vld [vmem:[%s238 + $0x4] sm:$0xf]
      %vm309 = vsmask.f32 3328
      %vm310 = vsmask.f32 7440
      %vm311 = vmor %vm309, %vm310
      %v313 = vshrl.u32 %v253, 16
      %v315 = vrot.slane %v313, 4
      %v316 = vshll.u32 %v253, 16
      %v318 = vrot.slane %v316, 5
      %v319 = vor.u32 %v315, %v318
      %v320 = vrot.slane %v319, 4
      %v322 = vshll.u32 %v254, 16
      %v324 = vrot.slane %v322, 5
      %v325 = vsel %vm311, %v320, %v324
      %v326 = vshrl.u32 %v254, 16
      %v328 = vrot.slane %v326, 4
      %v329 = vor.u32 %v328, %v324
      %v330 = vrot.slane %v329, 4
      %v332 = vshll.u32 %v255, 16
      %v334 = vrot.slane %v332, 5
      %v335 = vsel %vm311, %v330, %v334
      %v337 = vshrl.u32 %v256, 16
      %v339 = vrot.slane %v337, 4
      %v340 = vshll.u32 %v256, 16
      %v342 = vrot.slane %v340, 5
      %v343 = vor.u32 %v339, %v342
      %v344 = vrot.slane %v343, 4
      %v346 = vshll.u32 %v257, 16
      %v348 = vrot.slane %v346, 5
      %v349 = vsel %vm311, %v344, %v348
      %v350 = vshrl.u32 %v257, 16
      %v352 = vrot.slane %v350, 4
      %v353 = vor.u32 %v352, %v348
      %v354 = vrot.slane %v353, 4
      %v356 = vshll.u32 %v258, 16
      %v358 = vrot.slane %v356, 5
      %v359 = vsel %vm311, %v354, %v358
      %v361 = vshrl.u32 %v259, 16
      %v363 = vrot.slane %v361, 4
      %v364 = vshll.u32 %v259, 16
      %v366 = vrot.slane %v364, 5
      %v367 = vor.u32 %v363, %v366
      %v368 = vrot.slane %v367, 4
      %v370 = vshll.u32 %v260, 16
      %v372 = vrot.slane %v370, 5
      %v373 = vsel %vm311, %v368, %v372
      %v374 = vshrl.u32 %v260, 16
      %v376 = vrot.slane %v374, 4
      %v377 = vor.u32 %v376, %v372
      %v378 = vrot.slane %v377, 4
      %v380 = vshll.u32 %v261, 16
      %v382 = vrot.slane %v380, 5
      %v383 = vsel %vm311, %v378, %v382
      %v385 = vshrl.u32 %v262, 16
      %v387 = vrot.slane %v385, 4
      %v388 = vshll.u32 %v262, 16
      %v390 = vrot.slane %v388, 5
      %v391 = vor.u32 %v387, %v390
      %v392 = vrot.slane %v391, 4
      %v394 = vshll.u32 %v263, 16
      %v396 = vrot.slane %v394, 5
      %v397 = vsel %vm311, %v392, %v396
      %v398 = vshrl.u32 %v263, 16
      %v400 = vrot.slane %v398, 4
      %v401 = vor.u32 %v400, %v396
      %v402 = vrot.slane %v401, 4
      %v404 = vshll.u32 %v264, 16
      %v406 = vrot.slane %v404, 5
      %v407 = vsel %vm311, %v402, %v406
      %v409 = vshrl.u32 %v265, 16
      %v411 = vrot.slane %v409, 4
      %v412 = vshll.u32 %v265, 16
      %v414 = vrot.slane %v412, 5
      %v415 = vor.u32 %v411, %v414
      %v416 = vrot.slane %v415, 4
      %v418 = vshll.u32 %v266, 16
      %v420 = vrot.slane %v418, 5
      %v421 = vsel %vm311, %v416, %v420
      %v422 = vshrl.u32 %v266, 16
      %v424 = vrot.slane %v422, 4
      %v425 = vor.u32 %v424, %v420
      %v426 = vrot.slane %v425, 4
      %v428 = vshll.u32 %v267, 16
      %v430 = vrot.slane %v428, 5
      %v431 = vsel %vm311, %v426, %v430
      %v433 = vshrl.u32 %v268, 16
      %v435 = vrot.slane %v433, 4
      %v436 = vshll.u32 %v268, 16
      %v438 = vrot.slane %v436, 5
      %v439 = vor.u32 %v435, %v438
      %v440 = vrot.slane %v439, 4
      %v442 = vshll.u32 %v269, 16
      %v444 = vrot.slane %v442, 5
      %v445 = vsel %vm311, %v440, %v444
      %v446 = vshrl.u32 %v269, 16
      %v448 = vrot.slane %v446, 4
      %v449 = vor.u32 %v448, %v444
      %v450 = vrot.slane %v449, 4
      %v452 = vshll.u32 %v270, 16
      %v454 = vrot.slane %v452, 5
      %v455 = vsel %vm311, %v450, %v454
      %v457 = vshrl.u32 %v271, 16
      %v459 = vrot.slane %v457, 4
      %v460 = vshll.u32 %v271, 16
      %v462 = vrot.slane %v460, 5
      %v463 = vor.u32 %v459, %v462
      %v464 = vrot.slane %v463, 4
      %v466 = vshll.u32 %v272, 16
      %v468 = vrot.slane %v466, 5
      %v469 = vsel %vm311, %v464, %v468
      %v470 = vshrl.u32 %v272, 16
      %v472 = vrot.slane %v470, 4
      %v473 = vor.u32 %v472, %v468
      %v474 = vrot.slane %v473, 4
      %v476 = vshll.u32 %v273, 16
      %v478 = vrot.slane %v476, 5
      %v479 = vsel %vm311, %v474, %v478
      %v481 = vshrl.u32 %v274, 16
      %v483 = vrot.slane %v481, 4
      %v484 = vshll.u32 %v274, 16
      %v486 = vrot.slane %v484, 5
      %v487 = vor.u32 %v483, %v486
      %v488 = vrot.slane %v487, 4
      %v490 = vshll.u32 %v275, 16
      %v492 = vrot.slane %v490, 5
      %v493 = vsel %vm311, %v488, %v492
      %v494 = vshrl.u32 %v275, 16
      %v496 = vrot.slane %v494, 4
      %v497 = vor.u32 %v496, %v492
      %v498 = vrot.slane %v497, 4
      %v500 = vshll.u32 %v276, 16
      %v502 = vrot.slane %v500, 5
      %v503 = vsel %vm311, %v498, %v502
      %v505 = vshrl.u32 %v277, 16
      %v507 = vrot.slane %v505, 4
      %v508 = vshll.u32 %v277, 16
      %v510 = vrot.slane %v508, 5
      %v511 = vor.u32 %v507, %v510
      %v512 = vrot.slane %v511, 4
      %v514 = vshll.u32 %v278, 16
      %v516 = vrot.slane %v514, 5
      %v517 = vsel %vm311, %v512, %v516
      %v518 = vshrl.u32 %v278, 16
      %v520 = vrot.slane %v518, 4
      %v521 = vor.u32 %v520, %v516
      %v522 = vrot.slane %v521, 4
      %v524 = vshll.u32 %v279, 16
      %v526 = vrot.slane %v524, 5
      %v527 = vsel %vm311, %v522, %v526
      %v529 = vshrl.u32 %v280, 16
      %v531 = vrot.slane %v529, 4
      %v532 = vshll.u32 %v280, 16
      %v534 = vrot.slane %v532, 5
      %v535 = vor.u32 %v531, %v534
      %v536 = vrot.slane %v535, 4
      %v538 = vshll.u32 %v281, 16
      %v540 = vrot.slane %v538, 5
      %v541 = vsel %vm311, %v536, %v540
      %v542 = vshrl.u32 %v281, 16
      %v544 = vrot.slane %v542, 4
      %v545 = vor.u32 %v544, %v540
      %v546 = vrot.slane %v545, 4
      %v548 = vshll.u32 %v282, 16
      %v550 = vrot.slane %v548, 5
      %v551 = vsel %vm311, %v546, %v550
      %v553 = vshrl.u32 %v283, 16
      %v555 = vrot.slane %v553, 4
      %v556 = vshll.u32 %v283, 16
      %v558 = vrot.slane %v556, 5
      %v559 = vor.u32 %v555, %v558
      %v560 = vrot.slane %v559, 4
      %v562 = vshll.u32 %v284, 16
      %v564 = vrot.slane %v562, 5
      %v565 = vsel %vm311, %v560, %v564
      %v566 = vshrl.u32 %v284, 16
      %v568 = vrot.slane %v566, 4
      %v569 = vor.u32 %v568, %v564
      %v570 = vrot.slane %v569, 4
      %v572 = vshll.u32 %v285, 16
      %v574 = vrot.slane %v572, 5
      %v575 = vsel %vm311, %v570, %v574
      %v577 = vshrl.u32 %v286, 16
      %v579 = vrot.slane %v577, 4
      %v580 = vshll.u32 %v286, 16
      %v582 = vrot.slane %v580, 5
      %v583 = vor.u32 %v579, %v582
      %v584 = vrot.slane %v583, 4
      %v586 = vshll.u32 %v287, 16
      %v588 = vrot.slane %v586, 5
      %v589 = vsel %vm311, %v584, %v588
      %v590 = vshrl.u32 %v287, 16
      %v592 = vrot.slane %v590, 4
      %v593 = vor.u32 %v592, %v588
      %v594 = vrot.slane %v593, 4
      %v596 = vshll.u32 %v288, 16
      %v598 = vrot.slane %v596, 5
      %v599 = vsel %vm311, %v594, %v598
      %v601 = vshrl.u32 %v289, 16
      %v603 = vrot.slane %v601, 4
      %v604 = vshll.u32 %v289, 16
      %v606 = vrot.slane %v604, 5
      %v607 = vor.u32 %v603, %v606
      %v608 = vrot.slane %v607, 4
      %v610 = vshll.u32 %v290, 16
      %v612 = vrot.slane %v610, 5
      %v613 = vsel %vm311, %v608, %v612
      %v614 = vshrl.u32 %v290, 16
      %v616 = vrot.slane %v614, 4
      %v617 = vor.u32 %v616, %v612
      %v618 = vrot.slane %v617, 4
      %v620 = vshll.u32 %v291, 16
      %v622 = vrot.slane %v620, 5
      %v623 = vsel %vm311, %v618, %v622
      %v625 = vshrl.u32 %v292, 16
      %v627 = vrot.slane %v625, 4
      %v628 = vshll.u32 %v292, 16
      %v630 = vrot.slane %v628, 5
      %v631 = vor.u32 %v627, %v630
      %v632 = vrot.slane %v631, 4
      %v634 = vshll.u32 %v293, 16
      %v636 = vrot.slane %v634, 5
      %v637 = vsel %vm311, %v632, %v636
      %v638 = vshrl.u32 %v293, 16
      %v640 = vrot.slane %v638, 4
      %v641 = vor.u32 %v640, %v636
      %v642 = vrot.slane %v641, 4
      %v644 = vshll.u32 %v294, 16
      %v646 = vrot.slane %v644, 5
      %v647 = vsel %vm311, %v642, %v646
      %v649 = vshrl.u32 %v295, 16
      %v651 = vrot.slane %v649, 4
      %v652 = vshll.u32 %v295, 16
      %v654 = vrot.slane %v652, 5
      %v655 = vor.u32 %v651, %v654
      %v656 = vrot.slane %v655, 4
      %v658 = vshll.u32 %v296, 16
      %v660 = vrot.slane %v658, 5
      %v661 = vsel %vm311, %v656, %v660
      %v662 = vshrl.u32 %v296, 16
      %v664 = vrot.slane %v662, 4
      %v665 = vor.u32 %v664, %v660
      %v666 = vrot.slane %v665, 4
      %v668 = vshll.u32 %v297, 16
      %v670 = vrot.slane %v668, 5
      %v671 = vsel %vm311, %v666, %v670
      %v673 = vshrl.u32 %v298, 16
      %v675 = vrot.slane %v673, 4
      %v676 = vshll.u32 %v298, 16
      %v678 = vrot.slane %v676, 5
      %v679 = vor.u32 %v675, %v678
      %v680 = vrot.slane %v679, 4
      %v682 = vshll.u32 %v299, 16
      %v684 = vrot.slane %v682, 5
      %v685 = vsel %vm311, %v680, %v684
      %v686 = vshrl.u32 %v299, 16
      %v688 = vrot.slane %v686, 4
      %v689 = vor.u32 %v688, %v684
      %v690 = vrot.slane %v689, 4
      %v692 = vshll.u32 %v300, 16
      %v694 = vrot.slane %v692, 5
      %v695 = vsel %vm311, %v690, %v694
      %s696 = scalar_lea.vmem %s238, 8
      %v697 = vld [vmem:[%s696] sm:$0xf]
      %v698 = vld [vmem:[%s696 + $0x4] sm:$0xf]
      %v699 = vunpack.c.l.b16 %v325
      %v700 = vunpack.c.l.b16 %v335
      %v701 = vunpack.c.l.b16 %v349
      %v702 = vunpack.c.l.b16 %v359
      %v703 = vunpack.c.l.b16 %v373
      %v704 = vunpack.c.l.b16 %v383
      %v705 = vunpack.c.l.b16 %v397
      %v706 = vunpack.c.l.b16 %v407
      %v707 = vunpack.c.l.b16 %v421
      %v708 = vunpack.c.l.b16 %v431
      %v709 = vunpack.c.l.b16 %v445
      %v710 = vunpack.c.l.b16 %v455
      %v711 = vunpack.c.l.b16 %v469
      %v712 = vunpack.c.l.b16 %v479
      %v713 = vunpack.c.l.b16 %v493
      %v714 = vunpack.c.l.b16 %v503
      %v715 = vunpack.c.l.b16 %v517
      %v716 = vunpack.c.l.b16 %v527
      %v717 = vunpack.c.l.b16 %v541
      %v718 = vunpack.c.l.b16 %v551
      %v719 = vunpack.c.l.b16 %v565
      %v720 = vunpack.c.l.b16 %v575
      %v721 = vunpack.c.l.b16 %v589
      %v722 = vunpack.c.l.b16 %v599
      %v723 = vunpack.c.l.b16 %v613
      %v724 = vunpack.c.l.b16 %v623
      %v725 = vunpack.c.l.b16 %v637
      %v726 = vunpack.c.l.b16 %v647
      %v727 = vunpack.c.l.b16 %v661
      %v728 = vunpack.c.l.b16 %v671
      %v729 = vunpack.c.l.b16 %v685
      %v730 = vunpack.c.l.b16 %v695
      %v731 = vpack.c.b16 %v700, %v699
      %v732 = vpack.c.b16 %v702, %v701
      %v733 = vpack.c.b16 %v704, %v703
      %v734 = vpack.c.b16 %v706, %v705
      %v735 = vpack.c.b16 %v708, %v707
      %v736 = vpack.c.b16 %v710, %v709
      %v737 = vpack.c.b16 %v712, %v711
      %v738 = vpack.c.b16 %v714, %v713
      %v739 = vpack.c.b16 %v716, %v715
      %v740 = vpack.c.b16 %v718, %v717
      %v741 = vpack.c.b16 %v720, %v719
      %v742 = vpack.c.b16 %v722, %v721
      %v743 = vpack.c.b16 %v724, %v723
      %v744 = vpack.c.b16 %v726, %v725
      %v745 = vpack.c.b16 %v728, %v727
      %v746 = vpack.c.b16 %v730, %v729
      %v749 = vunpack.c.l.b16 %v697
      %v750 = vunpack.c.l.b16 %v698
      %v751 = vpack.c.b16 %v750, %v749
      %vm753 = vcmask 130048
      %v755 = vsel %vm753, %v731, 0
      %v758 = vsel %vm753, %v732, 0
      %v761 = vsel %vm753, %v733, 0
      %v764 = vsel %vm753, %v734, 0
      %v767 = vsel %vm753, %v735, 0
      %v770 = vsel %vm753, %v736, 0
      %v773 = vsel %vm753, %v737, 0
      %v776 = vsel %vm753, %v738, 0
      %v779 = vsel %vm753, %v739, 0
      %v782 = vsel %vm753, %v740, 0
      %v785 = vsel %vm753, %v741, 0
      %v788 = vsel %vm753, %v742, 0
      %v791 = vsel %vm753, %v743, 0
      %v794 = vsel %vm753, %v744, 0
      %v797 = vsel %vm753, %v745, 0
      %v800 = vsel %vm753, %v746, 0
      %802 = vmatprep.subr.bf16.mxu0 0
      %803 = vmatpush1.bf16.msra.mxu0 0
      %804 = vmatprep.subr.bf16.mxu0 0
      %805 = vmatpush1.bf16.msra.mxu0 0
      %806 = vmatprep.subr.bf16.mxu0 0
      %807 = vmatpush1.bf16.msra.mxu0 0
      %808 = vmatprep.subr.bf16.mxu0 0
      %809 = vmatpush1.bf16.msra.mxu0 0
      %810 = vmatprep.subr.bf16.mxu0 0
      %811 = vmatpush1.bf16.msra.mxu0 0
      %812 = vmatprep.subr.bf16.mxu0 0
      %813 = vmatpush1.bf16.msra.mxu0 0
      %814 = vmatprep.subr.bf16.mxu0 0
      %815 = vmatpush1.bf16.msra.mxu0 0
      %816 = vmatprep.subr.bf16.mxu0 0
      %817 = vmatpush1.bf16.msra.mxu0 %v751
      %818 = vmatprep.subr.bf16.mxu0 0
      %819 = vmatpush2.bf16.msra.mxu0 0
      %820 = vmatprep.subr.bf16.mxu0 0
      %821 = vmatpush2.bf16.msra.mxu0 0
      %822 = vmatprep.subr.bf16.mxu0 0
      %823 = vmatpush2.bf16.msra.mxu0 0
      %824 = vmatprep.subr.bf16.mxu0 0
      %825 = vmatpush2.bf16.msra.mxu0 0
      %826 = vmatprep.subr.bf16.mxu0 0
      %827 = vmatpush2.bf16.msra.mxu0 0
      %828 = vmatprep.subr.bf16.mxu0 0
      %829 = vmatpush2.bf16.msra.mxu0 0
      %830 = vmatprep.subr.bf16.mxu0 0
      %831 = vmatpush2.bf16.msra.mxu0 0
      %832 = vmatprep.subr.bf16.mxu0 0
      %833 = vmatpush2.bf16.msra.mxu0 0
      %834 = vmatprep.mubr.bf16.mxu0 0
      %835 = vmatmul.mubr.bf16.gmra.mxu0 %v755
      %v836 = vpop.f32.mrf.mxu0
      %v837 = vadd.f32 0.0, %v836
      %v838 = vpop.f32.mrf.mxu0
      %v839 = vpop.f32.mrf.mxu0
      %v840 = vadd.f32 0.0, %v839
      %v841 = vpop.f32.mrf.mxu0
      %842 = vmatprep.mubr.bf16.mxu0 0
      %843 = vmatmul.mubr.bf16.gmra.mxu0 %v758
      %v844 = vpop.f32.mrf.mxu0
      %v845 = vadd.f32 0.0, %v844
      %v846 = vpop.f32.mrf.mxu0
      %v847 = vpop.f32.mrf.mxu0
      %v848 = vadd.f32 0.0, %v847
      %v849 = vpop.f32.mrf.mxu0
      %850 = vmatprep.mubr.bf16.mxu0 0
      %851 = vmatmul.mubr.bf16.gmra.mxu0 %v761
      %v852 = vpop.f32.mrf.mxu0
      %v853 = vadd.f32 0.0, %v852
      %v854 = vpop.f32.mrf.mxu0
      %v855 = vpop.f32.mrf.mxu0
      %v856 = vadd.f32 0.0, %v855
      %v857 = vpop.f32.mrf.mxu0
      %858 = vmatprep.mubr.bf16.mxu0 0
      %859 = vmatmul.mubr.bf16.gmra.mxu0 %v764
      %v860 = vpop.f32.mrf.mxu0
      %v861 = vadd.f32 0.0, %v860
      %v862 = vpop.f32.mrf.mxu0
      %v863 = vpop.f32.mrf.mxu0
      %v864 = vadd.f32 0.0, %v863
      %v865 = vpop.f32.mrf.mxu0
      %866 = vmatprep.mubr.bf16.mxu0 0
      %867 = vmatmul.mubr.bf16.gmra.mxu0 %v767
      %v868 = vpop.f32.mrf.mxu0
      %v869 = vadd.f32 0.0, %v868
      %v870 = vpop.f32.mrf.mxu0
      %v871 = vpop.f32.mrf.mxu0
      %v872 = vadd.f32 0.0, %v871
      %v873 = vpop.f32.mrf.mxu0
      %874 = vmatprep.mubr.bf16.mxu0 0
      %875 = vmatmul.mubr.bf16.gmra.mxu0 %v770
      %v876 = vpop.f32.mrf.mxu0
      %v877 = vadd.f32 0.0, %v876
      %v878 = vpop.f32.mrf.mxu0
      %v879 = vpop.f32.mrf.mxu0
      %v880 = vadd.f32 0.0, %v879
      %v881 = vpop.f32.mrf.mxu0
      %882 = vmatprep.mubr.bf16.mxu0 0
      %883 = vmatmul.mubr.bf16.gmra.mxu0 %v773
      %v884 = vpop.f32.mrf.mxu0
      %v885 = vadd.f32 0.0, %v884
      %v886 = vpop.f32.mrf.mxu0
      %v887 = vpop.f32.mrf.mxu0
      %v888 = vadd.f32 0.0, %v887
      %v889 = vpop.f32.mrf.mxu0
      %890 = vmatprep.mubr.bf16.mxu0 0
      %891 = vmatmul.mubr.bf16.gmra.mxu0 %v776
      %v892 = vpop.f32.mrf.mxu0
      %v893 = vadd.f32 0.0, %v892
      %v894 = vpop.f32.mrf.mxu0
      %v895 = vpop.f32.mrf.mxu0
      %v896 = vadd.f32 0.0, %v895
      %v897 = vpop.f32.mrf.mxu0
      %898 = vmatprep.mubr.bf16.mxu0 0
      %899 = vmatmul.mubr.bf16.gmra.mxu0 %v779
      %v900 = vpop.f32.mrf.mxu0
      %v901 = vadd.f32 0.0, %v900
      %v902 = vpop.f32.mrf.mxu0
      %v903 = vpop.f32.mrf.mxu0
      %v904 = vadd.f32 0.0, %v903
      %v905 = vpop.f32.mrf.mxu0
      %906 = vmatprep.mubr.bf16.mxu0 0
      %907 = vmatmul.mubr.bf16.gmra.mxu0 %v782
      %v908 = vpop.f32.mrf.mxu0
      %v909 = vadd.f32 0.0, %v908
      %v910 = vpop.f32.mrf.mxu0
      %v911 = vpop.f32.mrf.mxu0
      %v912 = vadd.f32 0.0, %v911
      %v913 = vpop.f32.mrf.mxu0
      %914 = vmatprep.mubr.bf16.mxu0 0
      %915 = vmatmul.mubr.bf16.gmra.mxu0 %v785
      %v916 = vpop.f32.mrf.mxu0
      %v917 = vadd.f32 0.0, %v916
      %v918 = vpop.f32.mrf.mxu0
      %v919 = vpop.f32.mrf.mxu0
      %v920 = vadd.f32 0.0, %v919
      %v921 = vpop.f32.mrf.mxu0
      %922 = vmatprep.mubr.bf16.mxu0 0
      %923 = vmatmul.mubr.bf16.gmra.mxu0 %v788
      %v924 = vpop.f32.mrf.mxu0
      %v925 = vadd.f32 0.0, %v924
      %v926 = vpop.f32.mrf.mxu0
      %v927 = vpop.f32.mrf.mxu0
      %v928 = vadd.f32 0.0, %v927
      %v929 = vpop.f32.mrf.mxu0
      %930 = vmatprep.mubr.bf16.mxu0 0
      %931 = vmatmul.mubr.bf16.gmra.mxu0 %v791
      %v932 = vpop.f32.mrf.mxu0
      %v933 = vadd.f32 0.0, %v932
      %v934 = vpop.f32.mrf.mxu0
      %v935 = vpop.f32.mrf.mxu0
      %v936 = vadd.f32 0.0, %v935
      %v937 = vpop.f32.mrf.mxu0
      %938 = vmatprep.mubr.bf16.mxu0 0
      %939 = vmatmul.mubr.bf16.gmra.mxu0 %v794
      %v940 = vpop.f32.mrf.mxu0
      %v941 = vadd.f32 0.0, %v940
      %v942 = vpop.f32.mrf.mxu0
      %v943 = vpop.f32.mrf.mxu0
      %v944 = vadd.f32 0.0, %v943
      %v945 = vpop.f32.mrf.mxu0
      %946 = vmatprep.mubr.bf16.mxu0 0
      %947 = vmatmul.mubr.bf16.gmra.mxu0 %v797
      %v948 = vpop.f32.mrf.mxu0
      %v949 = vadd.f32 0.0, %v948
      %v950 = vpop.f32.mrf.mxu0
      %v951 = vpop.f32.mrf.mxu0
      %v952 = vadd.f32 0.0, %v951
      %v953 = vpop.f32.mrf.mxu0
      %954 = vmatprep.mubr.bf16.mxu0 0
      %955 = vmatmul.mubr.bf16.gmra.mxu0 %v800
      %v956 = vpop.f32.mrf.mxu0
      %v957 = vadd.f32 0.0, %v956
      %v958 = vpop.f32.mrf.mxu0
      %v959 = vpop.f32.mrf.mxu0
      %v960 = vadd.f32 0.0, %v959
      %v961 = vpop.f32.mrf.mxu0
      %962 = vdwg.mxu0
      %v995 = vunpack.c.l.b16 %v253
      %v996 = vunpack.c.l.b16 %v254
      %v997 = vunpack.c.l.b16 %v256
      %v998 = vunpack.c.l.b16 %v257
      %v999 = vunpack.c.l.b16 %v259
      %v1000 = vunpack.c.l.b16 %v260
      %v1001 = vunpack.c.l.b16 %v262
      %v1002 = vunpack.c.l.b16 %v263
      %v1003 = vunpack.c.l.b16 %v265
      %v1004 = vunpack.c.l.b16 %v266
      %v1005 = vunpack.c.l.b16 %v268
      %v1006 = vunpack.c.l.b16 %v269
      %v1007 = vunpack.c.l.b16 %v271
      %v1008 = vunpack.c.l.b16 %v272
      %v1009 = vunpack.c.l.b16 %v274
      %v1010 = vunpack.c.l.b16 %v275
      %v1011 = vunpack.c.l.b16 %v277
      %v1012 = vunpack.c.l.b16 %v278
      %v1013 = vunpack.c.l.b16 %v280
      %v1014 = vunpack.c.l.b16 %v281
      %v1015 = vunpack.c.l.b16 %v283
      %v1016 = vunpack.c.l.b16 %v284
      %v1017 = vunpack.c.l.b16 %v286
      %v1018 = vunpack.c.l.b16 %v287
      %v1019 = vunpack.c.l.b16 %v289
      %v1020 = vunpack.c.l.b16 %v290
      %v1021 = vunpack.c.l.b16 %v292
      %v1022 = vunpack.c.l.b16 %v293
      %v1023 = vunpack.c.l.b16 %v295
      %v1024 = vunpack.c.l.b16 %v296
      %v1025 = vunpack.c.l.b16 %v298
      %v1026 = vunpack.c.l.b16 %v299
      %v1027 = vpack.c.b16 %v996, %v995
      %v1028 = vpack.c.b16 %v998, %v997
      %v1029 = vpack.c.b16 %v1000, %v999
      %v1030 = vpack.c.b16 %v1002, %v1001
      %v1031 = vpack.c.b16 %v1004, %v1003
      %v1032 = vpack.c.b16 %v1006, %v1005
      %v1033 = vpack.c.b16 %v1008, %v1007
      %v1034 = vpack.c.b16 %v1010, %v1009
      %v1035 = vpack.c.b16 %v1012, %v1011
      %v1036 = vpack.c.b16 %v1014, %v1013
      %v1037 = vpack.c.b16 %v1016, %v1015
      %v1038 = vpack.c.b16 %v1018, %v1017
      %v1039 = vpack.c.b16 %v1020, %v1019
      %v1040 = vpack.c.b16 %v1022, %v1021
      %v1041 = vpack.c.b16 %v1024, %v1023
      %v1042 = vpack.c.b16 %v1026, %v1025
      %v1045 = vunpack.c.l.b16 %v307
      %v1046 = vunpack.c.l.b16 %v308
      %v1047 = vpack.c.b16 %v1046, %v1045
      %v1050 = vsel %vm753, %v1027, 0
      %v1053 = vsel %vm753, %v1028, 0
      %v1056 = vsel %vm753, %v1029, 0
      %v1059 = vsel %vm753, %v1030, 0
      %v1062 = vsel %vm753, %v1031, 0
      %v1065 = vsel %vm753, %v1032, 0
      %v1068 = vsel %vm753, %v1033, 0
      %v1071 = vsel %vm753, %v1034, 0
      %v1074 = vsel %vm753, %v1035, 0
      %v1077 = vsel %vm753, %v1036, 0
      %v1080 = vsel %vm753, %v1037, 0
      %v1083 = vsel %vm753, %v1038, 0
      %v1086 = vsel %vm753, %v1039, 0
      %v1089 = vsel %vm753, %v1040, 0
      %v1092 = vsel %vm753, %v1041, 0
      %v1095 = vsel %vm753, %v1042, 0
      %1097 = vmatprep.subr.bf16.mxu0 0
      %1098 = vmatpush1.bf16.msra.mxu0 0
      %1099 = vmatprep.subr.bf16.mxu0 0
      %1100 = vmatpush1.bf16.msra.mxu0 0
      %1101 = vmatprep.subr.bf16.mxu0 0
      %1102 = vmatpush1.bf16.msra.mxu0 0
      %1103 = vmatprep.subr.bf16.mxu0 0
      %1104 = vmatpush1.bf16.msra.mxu0 0
      %1105 = vmatprep.subr.bf16.mxu0 0
      %1106 = vmatpush1.bf16.msra.mxu0 0
      %1107 = vmatprep.subr.bf16.mxu0 0
      %1108 = vmatpush1.bf16.msra.mxu0 0
      %1109 = vmatprep.subr.bf16.mxu0 0
      %1110 = vmatpush1.bf16.msra.mxu0 0
      %1111 = vmatprep.subr.bf16.mxu0 0
      %1112 = vmatpush1.bf16.msra.mxu0 %v1047
      %1113 = vmatprep.subr.bf16.mxu0 0
      %1114 = vmatpush2.bf16.msra.mxu0 0
      %1115 = vmatprep.subr.bf16.mxu0 0
      %1116 = vmatpush2.bf16.msra.mxu0 0
      %1117 = vmatprep.subr.bf16.mxu0 0
      %1118 = vmatpush2.bf16.msra.mxu0 0
      %1119 = vmatprep.subr.bf16.mxu0 0
      %1120 = vmatpush2.bf16.msra.mxu0 0
      %1121 = vmatprep.subr.bf16.mxu0 0
      %1122 = vmatpush2.bf16.msra.mxu0 0
      %1123 = vmatprep.subr.bf16.mxu0 0
      %1124 = vmatpush2.bf16.msra.mxu0 0
      %1125 = vmatprep.subr.bf16.mxu0 0
      %1126 = vmatpush2.bf16.msra.mxu0 0
      %1127 = vmatprep.subr.bf16.mxu0 0
      %1128 = vmatpush2.bf16.msra.mxu0 0
      %1129 = vmatprep.mubr.bf16.mxu0 0
      %1130 = vmatmul.mubr.bf16.gmra.mxu0 %v1050
      %v1131 = vpop.f32.mrf.mxu0
      %v1132 = vadd.f32 %v837, %v1131
      %v1133 = vpop.f32.mrf.mxu0
      %v1134 = vpop.f32.mrf.mxu0
      %v1135 = vadd.f32 %v840, %v1134
      %v1136 = vpop.f32.mrf.mxu0
      %1137 = vmatprep.mubr.bf16.mxu0 0
      %1138 = vmatmul.mubr.bf16.gmra.mxu0 %v1053
      %v1139 = vpop.f32.mrf.mxu0
      %v1140 = vadd.f32 %v845, %v1139
      %v1141 = vpop.f32.mrf.mxu0
      %v1142 = vpop.f32.mrf.mxu0
      %v1143 = vadd.f32 %v848, %v1142
      %v1144 = vpop.f32.mrf.mxu0
      %1145 = vmatprep.mubr.bf16.mxu0 0
      %1146 = vmatmul.mubr.bf16.gmra.mxu0 %v1056
      %v1147 = vpop.f32.mrf.mxu0
      %v1148 = vadd.f32 %v853, %v1147
      %v1149 = vpop.f32.mrf.mxu0
      %v1150 = vpop.f32.mrf.mxu0
      %v1151 = vadd.f32 %v856, %v1150
      %v1152 = vpop.f32.mrf.mxu0
      %1153 = vmatprep.mubr.bf16.mxu0 0
      %1154 = vmatmul.mubr.bf16.gmra.mxu0 %v1059
      %v1155 = vpop.f32.mrf.mxu0
      %v1156 = vadd.f32 %v861, %v1155
      %v1157 = vpop.f32.mrf.mxu0
      %v1158 = vpop.f32.mrf.mxu0
      %v1159 = vadd.f32 %v864, %v1158
      %v1160 = vpop.f32.mrf.mxu0
      %1161 = vmatprep.mubr.bf16.mxu0 0
      %1162 = vmatmul.mubr.bf16.gmra.mxu0 %v1062
      %v1163 = vpop.f32.mrf.mxu0
      %v1164 = vadd.f32 %v869, %v1163
      %v1165 = vpop.f32.mrf.mxu0
      %v1166 = vpop.f32.mrf.mxu0
      %v1167 = vadd.f32 %v872, %v1166
      %v1168 = vpop.f32.mrf.mxu0
      %1169 = vmatprep.mubr.bf16.mxu0 0
      %1170 = vmatmul.mubr.bf16.gmra.mxu0 %v1065
      %v1171 = vpop.f32.mrf.mxu0
      %v1172 = vadd.f32 %v877, %v1171
      %v1173 = vpop.f32.mrf.mxu0
      %v1174 = vpop.f32.mrf.mxu0
      %v1175 = vadd.f32 %v880, %v1174
      %v1176 = vpop.f32.mrf.mxu0
      %1177 = vmatprep.mubr.bf16.mxu0 0
      %1178 = vmatmul.mubr.bf16.gmra.mxu0 %v1068
      %v1179 = vpop.f32.mrf.mxu0
      %v1180 = vadd.f32 %v885, %v1179
      %v1181 = vpop.f32.mrf.mxu0
      %v1182 = vpop.f32.mrf.mxu0
      %v1183 = vadd.f32 %v888, %v1182
      %v1184 = vpop.f32.mrf.mxu0
      %1185 = vmatprep.mubr.bf16.mxu0 0
      %1186 = vmatmul.mubr.bf16.gmra.mxu0 %v1071
      %v1187 = vpop.f32.mrf.mxu0
      %v1188 = vadd.f32 %v893, %v1187
      %v1189 = vpop.f32.mrf.mxu0
      %v1190 = vpop.f32.mrf.mxu0
      %v1191 = vadd.f32 %v896, %v1190
      %v1192 = vpop.f32.mrf.mxu0
      %1193 = vmatprep.mubr.bf16.mxu0 0
      %1194 = vmatmul.mubr.bf16.gmra.mxu0 %v1074
      %v1195 = vpop.f32.mrf.mxu0
      %v1196 = vadd.f32 %v901, %v1195
      %v1197 = vpop.f32.mrf.mxu0
      %v1198 = vpop.f32.mrf.mxu0
      %v1199 = vadd.f32 %v904, %v1198
      %v1200 = vpop.f32.mrf.mxu0
      %1201 = vmatprep.mubr.bf16.mxu0 0
      %1202 = vmatmul.mubr.bf16.gmra.mxu0 %v1077
      %v1203 = vpop.f32.mrf.mxu0
      %v1204 = vadd.f32 %v909, %v1203
      %v1205 = vpop.f32.mrf.mxu0
      %v1206 = vpop.f32.mrf.mxu0
      %v1207 = vadd.f32 %v912, %v1206
      %v1208 = vpop.f32.mrf.mxu0
      %1209 = vmatprep.mubr.bf16.mxu0 0
      %1210 = vmatmul.mubr.bf16.gmra.mxu0 %v1080
      %v1211 = vpop.f32.mrf.mxu0
      %v1212 = vadd.f32 %v917, %v1211
      %v1213 = vpop.f32.mrf.mxu0
      %v1214 = vpop.f32.mrf.mxu0
      %v1215 = vadd.f32 %v920, %v1214
      %v1216 = vpop.f32.mrf.mxu0
      %1217 = vmatprep.mubr.bf16.mxu0 0
      %1218 = vmatmul.mubr.bf16.gmra.mxu0 %v1083
      %v1219 = vpop.f32.mrf.mxu0
      %v1220 = vadd.f32 %v925, %v1219
      %v1221 = vpop.f32.mrf.mxu0
      %v1222 = vpop.f32.mrf.mxu0
      %v1223 = vadd.f32 %v928, %v1222
      %v1224 = vpop.f32.mrf.mxu0
      %1225 = vmatprep.mubr.bf16.mxu0 0
      %1226 = vmatmul.mubr.bf16.gmra.mxu0 %v1086
      %v1227 = vpop.f32.mrf.mxu0
      %v1228 = vadd.f32 %v933, %v1227
      %v1229 = vpop.f32.mrf.mxu0
      %v1230 = vpop.f32.mrf.mxu0
      %v1231 = vadd.f32 %v936, %v1230
      %v1232 = vpop.f32.mrf.mxu0
      %1233 = vmatprep.mubr.bf16.mxu0 0
      %1234 = vmatmul.mubr.bf16.gmra.mxu0 %v1089
      %v1235 = vpop.f32.mrf.mxu0
      %v1236 = vadd.f32 %v941, %v1235
      %v1237 = vpop.f32.mrf.mxu0
      %v1238 = vpop.f32.mrf.mxu0
      %v1239 = vadd.f32 %v944, %v1238
      %v1240 = vpop.f32.mrf.mxu0
      %1241 = vmatprep.mubr.bf16.mxu0 0
      %1242 = vmatmul.mubr.bf16.gmra.mxu0 %v1092
      %v1243 = vpop.f32.mrf.mxu0
      %v1244 = vadd.f32 %v949, %v1243
      %v1245 = vpop.f32.mrf.mxu0
      %v1246 = vpop.f32.mrf.mxu0
      %v1247 = vadd.f32 %v952, %v1246
      %v1248 = vpop.f32.mrf.mxu0
      %1249 = vmatprep.mubr.bf16.mxu0 0
      %1250 = vmatmul.mubr.bf16.gmra.mxu0 %v1095
      %v1251 = vpop.f32.mrf.mxu0
      %v1252 = vadd.f32 %v957, %v1251
      %v1253 = vpop.f32.mrf.mxu0
      %v1254 = vpop.f32.mrf.mxu0
      %v1255 = vadd.f32 %v960, %v1254
      %v1256 = vpop.f32.mrf.mxu0
      %1257 = vdwg.mxu0
      %vm1274 = vcmask 1042432
      %vm1275 = vcmask 1046532
      %vm1276 = vmor %vm1274, %vm1275
      %v1277 = vrot.slane %v253, 5
      %v1278 = vrot.slane %v1277, 4
      %v1279 = vrot.slane %v254, 5
      %v1280 = vsel %vm1276, %v1278, %v1279
      %v1281 = vrot.slane %v1279, 4
      %v1282 = vrot.slane %v255, 5
      %v1283 = vsel %vm1276, %v1281, %v1282
      %v1284 = vrot.slane %v256, 5
      %v1285 = vrot.slane %v1284, 4
      %v1286 = vrot.slane %v257, 5
      %v1287 = vsel %vm1276, %v1285, %v1286
      %v1288 = vrot.slane %v1286, 4
      %v1289 = vrot.slane %v258, 5
      %v1290 = vsel %vm1276, %v1288, %v1289
      %v1291 = vrot.slane %v259, 5
      %v1292 = vrot.slane %v1291, 4
      %v1293 = vrot.slane %v260, 5
      %v1294 = vsel %vm1276, %v1292, %v1293
      %v1295 = vrot.slane %v1293, 4
      %v1296 = vrot.slane %v261, 5
      %v1297 = vsel %vm1276, %v1295, %v1296
      %v1298 = vrot.slane %v262, 5
      %v1299 = vrot.slane %v1298, 4
      %v1300 = vrot.slane %v263, 5
      %v1301 = vsel %vm1276, %v1299, %v1300
      %v1302 = vrot.slane %v1300, 4
      %v1303 = vrot.slane %v264, 5
      %v1304 = vsel %vm1276, %v1302, %v1303
      %v1305 = vrot.slane %v265, 5
      %v1306 = vrot.slane %v1305, 4
      %v1307 = vrot.slane %v266, 5
      %v1308 = vsel %vm1276, %v1306, %v1307
      %v1309 = vrot.slane %v1307, 4
      %v1310 = vrot.slane %v267, 5
      %v1311 = vsel %vm1276, %v1309, %v1310
      %v1312 = vrot.slane %v268, 5
      %v1313 = vrot.slane %v1312, 4
      %v1314 = vrot.slane %v269, 5
      %v1315 = vsel %vm1276, %v1313, %v1314
      %v1316 = vrot.slane %v1314, 4
      %v1317 = vrot.slane %v270, 5
      %v1318 = vsel %vm1276, %v1316, %v1317
      %v1319 = vrot.slane %v271, 5
      %v1320 = vrot.slane %v1319, 4
      %v1321 = vrot.slane %v272, 5
      %v1322 = vsel %vm1276, %v1320, %v1321
      %v1323 = vrot.slane %v1321, 4
      %v1324 = vrot.slane %v273, 5
      %v1325 = vsel %vm1276, %v1323, %v1324
      %v1326 = vrot.slane %v274, 5
      %v1327 = vrot.slane %v1326, 4
      %v1328 = vrot.slane %v275, 5
      %v1329 = vsel %vm1276, %v1327, %v1328
      %v1330 = vrot.slane %v1328, 4
      %v1331 = vrot.slane %v276, 5
      %v1332 = vsel %vm1276, %v1330, %v1331
      %v1333 = vrot.slane %v277, 5
      %v1334 = vrot.slane %v1333, 4
      %v1335 = vrot.slane %v278, 5
      %v1336 = vsel %vm1276, %v1334, %v1335
      %v1337 = vrot.slane %v1335, 4
      %v1338 = vrot.slane %v279, 5
      %v1339 = vsel %vm1276, %v1337, %v1338
      %v1340 = vrot.slane %v280, 5
      %v1341 = vrot.slane %v1340, 4
      %v1342 = vrot.slane %v281, 5
      %v1343 = vsel %vm1276, %v1341, %v1342
      %v1344 = vrot.slane %v1342, 4
      %v1345 = vrot.slane %v282, 5
      %v1346 = vsel %vm1276, %v1344, %v1345
      %v1347 = vrot.slane %v283, 5
      %v1348 = vrot.slane %v1347, 4
      %v1349 = vrot.slane %v284, 5
      %v1350 = vsel %vm1276, %v1348, %v1349
      %v1351 = vrot.slane %v1349, 4
      %v1352 = vrot.slane %v285, 5
      %v1353 = vsel %vm1276, %v1351, %v1352
      %v1354 = vrot.slane %v286, 5
      %v1355 = vrot.slane %v1354, 4
      %v1356 = vrot.slane %v287, 5
      %v1357 = vsel %vm1276, %v1355, %v1356
      %v1358 = vrot.slane %v1356, 4
      %v1359 = vrot.slane %v288, 5
      %v1360 = vsel %vm1276, %v1358, %v1359
      %v1361 = vrot.slane %v289, 5
      %v1362 = vrot.slane %v1361, 4
      %v1363 = vrot.slane %v290, 5
      %v1364 = vsel %vm1276, %v1362, %v1363
      %v1365 = vrot.slane %v1363, 4
      %v1366 = vrot.slane %v291, 5
      %v1367 = vsel %vm1276, %v1365, %v1366
      %v1368 = vrot.slane %v292, 5
      %v1369 = vrot.slane %v1368, 4
      %v1370 = vrot.slane %v293, 5
      %v1371 = vsel %vm1276, %v1369, %v1370
      %v1372 = vrot.slane %v1370, 4
      %v1373 = vrot.slane %v294, 5
      %v1374 = vsel %vm1276, %v1372, %v1373
      %v1375 = vrot.slane %v295, 5
      %v1376 = vrot.slane %v1375, 4
      %v1377 = vrot.slane %v296, 5
      %v1378 = vsel %vm1276, %v1376, %v1377
      %v1379 = vrot.slane %v1377, 4
      %v1380 = vrot.slane %v297, 5
      %v1381 = vsel %vm1276, %v1379, %v1380
      %v1382 = vrot.slane %v298, 5
      %v1383 = vrot.slane %v1382, 4
      %v1384 = vrot.slane %v299, 5
      %v1385 = vsel %vm1276, %v1383, %v1384
      %v1386 = vrot.slane %v1384, 4
      %v1387 = vrot.slane %v300, 5
      %v1388 = vsel %vm1276, %v1386, %v1387
      %s1389 = scalar_lea.vmem %s238, 16
      %v1390 = vld [vmem:[%s1389] sm:$0xf]
      %v1391 = vld [vmem:[%s1389 + $0x4] sm:$0xf]
      %v1392 = vunpack.c.l.b16 %v1280
      %v1393 = vunpack.c.l.b16 %v1283
      %v1394 = vunpack.c.l.b16 %v1287
      %v1395 = vunpack.c.l.b16 %v1290
      %v1396 = vunpack.c.l.b16 %v1294
      %v1397 = vunpack.c.l.b16 %v1297
      %v1398 = vunpack.c.l.b16 %v1301
      %v1399 = vunpack.c.l.b16 %v1304
      %v1400 = vunpack.c.l.b16 %v1308
      %v1401 = vunpack.c.l.b16 %v1311
      %v1402 = vunpack.c.l.b16 %v1315
      %v1403 = vunpack.c.l.b16 %v1318
      %v1404 = vunpack.c.l.b16 %v1322
      %v1405 = vunpack.c.l.b16 %v1325
      %v1406 = vunpack.c.l.b16 %v1329
      %v1407 = vunpack.c.l.b16 %v1332
      %v1408 = vunpack.c.l.b16 %v1336
      %v1409 = vunpack.c.l.b16 %v1339
      %v1410 = vunpack.c.l.b16 %v1343
      %v1411 = vunpack.c.l.b16 %v1346
      %v1412 = vunpack.c.l.b16 %v1350
      %v1413 = vunpack.c.l.b16 %v1353
      %v1414 = vunpack.c.l.b16 %v1357
      %v1415 = vunpack.c.l.b16 %v1360
      %v1416 = vunpack.c.l.b16 %v1364
      %v1417 = vunpack.c.l.b16 %v1367
      %v1418 = vunpack.c.l.b16 %v1371
      %v1419 = vunpack.c.l.b16 %v1374
      %v1420 = vunpack.c.l.b16 %v1378
      %v1421 = vunpack.c.l.b16 %v1381
      %v1422 = vunpack.c.l.b16 %v1385
      %v1423 = vunpack.c.l.b16 %v1388
      %v1424 = vpack.c.b16 %v1393, %v1392
      %v1425 = vpack.c.b16 %v1395, %v1394
      %v1426 = vpack.c.b16 %v1397, %v1396
      %v1427 = vpack.c.b16 %v1399, %v1398
      %v1428 = vpack.c.b16 %v1401, %v1400
      %v1429 = vpack.c.b16 %v1403, %v1402
      %v1430 = vpack.c.b16 %v1405, %v1404
      %v1431 = vpack.c.b16 %v1407, %v1406
      %v1432 = vpack.c.b16 %v1409, %v1408
      %v1433 = vpack.c.b16 %v1411, %v1410
      %v1434 = vpack.c.b16 %v1413, %v1412
      %v1435 = vpack.c.b16 %v1415, %v1414
      %v1436 = vpack.c.b16 %v1417, %v1416
      %v1437 = vpack.c.b16 %v1419, %v1418
      %v1438 = vpack.c.b16 %v1421, %v1420
      %v1439 = vpack.c.b16 %v1423, %v1422
      %v1442 = vunpack.c.l.b16 %v1390
      %v1443 = vunpack.c.l.b16 %v1391
      %v1444 = vpack.c.b16 %v1443, %v1442
      %v1447 = vsel %vm753, %v1424, 0
      %v1450 = vsel %vm753, %v1425, 0
      %v1453 = vsel %vm753, %v1426, 0
      %v1456 = vsel %vm753, %v1427, 0
      %v1459 = vsel %vm753, %v1428, 0
      %v1462 = vsel %vm753, %v1429, 0
      %v1465 = vsel %vm753, %v1430, 0
      %v1468 = vsel %vm753, %v1431, 0
      %v1471 = vsel %vm753, %v1432, 0
      %v1474 = vsel %vm753, %v1433, 0
      %v1477 = vsel %vm753, %v1434, 0
      %v1480 = vsel %vm753, %v1435, 0
      %v1483 = vsel %vm753, %v1436, 0
      %v1486 = vsel %vm753, %v1437, 0
      %v1489 = vsel %vm753, %v1438, 0
      %v1492 = vsel %vm753, %v1439, 0
      %1494 = vmatprep.subr.bf16.mxu0 0
      %1495 = vmatpush1.bf16.msra.mxu0 0
      %1496 = vmatprep.subr.bf16.mxu0 0
      %1497 = vmatpush1.bf16.msra.mxu0 0
      %1498 = vmatprep.subr.bf16.mxu0 0
      %1499 = vmatpush1.bf16.msra.mxu0 0
      %1500 = vmatprep.subr.bf16.mxu0 0
      %1501 = vmatpush1.bf16.msra.mxu0 0
      %1502 = vmatprep.subr.bf16.mxu0 0
      %1503 = vmatpush1.bf16.msra.mxu0 0
      %1504 = vmatprep.subr.bf16.mxu0 0
      %1505 = vmatpush1.bf16.msra.mxu0 0
      %1506 = vmatprep.subr.bf16.mxu0 0
      %1507 = vmatpush1.bf16.msra.mxu0 0
      %1508 = vmatprep.subr.bf16.mxu0 0
      %1509 = vmatpush1.bf16.msra.mxu0 %v1444
      %1510 = vmatprep.subr.bf16.mxu0 0
      %1511 = vmatpush2.bf16.msra.mxu0 0
      %1512 = vmatprep.subr.bf16.mxu0 0
      %1513 = vmatpush2.bf16.msra.mxu0 0
      %1514 = vmatprep.subr.bf16.mxu0 0
      %1515 = vmatpush2.bf16.msra.mxu0 0
      %1516 = vmatprep.subr.bf16.mxu0 0
      %1517 = vmatpush2.bf16.msra.mxu0 0
      %1518 = vmatprep.subr.bf16.mxu0 0
      %1519 = vmatpush2.bf16.msra.mxu0 0
      %1520 = vmatprep.subr.bf16.mxu0 0
      %1521 = vmatpush2.bf16.msra.mxu0 0
      %1522 = vmatprep.subr.bf16.mxu0 0
      %1523 = vmatpush2.bf16.msra.mxu0 0
      %1524 = vmatprep.subr.bf16.mxu0 0
      %1525 = vmatpush2.bf16.msra.mxu0 0
      %1526 = vmatprep.mubr.bf16.mxu0 0
      %1527 = vmatmul.mubr.bf16.gmra.mxu0 %v1447
      %v1528 = vpop.f32.mrf.mxu0
      %v1529 = vadd.f32 0.0, %v1528
      %v1530 = vpop.f32.mrf.mxu0
      %v1531 = vpop.f32.mrf.mxu0
      %v1532 = vadd.f32 0.0, %v1531
      %v1533 = vpop.f32.mrf.mxu0
      %1534 = vmatprep.mubr.bf16.mxu0 0
      %1535 = vmatmul.mubr.bf16.gmra.mxu0 %v1450
      %v1536 = vpop.f32.mrf.mxu0
      %v1537 = vadd.f32 0.0, %v1536
      %v1538 = vpop.f32.mrf.mxu0
      %v1539 = vpop.f32.mrf.mxu0
      %v1540 = vadd.f32 0.0, %v1539
      %v1541 = vpop.f32.mrf.mxu0
      %1542 = vmatprep.mubr.bf16.mxu0 0
      %1543 = vmatmul.mubr.bf16.gmra.mxu0 %v1453
      %v1544 = vpop.f32.mrf.mxu0
      %v1545 = vadd.f32 0.0, %v1544
      %v1546 = vpop.f32.mrf.mxu0
      %v1547 = vpop.f32.mrf.mxu0
      %v1548 = vadd.f32 0.0, %v1547
      %v1549 = vpop.f32.mrf.mxu0
      %1550 = vmatprep.mubr.bf16.mxu0 0
      %1551 = vmatmul.mubr.bf16.gmra.mxu0 %v1456
      %v1552 = vpop.f32.mrf.mxu0
      %v1553 = vadd.f32 0.0, %v1552
      %v1554 = vpop.f32.mrf.mxu0
      %v1555 = vpop.f32.mrf.mxu0
      %v1556 = vadd.f32 0.0, %v1555
      %v1557 = vpop.f32.mrf.mxu0
      %1558 = vmatprep.mubr.bf16.mxu0 0
      %1559 = vmatmul.mubr.bf16.gmra.mxu0 %v1459
      %v1560 = vpop.f32.mrf.mxu0
      %v1561 = vadd.f32 0.0, %v1560
      %v1562 = vpop.f32.mrf.mxu0
      %v1563 = vpop.f32.mrf.mxu0
      %v1564 = vadd.f32 0.0, %v1563
      %v1565 = vpop.f32.mrf.mxu0
      %1566 = vmatprep.mubr.bf16.mxu0 0
      %1567 = vmatmul.mubr.bf16.gmra.mxu0 %v1462
      %v1568 = vpop.f32.mrf.mxu0
      %v1569 = vadd.f32 0.0, %v1568
      %v1570 = vpop.f32.mrf.mxu0
      %v1571 = vpop.f32.mrf.mxu0
      %v1572 = vadd.f32 0.0, %v1571
      %v1573 = vpop.f32.mrf.mxu0
      %1574 = vmatprep.mubr.bf16.mxu0 0
      %1575 = vmatmul.mubr.bf16.gmra.mxu0 %v1465
      %v1576 = vpop.f32.mrf.mxu0
      %v1577 = vadd.f32 0.0, %v1576
      %v1578 = vpop.f32.mrf.mxu0
      %v1579 = vpop.f32.mrf.mxu0
      %v1580 = vadd.f32 0.0, %v1579
      %v1581 = vpop.f32.mrf.mxu0
      %1582 = vmatprep.mubr.bf16.mxu0 0
      %1583 = vmatmul.mubr.bf16.gmra.mxu0 %v1468
      %v1584 = vpop.f32.mrf.mxu0
      %v1585 = vadd.f32 0.0, %v1584
      %v1586 = vpop.f32.mrf.mxu0
      %v1587 = vpop.f32.mrf.mxu0
      %v1588 = vadd.f32 0.0, %v1587
      %v1589 = vpop.f32.mrf.mxu0
      %1590 = vmatprep.mubr.bf16.mxu0 0
      %1591 = vmatmul.mubr.bf16.gmra.mxu0 %v1471
      %v1592 = vpop.f32.mrf.mxu0
      %v1593 = vadd.f32 0.0, %v1592
      %v1594 = vpop.f32.mrf.mxu0
      %v1595 = vpop.f32.mrf.mxu0
      %v1596 = vadd.f32 0.0, %v1595
      %v1597 = vpop.f32.mrf.mxu0
      %1598 = vmatprep.mubr.bf16.mxu0 0
      %1599 = vmatmul.mubr.bf16.gmra.mxu0 %v1474
      %v1600 = vpop.f32.mrf.mxu0
      %v1601 = vadd.f32 0.0, %v1600
      %v1602 = vpop.f32.mrf.mxu0
      %v1603 = vpop.f32.mrf.mxu0
      %v1604 = vadd.f32 0.0, %v1603
      %v1605 = vpop.f32.mrf.mxu0
      %1606 = vmatprep.mubr.bf16.mxu0 0
      %1607 = vmatmul.mubr.bf16.gmra.mxu0 %v1477
      %v1608 = vpop.f32.mrf.mxu0
      %v1609 = vadd.f32 0.0, %v1608
      %v1610 = vpop.f32.mrf.mxu0
      %v1611 = vpop.f32.mrf.mxu0
      %v1612 = vadd.f32 0.0, %v1611
      %v1613 = vpop.f32.mrf.mxu0
      %1614 = vmatprep.mubr.bf16.mxu0 0
      %1615 = vmatmul.mubr.bf16.gmra.mxu0 %v1480
      %v1616 = vpop.f32.mrf.mxu0
      %v1617 = vadd.f32 0.0, %v1616
      %v1618 = vpop.f32.mrf.mxu0
      %v1619 = vpop.f32.mrf.mxu0
      %v1620 = vadd.f32 0.0, %v1619
      %v1621 = vpop.f32.mrf.mxu0
      %1622 = vmatprep.mubr.bf16.mxu0 0
      %1623 = vmatmul.mubr.bf16.gmra.mxu0 %v1483
      %v1624 = vpop.f32.mrf.mxu0
      %v1625 = vadd.f32 0.0, %v1624
      %v1626 = vpop.f32.mrf.mxu0
      %v1627 = vpop.f32.mrf.mxu0
      %v1628 = vadd.f32 0.0, %v1627
      %v1629 = vpop.f32.mrf.mxu0
      %1630 = vmatprep.mubr.bf16.mxu0 0
      %1631 = vmatmul.mubr.bf16.gmra.mxu0 %v1486
      %v1632 = vpop.f32.mrf.mxu0
      %v1633 = vadd.f32 0.0, %v1632
      %v1634 = vpop.f32.mrf.mxu0
      %v1635 = vpop.f32.mrf.mxu0
      %v1636 = vadd.f32 0.0, %v1635
      %v1637 = vpop.f32.mrf.mxu0
      %1638 = vmatprep.mubr.bf16.mxu0 0
      %1639 = vmatmul.mubr.bf16.gmra.mxu0 %v1489
      %v1640 = vpop.f32.mrf.mxu0
      %v1641 = vadd.f32 0.0, %v1640
      %v1642 = vpop.f32.mrf.mxu0
      %v1643 = vpop.f32.mrf.mxu0
      %v1644 = vadd.f32 0.0, %v1643
      %v1645 = vpop.f32.mrf.mxu0
      %1646 = vmatprep.mubr.bf16.mxu0 0
      %1647 = vmatmul.mubr.bf16.gmra.mxu0 %v1492
      %v1648 = vpop.f32.mrf.mxu0
      %v1649 = vadd.f32 0.0, %v1648
      %v1650 = vpop.f32.mrf.mxu0
      %v1651 = vpop.f32.mrf.mxu0
      %v1652 = vadd.f32 0.0, %v1651
      %v1653 = vpop.f32.mrf.mxu0
      %1654 = vdwg.mxu0
      %v1655 = vadd.f32 %v1132, %v1529
      %v1656 = vadd.f32 %v1135, %v1532
      %v1657 = vadd.f32 %v1140, %v1537
      %v1658 = vadd.f32 %v1143, %v1540
      %v1659 = vadd.f32 %v1148, %v1545
      %v1660 = vadd.f32 %v1151, %v1548
      %v1661 = vadd.f32 %v1156, %v1553
      %v1662 = vadd.f32 %v1159, %v1556
      %v1663 = vadd.f32 %v1164, %v1561
      %v1664 = vadd.f32 %v1167, %v1564
      %v1665 = vadd.f32 %v1172, %v1569
      %v1666 = vadd.f32 %v1175, %v1572
      %v1667 = vadd.f32 %v1180, %v1577
      %v1668 = vadd.f32 %v1183, %v1580
      %v1669 = vadd.f32 %v1188, %v1585
      %v1670 = vadd.f32 %v1191, %v1588
      %v1671 = vadd.f32 %v1196, %v1593
      %v1672 = vadd.f32 %v1199, %v1596
      %v1673 = vadd.f32 %v1204, %v1601
      %v1674 = vadd.f32 %v1207, %v1604
      %v1675 = vadd.f32 %v1212, %v1609
      %v1676 = vadd.f32 %v1215, %v1612
      %v1677 = vadd.f32 %v1220, %v1617
      %v1678 = vadd.f32 %v1223, %v1620
      %v1679 = vadd.f32 %v1228, %v1625
      %v1680 = vadd.f32 %v1231, %v1628
      %v1681 = vadd.f32 %v1236, %v1633
      %v1682 = vadd.f32 %v1239, %v1636
      %v1683 = vadd.f32 %v1244, %v1641
      %v1684 = vadd.f32 %v1247, %v1644
      %v1685 = vadd.f32 %v1252, %v1649
      %v1686 = vadd.f32 %v1255, %v1652
      %s1687 = scalar_lea.vmem %s238, 24
      %v1688 = vld [vmem:[%s1687] sm:$0xf]
      %v1689 = vld [vmem:[%s1687 + $0x4] sm:$0xf]
      %v1692 = vunpack.c.l.b16 %v301
      %v1693 = vunpack.c.l.b16 %v302
      %v1694 = vpack.c.b16 %v1693, %v1692
      %v1697 = vunpack.c.l.b16 %v1688
      %v1698 = vunpack.c.l.b16 %v1689
      %v1699 = vpack.c.b16 %v1698, %v1697
      %v1702 = vsel %vm753, %v1694, 0
      %1704 = vmatprep.subr.bf16.mxu0 0
      %1705 = vmatpush1.bf16.msra.mxu0 0
      %1706 = vmatprep.subr.bf16.mxu0 0
      %1707 = vmatpush1.bf16.msra.mxu0 0
      %1708 = vmatprep.subr.bf16.mxu0 0
      %1709 = vmatpush1.bf16.msra.mxu0 0
      %1710 = vmatprep.subr.bf16.mxu0 0
      %1711 = vmatpush1.bf16.msra.mxu0 0
      %1712 = vmatprep.subr.bf16.mxu0 0
      %1713 = vmatpush1.bf16.msra.mxu0 0
      %1714 = vmatprep.subr.bf16.mxu0 0
      %1715 = vmatpush1.bf16.msra.mxu0 0
      %1716 = vmatprep.subr.bf16.mxu0 0
      %1717 = vmatpush1.bf16.msra.mxu0 0
      %1718 = vmatprep.subr.bf16.mxu0 0
      %1719 = vmatpush1.bf16.msra.mxu0 %v1699
      %1720 = vmatprep.subr.bf16.mxu0 0
      %1721 = vmatpush2.bf16.msra.mxu0 0
      %1722 = vmatprep.subr.bf16.mxu0 0
      %1723 = vmatpush2.bf16.msra.mxu0 0
      %1724 = vmatprep.subr.bf16.mxu0 0
      %1725 = vmatpush2.bf16.msra.mxu0 0
      %1726 = vmatprep.subr.bf16.mxu0 0
      %1727 = vmatpush2.bf16.msra.mxu0 0
      %1728 = vmatprep.subr.bf16.mxu0 0
      %1729 = vmatpush2.bf16.msra.mxu0 0
      %1730 = vmatprep.subr.bf16.mxu0 0
      %1731 = vmatpush2.bf16.msra.mxu0 0
      %1732 = vmatprep.subr.bf16.mxu0 0
      %1733 = vmatpush2.bf16.msra.mxu0 0
      %1734 = vmatprep.subr.bf16.mxu0 0
      %1735 = vmatpush2.bf16.msra.mxu0 0
      %1736 = vmatprep.mubr.bf16.mxu0 0
      %1737 = vmatmul.mubr.bf16.gmra.mxu0 %v1053
      %v1738 = vpop.f32.mrf.mxu0
      %v1739 = vadd.f32 0.0, %v1738
      %v1740 = vpop.f32.mrf.mxu0
      %v1741 = vpop.f32.mrf.mxu0
      %v1742 = vadd.f32 0.0, %v1741
      %v1743 = vpop.f32.mrf.mxu0
      %1744 = vmatprep.mubr.bf16.mxu0 0
      %1745 = vmatmul.mubr.bf16.gmra.mxu0 %v1056
      %v1746 = vpop.f32.mrf.mxu0
      %v1747 = vadd.f32 0.0, %v1746
      %v1748 = vpop.f32.mrf.mxu0
      %v1749 = vpop.f32.mrf.mxu0
      %v1750 = vadd.f32 0.0, %v1749
      %v1751 = vpop.f32.mrf.mxu0
      %1752 = vmatprep.mubr.bf16.mxu0 0
      %1753 = vmatmul.mubr.bf16.gmra.mxu0 %v1059
      %v1754 = vpop.f32.mrf.mxu0
      %v1755 = vadd.f32 0.0, %v1754
      %v1756 = vpop.f32.mrf.mxu0
      %v1757 = vpop.f32.mrf.mxu0
      %v1758 = vadd.f32 0.0, %v1757
      %v1759 = vpop.f32.mrf.mxu0
      %1760 = vmatprep.mubr.bf16.mxu0 0
      %1761 = vmatmul.mubr.bf16.gmra.mxu0 %v1062
      %v1762 = vpop.f32.mrf.mxu0
      %v1763 = vadd.f32 0.0, %v1762
      %v1764 = vpop.f32.mrf.mxu0
      %v1765 = vpop.f32.mrf.mxu0
      %v1766 = vadd.f32 0.0, %v1765
      %v1767 = vpop.f32.mrf.mxu0
      %1768 = vmatprep.mubr.bf16.mxu0 0
      %1769 = vmatmul.mubr.bf16.gmra.mxu0 %v1065
      %v1770 = vpop.f32.mrf.mxu0
      %v1771 = vadd.f32 0.0, %v1770
      %v1772 = vpop.f32.mrf.mxu0
      %v1773 = vpop.f32.mrf.mxu0
      %v1774 = vadd.f32 0.0, %v1773
      %v1775 = vpop.f32.mrf.mxu0
      %1776 = vmatprep.mubr.bf16.mxu0 0
      %1777 = vmatmul.mubr.bf16.gmra.mxu0 %v1068
      %v1778 = vpop.f32.mrf.mxu0
      %v1779 = vadd.f32 0.0, %v1778
      %v1780 = vpop.f32.mrf.mxu0
      %v1781 = vpop.f32.mrf.mxu0
      %v1782 = vadd.f32 0.0, %v1781
      %v1783 = vpop.f32.mrf.mxu0
      %1784 = vmatprep.mubr.bf16.mxu0 0
      %1785 = vmatmul.mubr.bf16.gmra.mxu0 %v1071
      %v1786 = vpop.f32.mrf.mxu0
      %v1787 = vadd.f32 0.0, %v1786
      %v1788 = vpop.f32.mrf.mxu0
      %v1789 = vpop.f32.mrf.mxu0
      %v1790 = vadd.f32 0.0, %v1789
      %v1791 = vpop.f32.mrf.mxu0
      %1792 = vmatprep.mubr.bf16.mxu0 0
      %1793 = vmatmul.mubr.bf16.gmra.mxu0 %v1074
      %v1794 = vpop.f32.mrf.mxu0
      %v1795 = vadd.f32 0.0, %v1794
      %v1796 = vpop.f32.mrf.mxu0
      %v1797 = vpop.f32.mrf.mxu0
      %v1798 = vadd.f32 0.0, %v1797
      %v1799 = vpop.f32.mrf.mxu0
      %1800 = vmatprep.mubr.bf16.mxu0 0
      %1801 = vmatmul.mubr.bf16.gmra.mxu0 %v1077
      %v1802 = vpop.f32.mrf.mxu0
      %v1803 = vadd.f32 0.0, %v1802
      %v1804 = vpop.f32.mrf.mxu0
      %v1805 = vpop.f32.mrf.mxu0
      %v1806 = vadd.f32 0.0, %v1805
      %v1807 = vpop.f32.mrf.mxu0
      %1808 = vmatprep.mubr.bf16.mxu0 0
      %1809 = vmatmul.mubr.bf16.gmra.mxu0 %v1080
      %v1810 = vpop.f32.mrf.mxu0
      %v1811 = vadd.f32 0.0, %v1810
      %v1812 = vpop.f32.mrf.mxu0
      %v1813 = vpop.f32.mrf.mxu0
      %v1814 = vadd.f32 0.0, %v1813
      %v1815 = vpop.f32.mrf.mxu0
      %1816 = vmatprep.mubr.bf16.mxu0 0
      %1817 = vmatmul.mubr.bf16.gmra.mxu0 %v1083
      %v1818 = vpop.f32.mrf.mxu0
      %v1819 = vadd.f32 0.0, %v1818
      %v1820 = vpop.f32.mrf.mxu0
      %v1821 = vpop.f32.mrf.mxu0
      %v1822 = vadd.f32 0.0, %v1821
      %v1823 = vpop.f32.mrf.mxu0
      %1824 = vmatprep.mubr.bf16.mxu0 0
      %1825 = vmatmul.mubr.bf16.gmra.mxu0 %v1086
      %v1826 = vpop.f32.mrf.mxu0
      %v1827 = vadd.f32 0.0, %v1826
      %v1828 = vpop.f32.mrf.mxu0
      %v1829 = vpop.f32.mrf.mxu0
      %v1830 = vadd.f32 0.0, %v1829
      %v1831 = vpop.f32.mrf.mxu0
      %1832 = vmatprep.mubr.bf16.mxu0 0
      %1833 = vmatmul.mubr.bf16.gmra.mxu0 %v1089
      %v1834 = vpop.f32.mrf.mxu0
      %v1835 = vadd.f32 0.0, %v1834
      %v1836 = vpop.f32.mrf.mxu0
      %v1837 = vpop.f32.mrf.mxu0
      %v1838 = vadd.f32 0.0, %v1837
      %v1839 = vpop.f32.mrf.mxu0
      %1840 = vmatprep.mubr.bf16.mxu0 0
      %1841 = vmatmul.mubr.bf16.gmra.mxu0 %v1092
      %v1842 = vpop.f32.mrf.mxu0
      %v1843 = vadd.f32 0.0, %v1842
      %v1844 = vpop.f32.mrf.mxu0
      %v1845 = vpop.f32.mrf.mxu0
      %v1846 = vadd.f32 0.0, %v1845
      %v1847 = vpop.f32.mrf.mxu0
      %1848 = vmatprep.mubr.bf16.mxu0 0
      %1849 = vmatmul.mubr.bf16.gmra.mxu0 %v1095
      %v1850 = vpop.f32.mrf.mxu0
      %v1851 = vadd.f32 0.0, %v1850
      %v1852 = vpop.f32.mrf.mxu0
      %v1853 = vpop.f32.mrf.mxu0
      %v1854 = vadd.f32 0.0, %v1853
      %v1855 = vpop.f32.mrf.mxu0
      %1856 = vmatprep.mubr.bf16.mxu0 0
      %1857 = vmatmul.mubr.bf16.gmra.mxu0 %v1702
      %v1858 = vpop.f32.mrf.mxu0
      %v1859 = vadd.f32 0.0, %v1858
      %v1860 = vpop.f32.mrf.mxu0
      %v1861 = vpop.f32.mrf.mxu0
      %v1862 = vadd.f32 0.0, %v1861
      %v1863 = vpop.f32.mrf.mxu0
      %1864 = vdwg.mxu0
      %v1865 = vadd.f32 %v1655, %v1739
      %v1866 = vadd.f32 %v1656, %v1742
      %v1867 = vadd.f32 %v1657, %v1747
      %v1868 = vadd.f32 %v1658, %v1750
      %v1869 = vadd.f32 %v1659, %v1755
      %v1870 = vadd.f32 %v1660, %v1758
      %v1871 = vadd.f32 %v1661, %v1763
      %v1872 = vadd.f32 %v1662, %v1766
      %v1873 = vadd.f32 %v1663, %v1771
      %v1874 = vadd.f32 %v1664, %v1774
      %v1875 = vadd.f32 %v1665, %v1779
      %v1876 = vadd.f32 %v1666, %v1782
      %v1877 = vadd.f32 %v1667, %v1787
      %v1878 = vadd.f32 %v1668, %v1790
      %v1879 = vadd.f32 %v1669, %v1795
      %v1880 = vadd.f32 %v1670, %v1798
      %v1881 = vadd.f32 %v1671, %v1803
      %v1882 = vadd.f32 %v1672, %v1806
      %v1883 = vadd.f32 %v1673, %v1811
      %v1884 = vadd.f32 %v1674, %v1814
      %v1885 = vadd.f32 %v1675, %v1819
      %v1886 = vadd.f32 %v1676, %v1822
      %v1887 = vadd.f32 %v1677, %v1827
      %v1888 = vadd.f32 %v1678, %v1830
      %v1889 = vadd.f32 %v1679, %v1835
      %v1890 = vadd.f32 %v1680, %v1838
      %v1891 = vadd.f32 %v1681, %v1843
      %v1892 = vadd.f32 %v1682, %v1846
      %v1893 = vadd.f32 %v1683, %v1851
      %v1894 = vadd.f32 %v1684, %v1854
      %v1895 = vadd.f32 %v1685, %v1859
      %v1896 = vadd.f32 %v1686, %v1862
      %v1898 = vshrl.u32 %v301, 16
      %v1900 = vrot.slane %v1898, 4
      %v1901 = vshll.u32 %v301, 16
      %v1903 = vrot.slane %v1901, 5
      %v1904 = vor.u32 %v1900, %v1903
      %v1905 = vrot.slane %v1904, 4
      %v1907 = vshll.u32 %v302, 16
      %v1909 = vrot.slane %v1907, 5
      %v1910 = vsel %vm311, %v1905, %v1909
      %v1911 = vshrl.u32 %v302, 16
      %v1913 = vrot.slane %v1911, 4
      %v1914 = vor.u32 %v1913, %v1909
      %v1915 = vrot.slane %v1914, 4
      %v1917 = vshll.u32 %v303, 16
      %v1919 = vrot.slane %v1917, 5
      %v1920 = vsel %vm311, %v1915, %v1919
      %s1921 = scalar_lea.vmem %s238, 32
      %v1922 = vld [vmem:[%s1921] sm:$0xf]
      %v1923 = vld [vmem:[%s1921 + $0x4] sm:$0xf]
      %v1924 = vunpack.c.l.b16 %v1910
      %v1925 = vunpack.c.l.b16 %v1920
      %v1926 = vpack.c.b16 %v1925, %v1924
      %v1929 = vunpack.c.l.b16 %v1922
      %v1930 = vunpack.c.l.b16 %v1923
      %v1931 = vpack.c.b16 %v1930, %v1929
      %v1934 = vsel %vm753, %v1926, 0
      %1936 = vmatprep.subr.bf16.mxu0 0
      %1937 = vmatpush1.bf16.msra.mxu0 0
      %1938 = vmatprep.subr.bf16.mxu0 0
      %1939 = vmatpush1.bf16.msra.mxu0 0
      %1940 = vmatprep.subr.bf16.mxu0 0
      %1941 = vmatpush1.bf16.msra.mxu0 0
      %1942 = vmatprep.subr.bf16.mxu0 0
      %1943 = vmatpush1.bf16.msra.mxu0 0
      %1944 = vmatprep.subr.bf16.mxu0 0
      %1945 = vmatpush1.bf16.msra.mxu0 0
      %1946 = vmatprep.subr.bf16.mxu0 0
      %1947 = vmatpush1.bf16.msra.mxu0 0
      %1948 = vmatprep.subr.bf16.mxu0 0
      %1949 = vmatpush1.bf16.msra.mxu0 0
      %1950 = vmatprep.subr.bf16.mxu0 0
      %1951 = vmatpush1.bf16.msra.mxu0 %v1931
      %1952 = vmatprep.subr.bf16.mxu0 0
      %1953 = vmatpush2.bf16.msra.mxu0 0
      %1954 = vmatprep.subr.bf16.mxu0 0
      %1955 = vmatpush2.bf16.msra.mxu0 0
      %1956 = vmatprep.subr.bf16.mxu0 0
      %1957 = vmatpush2.bf16.msra.mxu0 0
      %1958 = vmatprep.subr.bf16.mxu0 0
      %1959 = vmatpush2.bf16.msra.mxu0 0
      %1960 = vmatprep.subr.bf16.mxu0 0
      %1961 = vmatpush2.bf16.msra.mxu0 0
      %1962 = vmatprep.subr.bf16.mxu0 0
      %1963 = vmatpush2.bf16.msra.mxu0 0
      %1964 = vmatprep.subr.bf16.mxu0 0
      %1965 = vmatpush2.bf16.msra.mxu0 0
      %1966 = vmatprep.subr.bf16.mxu0 0
      %1967 = vmatpush2.bf16.msra.mxu0 0
      %1968 = vmatprep.mubr.bf16.mxu0 0
      %1969 = vmatmul.mubr.bf16.gmra.mxu0 %v758
      %v1970 = vpop.f32.mrf.mxu0
      %v1971 = vadd.f32 0.0, %v1970
      %v1972 = vpop.f32.mrf.mxu0
      %v1973 = vpop.f32.mrf.mxu0
      %v1974 = vadd.f32 0.0, %v1973
      %v1975 = vpop.f32.mrf.mxu0
      %1976 = vmatprep.mubr.bf16.mxu0 0
      %1977 = vmatmul.mubr.bf16.gmra.mxu0 %v761
      %v1978 = vpop.f32.mrf.mxu0
      %v1979 = vadd.f32 0.0, %v1978
      %v1980 = vpop.f32.mrf.mxu0
      %v1981 = vpop.f32.mrf.mxu0
      %v1982 = vadd.f32 0.0, %v1981
      %v1983 = vpop.f32.mrf.mxu0
      %1984 = vmatprep.mubr.bf16.mxu0 0
      %1985 = vmatmul.mubr.bf16.gmra.mxu0 %v764
      %v1986 = vpop.f32.mrf.mxu0
      %v1987 = vadd.f32 0.0, %v1986
      %v1988 = vpop.f32.mrf.mxu0
      %v1989 = vpop.f32.mrf.mxu0
      %v1990 = vadd.f32 0.0, %v1989
      %v1991 = vpop.f32.mrf.mxu0
      %1992 = vmatprep.mubr.bf16.mxu0 0
      %1993 = vmatmul.mubr.bf16.gmra.mxu0 %v767
      %v1994 = vpop.f32.mrf.mxu0
      %v1995 = vadd.f32 0.0, %v1994
      %v1996 = vpop.f32.mrf.mxu0
      %v1997 = vpop.f32.mrf.mxu0
      %v1998 = vadd.f32 0.0, %v1997
      %v1999 = vpop.f32.mrf.mxu0
      %2000 = vmatprep.mubr.bf16.mxu0 0
      %2001 = vmatmul.mubr.bf16.gmra.mxu0 %v770
      %v2002 = vpop.f32.mrf.mxu0
      %v2003 = vadd.f32 0.0, %v2002
      %v2004 = vpop.f32.mrf.mxu0
      %v2005 = vpop.f32.mrf.mxu0
      %v2006 = vadd.f32 0.0, %v2005
      %v2007 = vpop.f32.mrf.mxu0
      %2008 = vmatprep.mubr.bf16.mxu0 0
      %2009 = vmatmul.mubr.bf16.gmra.mxu0 %v773
      %v2010 = vpop.f32.mrf.mxu0
      %v2011 = vadd.f32 0.0, %v2010
      %v2012 = vpop.f32.mrf.mxu0
      %v2013 = vpop.f32.mrf.mxu0
      %v2014 = vadd.f32 0.0, %v2013
      %v2015 = vpop.f32.mrf.mxu0
      %2016 = vmatprep.mubr.bf16.mxu0 0
      %2017 = vmatmul.mubr.bf16.gmra.mxu0 %v776
      %v2018 = vpop.f32.mrf.mxu0
      %v2019 = vadd.f32 0.0, %v2018
      %v2020 = vpop.f32.mrf.mxu0
      %v2021 = vpop.f32.mrf.mxu0
      %v2022 = vadd.f32 0.0, %v2021
      %v2023 = vpop.f32.mrf.mxu0
      %2024 = vmatprep.mubr.bf16.mxu0 0
      %2025 = vmatmul.mubr.bf16.gmra.mxu0 %v779
      %v2026 = vpop.f32.mrf.mxu0
      %v2027 = vadd.f32 0.0, %v2026
      %v2028 = vpop.f32.mrf.mxu0
      %v2029 = vpop.f32.mrf.mxu0
      %v2030 = vadd.f32 0.0, %v2029
      %v2031 = vpop.f32.mrf.mxu0
      %2032 = vmatprep.mubr.bf16.mxu0 0
      %2033 = vmatmul.mubr.bf16.gmra.mxu0 %v782
      %v2034 = vpop.f32.mrf.mxu0
      %v2035 = vadd.f32 0.0, %v2034
      %v2036 = vpop.f32.mrf.mxu0
      %v2037 = vpop.f32.mrf.mxu0
      %v2038 = vadd.f32 0.0, %v2037
      %v2039 = vpop.f32.mrf.mxu0
      %2040 = vmatprep.mubr.bf16.mxu0 0
      %2041 = vmatmul.mubr.bf16.gmra.mxu0 %v785
      %v2042 = vpop.f32.mrf.mxu0
      %v2043 = vadd.f32 0.0, %v2042
      %v2044 = vpop.f32.mrf.mxu0
      %v2045 = vpop.f32.mrf.mxu0
      %v2046 = vadd.f32 0.0, %v2045
      %v2047 = vpop.f32.mrf.mxu0
      %2048 = vmatprep.mubr.bf16.mxu0 0
      %2049 = vmatmul.mubr.bf16.gmra.mxu0 %v788
      %v2050 = vpop.f32.mrf.mxu0
      %v2051 = vadd.f32 0.0, %v2050
      %v2052 = vpop.f32.mrf.mxu0
      %v2053 = vpop.f32.mrf.mxu0
      %v2054 = vadd.f32 0.0, %v2053
      %v2055 = vpop.f32.mrf.mxu0
      %2056 = vmatprep.mubr.bf16.mxu0 0
      %2057 = vmatmul.mubr.bf16.gmra.mxu0 %v791
      %v2058 = vpop.f32.mrf.mxu0
      %v2059 = vadd.f32 0.0, %v2058
      %v2060 = vpop.f32.mrf.mxu0
      %v2061 = vpop.f32.mrf.mxu0
      %v2062 = vadd.f32 0.0, %v2061
      %v2063 = vpop.f32.mrf.mxu0
      %2064 = vmatprep.mubr.bf16.mxu0 0
      %2065 = vmatmul.mubr.bf16.gmra.mxu0 %v794
      %v2066 = vpop.f32.mrf.mxu0
      %v2067 = vadd.f32 0.0, %v2066
      %v2068 = vpop.f32.mrf.mxu0
      %v2069 = vpop.f32.mrf.mxu0
      %v2070 = vadd.f32 0.0, %v2069
      %v2071 = vpop.f32.mrf.mxu0
      %2072 = vmatprep.mubr.bf16.mxu0 0
      %2073 = vmatmul.mubr.bf16.gmra.mxu0 %v797
      %v2074 = vpop.f32.mrf.mxu0
      %v2075 = vadd.f32 0.0, %v2074
      %v2076 = vpop.f32.mrf.mxu0
      %v2077 = vpop.f32.mrf.mxu0
      %v2078 = vadd.f32 0.0, %v2077
      %v2079 = vpop.f32.mrf.mxu0
      %2080 = vmatprep.mubr.bf16.mxu0 0
      %2081 = vmatmul.mubr.bf16.gmra.mxu0 %v800
      %v2082 = vpop.f32.mrf.mxu0
      %v2083 = vadd.f32 0.0, %v2082
      %v2084 = vpop.f32.mrf.mxu0
      %v2085 = vpop.f32.mrf.mxu0
      %v2086 = vadd.f32 0.0, %v2085
      %v2087 = vpop.f32.mrf.mxu0
      %2088 = vmatprep.mubr.bf16.mxu0 0
      %2089 = vmatmul.mubr.bf16.gmra.mxu0 %v1934
      %v2090 = vpop.f32.mrf.mxu0
      %v2091 = vadd.f32 0.0, %v2090
      %v2092 = vpop.f32.mrf.mxu0
      %v2093 = vpop.f32.mrf.mxu0
      %v2094 = vadd.f32 0.0, %v2093
      %v2095 = vpop.f32.mrf.mxu0
      %2096 = vdwg.mxu0
      %v2097 = vadd.f32 %v1865, %v1971
      %v2098 = vadd.f32 %v1866, %v1974
      %v2099 = vadd.f32 %v1867, %v1979
      %v2100 = vadd.f32 %v1868, %v1982
      %v2101 = vadd.f32 %v1869, %v1987
      %v2102 = vadd.f32 %v1870, %v1990
      %v2103 = vadd.f32 %v1871, %v1995
      %v2104 = vadd.f32 %v1872, %v1998
      %v2105 = vadd.f32 %v1873, %v2003
      %v2106 = vadd.f32 %v1874, %v2006
      %v2107 = vadd.f32 %v1875, %v2011
      %v2108 = vadd.f32 %v1876, %v2014
      %v2109 = vadd.f32 %v1877, %v2019
      %v2110 = vadd.f32 %v1878, %v2022
      %v2111 = vadd.f32 %v1879, %v2027
      %v2112 = vadd.f32 %v1880, %v2030
      %v2113 = vadd.f32 %v1881, %v2035
      %v2114 = vadd.f32 %v1882, %v2038
      %v2115 = vadd.f32 %v1883, %v2043
      %v2116 = vadd.f32 %v1884, %v2046
      %v2117 = vadd.f32 %v1885, %v2051
      %v2118 = vadd.f32 %v1886, %v2054
      %v2119 = vadd.f32 %v1887, %v2059
      %v2120 = vadd.f32 %v1888, %v2062
      %v2121 = vadd.f32 %v1889, %v2067
      %v2122 = vadd.f32 %v1890, %v2070
      %v2123 = vadd.f32 %v1891, %v2075
      %v2124 = vadd.f32 %v1892, %v2078
      %v2125 = vadd.f32 %v1893, %v2083
      %v2126 = vadd.f32 %v1894, %v2086
      %v2127 = vadd.f32 %v1895, %v2091
      %v2128 = vadd.f32 %v1896, %v2094
      %v2130 = vrot.slane %v301, 5
      %v2131 = vrot.slane %v2130, 4
      %v2132 = vrot.slane %v302, 5
      %v2133 = vsel %vm1276, %v2131, %v2132
      %v2134 = vrot.slane %v2132, 4
      %v2135 = vrot.slane %v303, 5
      %v2136 = vsel %vm1276, %v2134, %v2135
      %s2137 = scalar_lea.vmem %s238, 40
      %v2138 = vld [vmem:[%s2137] sm:$0xf]
      %v2139 = vld [vmem:[%s2137 + $0x4] sm:$0xf]
      %v2140 = vunpack.c.l.b16 %v2133
      %v2141 = vunpack.c.l.b16 %v2136
      %v2142 = vpack.c.b16 %v2141, %v2140
      %v2145 = vunpack.c.l.b16 %v2138
      %v2146 = vunpack.c.l.b16 %v2139
      %v2147 = vpack.c.b16 %v2146, %v2145
      %v2150 = vsel %vm753, %v2142, 0
      %2152 = vmatprep.subr.bf16.mxu0 0
      %2153 = vmatpush1.bf16.msra.mxu0 0
      %2154 = vmatprep.subr.bf16.mxu0 0
      %2155 = vmatpush1.bf16.msra.mxu0 0
      %2156 = vmatprep.subr.bf16.mxu0 0
      %2157 = vmatpush1.bf16.msra.mxu0 0
      %2158 = vmatprep.subr.bf16.mxu0 0
      %2159 = vmatpush1.bf16.msra.mxu0 0
      %2160 = vmatprep.subr.bf16.mxu0 0
      %2161 = vmatpush1.bf16.msra.mxu0 0
      %2162 = vmatprep.subr.bf16.mxu0 0
      %2163 = vmatpush1.bf16.msra.mxu0 0
      %2164 = vmatprep.subr.bf16.mxu0 0
      %2165 = vmatpush1.bf16.msra.mxu0 0
      %2166 = vmatprep.subr.bf16.mxu0 0
      %2167 = vmatpush1.bf16.msra.mxu0 %v2147
      %2168 = vmatprep.subr.bf16.mxu0 0
      %2169 = vmatpush2.bf16.msra.mxu0 0
      %2170 = vmatprep.subr.bf16.mxu0 0
      %2171 = vmatpush2.bf16.msra.mxu0 0
      %2172 = vmatprep.subr.bf16.mxu0 0
      %2173 = vmatpush2.bf16.msra.mxu0 0
      %2174 = vmatprep.subr.bf16.mxu0 0
      %2175 = vmatpush2.bf16.msra.mxu0 0
      %2176 = vmatprep.subr.bf16.mxu0 0
      %2177 = vmatpush2.bf16.msra.mxu0 0
      %2178 = vmatprep.subr.bf16.mxu0 0
      %2179 = vmatpush2.bf16.msra.mxu0 0
      %2180 = vmatprep.subr.bf16.mxu0 0
      %2181 = vmatpush2.bf16.msra.mxu0 0
      %2182 = vmatprep.subr.bf16.mxu0 0
      %2183 = vmatpush2.bf16.msra.mxu0 0
      %2184 = vmatprep.mubr.bf16.mxu0 0
      %2185 = vmatmul.mubr.bf16.gmra.mxu0 %v1450
      %v2186 = vpop.f32.mrf.mxu0
      %v2187 = vadd.f32 0.0, %v2186
      %v2188 = vpop.f32.mrf.mxu0
      %v2189 = vpop.f32.mrf.mxu0
      %v2190 = vadd.f32 0.0, %v2189
      %v2191 = vpop.f32.mrf.mxu0
      %2192 = vmatprep.mubr.bf16.mxu0 0
      %2193 = vmatmul.mubr.bf16.gmra.mxu0 %v1453
      %v2194 = vpop.f32.mrf.mxu0
      %v2195 = vadd.f32 0.0, %v2194
      %v2196 = vpop.f32.mrf.mxu0
      %v2197 = vpop.f32.mrf.mxu0
      %v2198 = vadd.f32 0.0, %v2197
      %v2199 = vpop.f32.mrf.mxu0
      %2200 = vmatprep.mubr.bf16.mxu0 0
      %2201 = vmatmul.mubr.bf16.gmra.mxu0 %v1456
      %v2202 = vpop.f32.mrf.mxu0
      %v2203 = vadd.f32 0.0, %v2202
      %v2204 = vpop.f32.mrf.mxu0
      %v2205 = vpop.f32.mrf.mxu0
      %v2206 = vadd.f32 0.0, %v2205
      %v2207 = vpop.f32.mrf.mxu0
      %2208 = vmatprep.mubr.bf16.mxu0 0
      %2209 = vmatmul.mubr.bf16.gmra.mxu0 %v1459
      %v2210 = vpop.f32.mrf.mxu0
      %v2211 = vadd.f32 0.0, %v2210
      %v2212 = vpop.f32.mrf.mxu0
      %v2213 = vpop.f32.mrf.mxu0
      %v2214 = vadd.f32 0.0, %v2213
      %v2215 = vpop.f32.mrf.mxu0
      %2216 = vmatprep.mubr.bf16.mxu0 0
      %2217 = vmatmul.mubr.bf16.gmra.mxu0 %v1462
      %v2218 = vpop.f32.mrf.mxu0
      %v2219 = vadd.f32 0.0, %v2218
      %v2220 = vpop.f32.mrf.mxu0
      %v2221 = vpop.f32.mrf.mxu0
      %v2222 = vadd.f32 0.0, %v2221
      %v2223 = vpop.f32.mrf.mxu0
      %2224 = vmatprep.mubr.bf16.mxu0 0
      %2225 = vmatmul.mubr.bf16.gmra.mxu0 %v1465
      %v2226 = vpop.f32.mrf.mxu0
      %v2227 = vadd.f32 0.0, %v2226
      %v2228 = vpop.f32.mrf.mxu0
      %v2229 = vpop.f32.mrf.mxu0
      %v2230 = vadd.f32 0.0, %v2229
      %v2231 = vpop.f32.mrf.mxu0
      %2232 = vmatprep.mubr.bf16.mxu0 0
      %2233 = vmatmul.mubr.bf16.gmra.mxu0 %v1468
      %v2234 = vpop.f32.mrf.mxu0
      %v2235 = vadd.f32 0.0, %v2234
      %v2236 = vpop.f32.mrf.mxu0
      %v2237 = vpop.f32.mrf.mxu0
      %v2238 = vadd.f32 0.0, %v2237
      %v2239 = vpop.f32.mrf.mxu0
      %2240 = vmatprep.mubr.bf16.mxu0 0
      %2241 = vmatmul.mubr.bf16.gmra.mxu0 %v1471
      %v2242 = vpop.f32.mrf.mxu0
      %v2243 = vadd.f32 0.0, %v2242
      %v2244 = vpop.f32.mrf.mxu0
      %v2245 = vpop.f32.mrf.mxu0
      %v2246 = vadd.f32 0.0, %v2245
      %v2247 = vpop.f32.mrf.mxu0
      %2248 = vmatprep.mubr.bf16.mxu0 0
      %2249 = vmatmul.mubr.bf16.gmra.mxu0 %v1474
      %v2250 = vpop.f32.mrf.mxu0
      %v2251 = vadd.f32 0.0, %v2250
      %v2252 = vpop.f32.mrf.mxu0
      %v2253 = vpop.f32.mrf.mxu0
      %v2254 = vadd.f32 0.0, %v2253
      %v2255 = vpop.f32.mrf.mxu0
      %2256 = vmatprep.mubr.bf16.mxu0 0
      %2257 = vmatmul.mubr.bf16.gmra.mxu0 %v1477
      %v2258 = vpop.f32.mrf.mxu0
      %v2259 = vadd.f32 0.0, %v2258
      %v2260 = vpop.f32.mrf.mxu0
      %v2261 = vpop.f32.mrf.mxu0
      %v2262 = vadd.f32 0.0, %v2261
      %v2263 = vpop.f32.mrf.mxu0
      %2264 = vmatprep.mubr.bf16.mxu0 0
      %2265 = vmatmul.mubr.bf16.gmra.mxu0 %v1480
      %v2266 = vpop.f32.mrf.mxu0
      %v2267 = vadd.f32 0.0, %v2266
      %v2268 = vpop.f32.mrf.mxu0
      %v2269 = vpop.f32.mrf.mxu0
      %v2270 = vadd.f32 0.0, %v2269
      %v2271 = vpop.f32.mrf.mxu0
      %2272 = vmatprep.mubr.bf16.mxu0 0
      %2273 = vmatmul.mubr.bf16.gmra.mxu0 %v1483
      %v2274 = vpop.f32.mrf.mxu0
      %v2275 = vadd.f32 0.0, %v2274
      %v2276 = vpop.f32.mrf.mxu0
      %v2277 = vpop.f32.mrf.mxu0
      %v2278 = vadd.f32 0.0, %v2277
      %v2279 = vpop.f32.mrf.mxu0
      %2280 = vmatprep.mubr.bf16.mxu0 0
      %2281 = vmatmul.mubr.bf16.gmra.mxu0 %v1486
      %v2282 = vpop.f32.mrf.mxu0
      %v2283 = vadd.f32 0.0, %v2282
      %v2284 = vpop.f32.mrf.mxu0
      %v2285 = vpop.f32.mrf.mxu0
      %v2286 = vadd.f32 0.0, %v2285
      %v2287 = vpop.f32.mrf.mxu0
      %2288 = vmatprep.mubr.bf16.mxu0 0
      %2289 = vmatmul.mubr.bf16.gmra.mxu0 %v1489
      %v2290 = vpop.f32.mrf.mxu0
      %v2291 = vadd.f32 0.0, %v2290
      %v2292 = vpop.f32.mrf.mxu0
      %v2293 = vpop.f32.mrf.mxu0
      %v2294 = vadd.f32 0.0, %v2293
      %v2295 = vpop.f32.mrf.mxu0
      %2296 = vmatprep.mubr.bf16.mxu0 0
      %2297 = vmatmul.mubr.bf16.gmra.mxu0 %v1492
      %v2298 = vpop.f32.mrf.mxu0
      %v2299 = vadd.f32 0.0, %v2298
      %v2300 = vpop.f32.mrf.mxu0
      %v2301 = vpop.f32.mrf.mxu0
      %v2302 = vadd.f32 0.0, %v2301
      %v2303 = vpop.f32.mrf.mxu0
      %2304 = vmatprep.mubr.bf16.mxu0 0
      %2305 = vmatmul.mubr.bf16.gmra.mxu0 %v2150
      %v2306 = vpop.f32.mrf.mxu0
      %v2307 = vadd.f32 0.0, %v2306
      %v2308 = vpop.f32.mrf.mxu0
      %v2309 = vpop.f32.mrf.mxu0
      %v2310 = vadd.f32 0.0, %v2309
      %v2311 = vpop.f32.mrf.mxu0
      %2312 = vdwg.mxu0
      %v2313 = vadd.f32 %v2097, %v2187
      %v2314 = vadd.f32 %v2098, %v2190
      %v2315 = vadd.f32 %v2099, %v2195
      %v2316 = vadd.f32 %v2100, %v2198
      %v2317 = vadd.f32 %v2101, %v2203
      %v2318 = vadd.f32 %v2102, %v2206
      %v2319 = vadd.f32 %v2103, %v2211
      %v2320 = vadd.f32 %v2104, %v2214
      %v2321 = vadd.f32 %v2105, %v2219
      %v2322 = vadd.f32 %v2106, %v2222
      %v2323 = vadd.f32 %v2107, %v2227
      %v2324 = vadd.f32 %v2108, %v2230
      %v2325 = vadd.f32 %v2109, %v2235
      %v2326 = vadd.f32 %v2110, %v2238
      %v2327 = vadd.f32 %v2111, %v2243
      %v2328 = vadd.f32 %v2112, %v2246
      %v2329 = vadd.f32 %v2113, %v2251
      %v2330 = vadd.f32 %v2114, %v2254
      %v2331 = vadd.f32 %v2115, %v2259
      %v2332 = vadd.f32 %v2116, %v2262
      %v2333 = vadd.f32 %v2117, %v2267
      %v2334 = vadd.f32 %v2118, %v2270
      %v2335 = vadd.f32 %v2119, %v2275
      %v2336 = vadd.f32 %v2120, %v2278
      %v2337 = vadd.f32 %v2121, %v2283
      %v2338 = vadd.f32 %v2122, %v2286
      %v2339 = vadd.f32 %v2123, %v2291
      %v2340 = vadd.f32 %v2124, %v2294
      %v2341 = vadd.f32 %v2125, %v2299
      %v2342 = vadd.f32 %v2126, %v2302
      %v2343 = vadd.f32 %v2127, %v2307
      %v2344 = vadd.f32 %v2128, %v2310
      %s2345 = scalar_lea.vmem %s238, 48
      %v2346 = vld [vmem:[%s2345] sm:$0xf]
      %v2347 = vld [vmem:[%s2345 + $0x4] sm:$0xf]
      %v2350 = vunpack.c.l.b16 %v304
      %v2351 = vunpack.c.l.b16 %v305
      %v2352 = vpack.c.b16 %v2351, %v2350
      %v2355 = vunpack.c.l.b16 %v2346
      %v2356 = vunpack.c.l.b16 %v2347
      %v2357 = vpack.c.b16 %v2356, %v2355
      %v2360 = vsel %vm753, %v2352, 0
      %2362 = vmatprep.subr.bf16.mxu0 0
      %2363 = vmatpush1.bf16.msra.mxu0 0
      %2364 = vmatprep.subr.bf16.mxu0 0
      %2365 = vmatpush1.bf16.msra.mxu0 0
      %2366 = vmatprep.subr.bf16.mxu0 0
      %2367 = vmatpush1.bf16.msra.mxu0 0
      %2368 = vmatprep.subr.bf16.mxu0 0
      %2369 = vmatpush1.bf16.msra.mxu0 0
      %2370 = vmatprep.subr.bf16.mxu0 0
      %2371 = vmatpush1.bf16.msra.mxu0 0
      %2372 = vmatprep.subr.bf16.mxu0 0
      %2373 = vmatpush1.bf16.msra.mxu0 0
      %2374 = vmatprep.subr.bf16.mxu0 0
      %2375 = vmatpush1.bf16.msra.mxu0 0
      %2376 = vmatprep.subr.bf16.mxu0 0
      %2377 = vmatpush1.bf16.msra.mxu0 %v2357
      %2378 = vmatprep.subr.bf16.mxu0 0
      %2379 = vmatpush2.bf16.msra.mxu0 0
      %2380 = vmatprep.subr.bf16.mxu0 0
      %2381 = vmatpush2.bf16.msra.mxu0 0
      %2382 = vmatprep.subr.bf16.mxu0 0
      %2383 = vmatpush2.bf16.msra.mxu0 0
      %2384 = vmatprep.subr.bf16.mxu0 0
      %2385 = vmatpush2.bf16.msra.mxu0 0
      %2386 = vmatprep.subr.bf16.mxu0 0
      %2387 = vmatpush2.bf16.msra.mxu0 0
      %2388 = vmatprep.subr.bf16.mxu0 0
      %2389 = vmatpush2.bf16.msra.mxu0 0
      %2390 = vmatprep.subr.bf16.mxu0 0
      %2391 = vmatpush2.bf16.msra.mxu0 0
      %2392 = vmatprep.subr.bf16.mxu0 0
      %2393 = vmatpush2.bf16.msra.mxu0 0
      %2394 = vmatprep.mubr.bf16.mxu0 0
      %2395 = vmatmul.mubr.bf16.gmra.mxu0 %v1056
      %v2396 = vpop.f32.mrf.mxu0
      %v2397 = vadd.f32 0.0, %v2396
      %v2398 = vpop.f32.mrf.mxu0
      %v2399 = vpop.f32.mrf.mxu0
      %v2400 = vadd.f32 0.0, %v2399
      %v2401 = vpop.f32.mrf.mxu0
      %2402 = vmatprep.mubr.bf16.mxu0 0
      %2403 = vmatmul.mubr.bf16.gmra.mxu0 %v1059
      %v2404 = vpop.f32.mrf.mxu0
      %v2405 = vadd.f32 0.0, %v2404
      %v2406 = vpop.f32.mrf.mxu0
      %v2407 = vpop.f32.mrf.mxu0
      %v2408 = vadd.f32 0.0, %v2407
      %v2409 = vpop.f32.mrf.mxu0
      %2410 = vmatprep.mubr.bf16.mxu0 0
      %2411 = vmatmul.mubr.bf16.gmra.mxu0 %v1062
      %v2412 = vpop.f32.mrf.mxu0
      %v2413 = vadd.f32 0.0, %v2412
      %v2414 = vpop.f32.mrf.mxu0
      %v2415 = vpop.f32.mrf.mxu0
      %v2416 = vadd.f32 0.0, %v2415
      %v2417 = vpop.f32.mrf.mxu0
      %2418 = vmatprep.mubr.bf16.mxu0 0
      %2419 = vmatmul.mubr.bf16.gmra.mxu0 %v1065
      %v2420 = vpop.f32.mrf.mxu0
      %v2421 = vadd.f32 0.0, %v2420
      %v2422 = vpop.f32.mrf.mxu0
      %v2423 = vpop.f32.mrf.mxu0
      %v2424 = vadd.f32 0.0, %v2423
      %v2425 = vpop.f32.mrf.mxu0
      %2426 = vmatprep.mubr.bf16.mxu0 0
      %2427 = vmatmul.mubr.bf16.gmra.mxu0 %v1068
      %v2428 = vpop.f32.mrf.mxu0
      %v2429 = vadd.f32 0.0, %v2428
      %v2430 = vpop.f32.mrf.mxu0
      %v2431 = vpop.f32.mrf.mxu0
      %v2432 = vadd.f32 0.0, %v2431
      %v2433 = vpop.f32.mrf.mxu0
      %2434 = vmatprep.mubr.bf16.mxu0 0
      %2435 = vmatmul.mubr.bf16.gmra.mxu0 %v1071
      %v2436 = vpop.f32.mrf.mxu0
      %v2437 = vadd.f32 0.0, %v2436
      %v2438 = vpop.f32.mrf.mxu0
      %v2439 = vpop.f32.mrf.mxu0
      %v2440 = vadd.f32 0.0, %v2439
      %v2441 = vpop.f32.mrf.mxu0
      %2442 = vmatprep.mubr.bf16.mxu0 0
      %2443 = vmatmul.mubr.bf16.gmra.mxu0 %v1074
      %v2444 = vpop.f32.mrf.mxu0
      %v2445 = vadd.f32 0.0, %v2444
      %v2446 = vpop.f32.mrf.mxu0
      %v2447 = vpop.f32.mrf.mxu0
      %v2448 = vadd.f32 0.0, %v2447
      %v2449 = vpop.f32.mrf.mxu0
      %2450 = vmatprep.mubr.bf16.mxu0 0
      %2451 = vmatmul.mubr.bf16.gmra.mxu0 %v1077
      %v2452 = vpop.f32.mrf.mxu0
      %v2453 = vadd.f32 0.0, %v2452
      %v2454 = vpop.f32.mrf.mxu0
      %v2455 = vpop.f32.mrf.mxu0
      %v2456 = vadd.f32 0.0, %v2455
      %v2457 = vpop.f32.mrf.mxu0
      %2458 = vmatprep.mubr.bf16.mxu0 0
      %2459 = vmatmul.mubr.bf16.gmra.mxu0 %v1080
      %v2460 = vpop.f32.mrf.mxu0
      %v2461 = vadd.f32 0.0, %v2460
      %v2462 = vpop.f32.mrf.mxu0
      %v2463 = vpop.f32.mrf.mxu0
      %v2464 = vadd.f32 0.0, %v2463
      %v2465 = vpop.f32.mrf.mxu0
      %2466 = vmatprep.mubr.bf16.mxu0 0
      %2467 = vmatmul.mubr.bf16.gmra.mxu0 %v1083
      %v2468 = vpop.f32.mrf.mxu0
      %v2469 = vadd.f32 0.0, %v2468
      %v2470 = vpop.f32.mrf.mxu0
      %v2471 = vpop.f32.mrf.mxu0
      %v2472 = vadd.f32 0.0, %v2471
      %v2473 = vpop.f32.mrf.mxu0
      %2474 = vmatprep.mubr.bf16.mxu0 0
      %2475 = vmatmul.mubr.bf16.gmra.mxu0 %v1086
      %v2476 = vpop.f32.mrf.mxu0
      %v2477 = vadd.f32 0.0, %v2476
      %v2478 = vpop.f32.mrf.mxu0
      %v2479 = vpop.f32.mrf.mxu0
      %v2480 = vadd.f32 0.0, %v2479
      %v2481 = vpop.f32.mrf.mxu0
      %2482 = vmatprep.mubr.bf16.mxu0 0
      %2483 = vmatmul.mubr.bf16.gmra.mxu0 %v1089
      %v2484 = vpop.f32.mrf.mxu0
      %v2485 = vadd.f32 0.0, %v2484
      %v2486 = vpop.f32.mrf.mxu0
      %v2487 = vpop.f32.mrf.mxu0
      %v2488 = vadd.f32 0.0, %v2487
      %v2489 = vpop.f32.mrf.mxu0
      %2490 = vmatprep.mubr.bf16.mxu0 0
      %2491 = vmatmul.mubr.bf16.gmra.mxu0 %v1092
      %v2492 = vpop.f32.mrf.mxu0
      %v2493 = vadd.f32 0.0, %v2492
      %v2494 = vpop.f32.mrf.mxu0
      %v2495 = vpop.f32.mrf.mxu0
      %v2496 = vadd.f32 0.0, %v2495
      %v2497 = vpop.f32.mrf.mxu0
      %2498 = vmatprep.mubr.bf16.mxu0 0
      %2499 = vmatmul.mubr.bf16.gmra.mxu0 %v1095
      %v2500 = vpop.f32.mrf.mxu0
      %v2501 = vadd.f32 0.0, %v2500
      %v2502 = vpop.f32.mrf.mxu0
      %v2503 = vpop.f32.mrf.mxu0
      %v2504 = vadd.f32 0.0, %v2503
      %v2505 = vpop.f32.mrf.mxu0
      %2506 = vmatprep.mubr.bf16.mxu0 0
      %2507 = vmatmul.mubr.bf16.gmra.mxu0 %v1702
      %v2508 = vpop.f32.mrf.mxu0
      %v2509 = vadd.f32 0.0, %v2508
      %v2510 = vpop.f32.mrf.mxu0
      %v2511 = vpop.f32.mrf.mxu0
      %v2512 = vadd.f32 0.0, %v2511
      %v2513 = vpop.f32.mrf.mxu0
      %2514 = vmatprep.mubr.bf16.mxu0 0
      %2515 = vmatmul.mubr.bf16.gmra.mxu0 %v2360
      %v2516 = vpop.f32.mrf.mxu0
      %v2517 = vadd.f32 0.0, %v2516
      %v2518 = vpop.f32.mrf.mxu0
      %v2519 = vpop.f32.mrf.mxu0
      %v2520 = vadd.f32 0.0, %v2519
      %v2521 = vpop.f32.mrf.mxu0
      %2522 = vdwg.mxu0
      %v2523 = vadd.f32 %v2313, %v2397
      %v2524 = vadd.f32 %v2314, %v2400
      %v2525 = vadd.f32 %v2315, %v2405
      %v2526 = vadd.f32 %v2316, %v2408
      %v2527 = vadd.f32 %v2317, %v2413
      %v2528 = vadd.f32 %v2318, %v2416
      %v2529 = vadd.f32 %v2319, %v2421
      %v2530 = vadd.f32 %v2320, %v2424
      %v2531 = vadd.f32 %v2321, %v2429
      %v2532 = vadd.f32 %v2322, %v2432
      %v2533 = vadd.f32 %v2323, %v2437
      %v2534 = vadd.f32 %v2324, %v2440
      %v2535 = vadd.f32 %v2325, %v2445
      %v2536 = vadd.f32 %v2326, %v2448
      %v2537 = vadd.f32 %v2327, %v2453
      %v2538 = vadd.f32 %v2328, %v2456
      %v2539 = vadd.f32 %v2329, %v2461
      %v2540 = vadd.f32 %v2330, %v2464
      %v2541 = vadd.f32 %v2331, %v2469
      %v2542 = vadd.f32 %v2332, %v2472
      %v2543 = vadd.f32 %v2333, %v2477
      %v2544 = vadd.f32 %v2334, %v2480
      %v2545 = vadd.f32 %v2335, %v2485
      %v2546 = vadd.f32 %v2336, %v2488
      %v2547 = vadd.f32 %v2337, %v2493
      %v2548 = vadd.f32 %v2338, %v2496
      %v2549 = vadd.f32 %v2339, %v2501
      %v2550 = vadd.f32 %v2340, %v2504
      %v2551 = vadd.f32 %v2341, %v2509
      %v2552 = vadd.f32 %v2342, %v2512
      %v2553 = vadd.f32 %v2343, %v2517
      %v2554 = vadd.f32 %v2344, %v2520
      %v2556 = vshrl.u32 %v304, 16
      %v2558 = vrot.slane %v2556, 4
      %v2559 = vshll.u32 %v304, 16
      %v2561 = vrot.slane %v2559, 5
      %v2562 = vor.u32 %v2558, %v2561
      %v2563 = vrot.slane %v2562, 4
      %v2565 = vshll.u32 %v305, 16
      %v2567 = vrot.slane %v2565, 5
      %v2568 = vsel %vm311, %v2563, %v2567
      %v2569 = vshrl.u32 %v305, 16
      %v2571 = vrot.slane %v2569, 4
      %v2572 = vor.u32 %v2571, %v2567
      %v2573 = vrot.slane %v2572, 4
      %v2575 = vshll.u32 %v306, 16
      %v2577 = vrot.slane %v2575, 5
      %v2578 = vsel %vm311, %v2573, %v2577
      %s2579 = scalar_lea.vmem %s238, 56
      %v2580 = vld [vmem:[%s2579] sm:$0xf]
      %v2581 = vld [vmem:[%s2579 + $0x4] sm:$0xf]
      %v2582 = vunpack.c.l.b16 %v2568
      %v2583 = vunpack.c.l.b16 %v2578
      %v2584 = vpack.c.b16 %v2583, %v2582
      %v2587 = vunpack.c.l.b16 %v2580
      %v2588 = vunpack.c.l.b16 %v2581
      %v2589 = vpack.c.b16 %v2588, %v2587
      %v2592 = vsel %vm753, %v2584, 0
      %2594 = vmatprep.subr.bf16.mxu0 0
      %2595 = vmatpush1.bf16.msra.mxu0 0
      %2596 = vmatprep.subr.bf16.mxu0 0
      %2597 = vmatpush1.bf16.msra.mxu0 0
      %2598 = vmatprep.subr.bf16.mxu0 0
      %2599 = vmatpush1.bf16.msra.mxu0 0
      %2600 = vmatprep.subr.bf16.mxu0 0
      %2601 = vmatpush1.bf16.msra.mxu0 0
      %2602 = vmatprep.subr.bf16.mxu0 0
      %2603 = vmatpush1.bf16.msra.mxu0 0
      %2604 = vmatprep.subr.bf16.mxu0 0
      %2605 = vmatpush1.bf16.msra.mxu0 0
      %2606 = vmatprep.subr.bf16.mxu0 0
      %2607 = vmatpush1.bf16.msra.mxu0 0
      %2608 = vmatprep.subr.bf16.mxu0 0
      %2609 = vmatpush1.bf16.msra.mxu0 %v2589
      %2610 = vmatprep.subr.bf16.mxu0 0
      %2611 = vmatpush2.bf16.msra.mxu0 0
      %2612 = vmatprep.subr.bf16.mxu0 0
      %2613 = vmatpush2.bf16.msra.mxu0 0
      %2614 = vmatprep.subr.bf16.mxu0 0
      %2615 = vmatpush2.bf16.msra.mxu0 0
      %2616 = vmatprep.subr.bf16.mxu0 0
      %2617 = vmatpush2.bf16.msra.mxu0 0
      %2618 = vmatprep.subr.bf16.mxu0 0
      %2619 = vmatpush2.bf16.msra.mxu0 0
      %2620 = vmatprep.subr.bf16.mxu0 0
      %2621 = vmatpush2.bf16.msra.mxu0 0
      %2622 = vmatprep.subr.bf16.mxu0 0
      %2623 = vmatpush2.bf16.msra.mxu0 0
      %2624 = vmatprep.subr.bf16.mxu0 0
      %2625 = vmatpush2.bf16.msra.mxu0 0
      %2626 = vmatprep.mubr.bf16.mxu0 0
      %2627 = vmatmul.mubr.bf16.gmra.mxu0 %v761
      %v2628 = vpop.f32.mrf.mxu0
      %v2629 = vadd.f32 0.0, %v2628
      %v2630 = vpop.f32.mrf.mxu0
      %v2631 = vpop.f32.mrf.mxu0
      %v2632 = vadd.f32 0.0, %v2631
      %v2633 = vpop.f32.mrf.mxu0
      %2634 = vmatprep.mubr.bf16.mxu0 0
      %2635 = vmatmul.mubr.bf16.gmra.mxu0 %v764
      %v2636 = vpop.f32.mrf.mxu0
      %v2637 = vadd.f32 0.0, %v2636
      %v2638 = vpop.f32.mrf.mxu0
      %v2639 = vpop.f32.mrf.mxu0
      %v2640 = vadd.f32 0.0, %v2639
      %v2641 = vpop.f32.mrf.mxu0
      %2642 = vmatprep.mubr.bf16.mxu0 0
      %2643 = vmatmul.mubr.bf16.gmra.mxu0 %v767
      %v2644 = vpop.f32.mrf.mxu0
      %v2645 = vadd.f32 0.0, %v2644
      %v2646 = vpop.f32.mrf.mxu0
      %v2647 = vpop.f32.mrf.mxu0
      %v2648 = vadd.f32 0.0, %v2647
      %v2649 = vpop.f32.mrf.mxu0
      %2650 = vmatprep.mubr.bf16.mxu0 0
      %2651 = vmatmul.mubr.bf16.gmra.mxu0 %v770
      %v2652 = vpop.f32.mrf.mxu0
      %v2653 = vadd.f32 0.0, %v2652
      %v2654 = vpop.f32.mrf.mxu0
      %v2655 = vpop.f32.mrf.mxu0
      %v2656 = vadd.f32 0.0, %v2655
      %v2657 = vpop.f32.mrf.mxu0
      %2658 = vmatprep.mubr.bf16.mxu0 0
      %2659 = vmatmul.mubr.bf16.gmra.mxu0 %v773
      %v2660 = vpop.f32.mrf.mxu0
      %v2661 = vadd.f32 0.0, %v2660
      %v2662 = vpop.f32.mrf.mxu0
      %v2663 = vpop.f32.mrf.mxu0
      %v2664 = vadd.f32 0.0, %v2663
      %v2665 = vpop.f32.mrf.mxu0
      %2666 = vmatprep.mubr.bf16.mxu0 0
      %2667 = vmatmul.mubr.bf16.gmra.mxu0 %v776
      %v2668 = vpop.f32.mrf.mxu0
      %v2669 = vadd.f32 0.0, %v2668
      %v2670 = vpop.f32.mrf.mxu0
      %v2671 = vpop.f32.mrf.mxu0
      %v2672 = vadd.f32 0.0, %v2671
      %v2673 = vpop.f32.mrf.mxu0
      %2674 = vmatprep.mubr.bf16.mxu0 0
      %2675 = vmatmul.mubr.bf16.gmra.mxu0 %v779
      %v2676 = vpop.f32.mrf.mxu0
      %v2677 = vadd.f32 0.0, %v2676
      %v2678 = vpop.f32.mrf.mxu0
      %v2679 = vpop.f32.mrf.mxu0
      %v2680 = vadd.f32 0.0, %v2679
      %v2681 = vpop.f32.mrf.mxu0
      %2682 = vmatprep.mubr.bf16.mxu0 0
      %2683 = vmatmul.mubr.bf16.gmra.mxu0 %v782
      %v2684 = vpop.f32.mrf.mxu0
      %v2685 = vadd.f32 0.0, %v2684
      %v2686 = vpop.f32.mrf.mxu0
      %v2687 = vpop.f32.mrf.mxu0
      %v2688 = vadd.f32 0.0, %v2687
      %v2689 = vpop.f32.mrf.mxu0
      %2690 = vmatprep.mubr.bf16.mxu0 0
      %2691 = vmatmul.mubr.bf16.gmra.mxu0 %v785
      %v2692 = vpop.f32.mrf.mxu0
      %v2693 = vadd.f32 0.0, %v2692
      %v2694 = vpop.f32.mrf.mxu0
      %v2695 = vpop.f32.mrf.mxu0
      %v2696 = vadd.f32 0.0, %v2695
      %v2697 = vpop.f32.mrf.mxu0
      %2698 = vmatprep.mubr.bf16.mxu0 0
      %2699 = vmatmul.mubr.bf16.gmra.mxu0 %v788
      %v2700 = vpop.f32.mrf.mxu0
      %v2701 = vadd.f32 0.0, %v2700
      %v2702 = vpop.f32.mrf.mxu0
      %v2703 = vpop.f32.mrf.mxu0
      %v2704 = vadd.f32 0.0, %v2703
      %v2705 = vpop.f32.mrf.mxu0
      %2706 = vmatprep.mubr.bf16.mxu0 0
      %2707 = vmatmul.mubr.bf16.gmra.mxu0 %v791
      %v2708 = vpop.f32.mrf.mxu0
      %v2709 = vadd.f32 0.0, %v2708
      %v2710 = vpop.f32.mrf.mxu0
      %v2711 = vpop.f32.mrf.mxu0
      %v2712 = vadd.f32 0.0, %v2711
      %v2713 = vpop.f32.mrf.mxu0
      %2714 = vmatprep.mubr.bf16.mxu0 0
      %2715 = vmatmul.mubr.bf16.gmra.mxu0 %v794
      %v2716 = vpop.f32.mrf.mxu0
      %v2717 = vadd.f32 0.0, %v2716
      %v2718 = vpop.f32.mrf.mxu0
      %v2719 = vpop.f32.mrf.mxu0
      %v2720 = vadd.f32 0.0, %v2719
      %v2721 = vpop.f32.mrf.mxu0
      %2722 = vmatprep.mubr.bf16.mxu0 0
      %2723 = vmatmul.mubr.bf16.gmra.mxu0 %v797
      %v2724 = vpop.f32.mrf.mxu0
      %v2725 = vadd.f32 0.0, %v2724
      %v2726 = vpop.f32.mrf.mxu0
      %v2727 = vpop.f32.mrf.mxu0
      %v2728 = vadd.f32 0.0, %v2727
      %v2729 = vpop.f32.mrf.mxu0
      %2730 = vmatprep.mubr.bf16.mxu0 0
      %2731 = vmatmul.mubr.bf16.gmra.mxu0 %v800
      %v2732 = vpop.f32.mrf.mxu0
      %v2733 = vadd.f32 0.0, %v2732
      %v2734 = vpop.f32.mrf.mxu0
      %v2735 = vpop.f32.mrf.mxu0
      %v2736 = vadd.f32 0.0, %v2735
      %v2737 = vpop.f32.mrf.mxu0
      %2738 = vmatprep.mubr.bf16.mxu0 0
      %2739 = vmatmul.mubr.bf16.gmra.mxu0 %v1934
      %v2740 = vpop.f32.mrf.mxu0
      %v2741 = vadd.f32 0.0, %v2740
      %v2742 = vpop.f32.mrf.mxu0
      %v2743 = vpop.f32.mrf.mxu0
      %v2744 = vadd.f32 0.0, %v2743
      %v2745 = vpop.f32.mrf.mxu0
      %2746 = vmatprep.mubr.bf16.mxu0 0
      %2747 = vmatmul.mubr.bf16.gmra.mxu0 %v2592
      %v2748 = vpop.f32.mrf.mxu0
      %v2749 = vadd.f32 0.0, %v2748
      %v2750 = vpop.f32.mrf.mxu0
      %v2751 = vpop.f32.mrf.mxu0
      %v2752 = vadd.f32 0.0, %v2751
      %v2753 = vpop.f32.mrf.mxu0
      %2754 = vdwg.mxu0
      %v2755 = vadd.f32 %v2523, %v2629
      %v2756 = vadd.f32 %v2524, %v2632
      %v2757 = vadd.f32 %v2525, %v2637
      %v2758 = vadd.f32 %v2526, %v2640
      %v2759 = vadd.f32 %v2527, %v2645
      %v2760 = vadd.f32 %v2528, %v2648
      %v2761 = vadd.f32 %v2529, %v2653
      %v2762 = vadd.f32 %v2530, %v2656
      %v2763 = vadd.f32 %v2531, %v2661
      %v2764 = vadd.f32 %v2532, %v2664
      %v2765 = vadd.f32 %v2533, %v2669
      %v2766 = vadd.f32 %v2534, %v2672
      %v2767 = vadd.f32 %v2535, %v2677
      %v2768 = vadd.f32 %v2536, %v2680
      %v2769 = vadd.f32 %v2537, %v2685
      %v2770 = vadd.f32 %v2538, %v2688
      %v2771 = vadd.f32 %v2539, %v2693
      %v2772 = vadd.f32 %v2540, %v2696
      %v2773 = vadd.f32 %v2541, %v2701
      %v2774 = vadd.f32 %v2542, %v2704
      %v2775 = vadd.f32 %v2543, %v2709
      %v2776 = vadd.f32 %v2544, %v2712
      %v2777 = vadd.f32 %v2545, %v2717
      %v2778 = vadd.f32 %v2546, %v2720
      %v2779 = vadd.f32 %v2547, %v2725
      %v2780 = vadd.f32 %v2548, %v2728
      %v2781 = vadd.f32 %v2549, %v2733
      %v2782 = vadd.f32 %v2550, %v2736
      %v2783 = vadd.f32 %v2551, %v2741
      %v2784 = vadd.f32 %v2552, %v2744
      %v2785 = vadd.f32 %v2553, %v2749
      %v2786 = vadd.f32 %v2554, %v2752
      %v2788 = vrot.slane %v304, 5
      %v2789 = vrot.slane %v2788, 4
      %v2790 = vrot.slane %v305, 5
      %v2791 = vsel %vm1276, %v2789, %v2790
      %v2792 = vrot.slane %v2790, 4
      %v2793 = vrot.slane %v306, 5
      %v2794 = vsel %vm1276, %v2792, %v2793
      %s2795 = scalar_lea.vmem %s238, 64
      %v2796 = vld [vmem:[%s2795] sm:$0xf]
      %v2797 = vld [vmem:[%s2795 + $0x4] sm:$0xf]
      %v2798 = vunpack.c.l.b16 %v2791
      %v2799 = vunpack.c.l.b16 %v2794
      %v2800 = vpack.c.b16 %v2799, %v2798
      %v2803 = vunpack.c.l.b16 %v2796
      %v2804 = vunpack.c.l.b16 %v2797
      %v2805 = vpack.c.b16 %v2804, %v2803
      %v2808 = vsel %vm753, %v2800, 0
      %2810 = vmatprep.subr.bf16.mxu0 0
      %2811 = vmatpush1.bf16.msra.mxu0 0
      %2812 = vmatprep.subr.bf16.mxu0 0
      %2813 = vmatpush1.bf16.msra.mxu0 0
      %2814 = vmatprep.subr.bf16.mxu0 0
      %2815 = vmatpush1.bf16.msra.mxu0 0
      %2816 = vmatprep.subr.bf16.mxu0 0
      %2817 = vmatpush1.bf16.msra.mxu0 0
      %2818 = vmatprep.subr.bf16.mxu0 0
      %2819 = vmatpush1.bf16.msra.mxu0 0
      %2820 = vmatprep.subr.bf16.mxu0 0
      %2821 = vmatpush1.bf16.msra.mxu0 0
      %2822 = vmatprep.subr.bf16.mxu0 0
      %2823 = vmatpush1.bf16.msra.mxu0 0
      %2824 = vmatprep.subr.bf16.mxu0 0
      %2825 = vmatpush1.bf16.msra.mxu0 %v2805
      %2826 = vmatprep.subr.bf16.mxu0 0
      %2827 = vmatpush2.bf16.msra.mxu0 0
      %2828 = vmatprep.subr.bf16.mxu0 0
      %2829 = vmatpush2.bf16.msra.mxu0 0
      %2830 = vmatprep.subr.bf16.mxu0 0
      %2831 = vmatpush2.bf16.msra.mxu0 0
      %2832 = vmatprep.subr.bf16.mxu0 0
      %2833 = vmatpush2.bf16.msra.mxu0 0
      %2834 = vmatprep.subr.bf16.mxu0 0
      %2835 = vmatpush2.bf16.msra.mxu0 0
      %2836 = vmatprep.subr.bf16.mxu0 0
      %2837 = vmatpush2.bf16.msra.mxu0 0
      %2838 = vmatprep.subr.bf16.mxu0 0
      %2839 = vmatpush2.bf16.msra.mxu0 0
      %2840 = vmatprep.subr.bf16.mxu0 0
      %2841 = vmatpush2.bf16.msra.mxu0 0
      %2842 = vmatprep.mubr.bf16.mxu0 0
      %2843 = vmatmul.mubr.bf16.gmra.mxu0 %v1453
      %v2844 = vpop.f32.mrf.mxu0
      %v2845 = vadd.f32 0.0, %v2844
      %v2846 = vpop.f32.mrf.mxu0
      %v2847 = vpop.f32.mrf.mxu0
      %v2848 = vadd.f32 0.0, %v2847
      %v2849 = vpop.f32.mrf.mxu0
      %2850 = vmatprep.mubr.bf16.mxu0 0
      %2851 = vmatmul.mubr.bf16.gmra.mxu0 %v1456
      %v2852 = vpop.f32.mrf.mxu0
      %v2853 = vadd.f32 0.0, %v2852
      %v2854 = vpop.f32.mrf.mxu0
      %v2855 = vpop.f32.mrf.mxu0
      %v2856 = vadd.f32 0.0, %v2855
      %v2857 = vpop.f32.mrf.mxu0
      %2858 = vmatprep.mubr.bf16.mxu0 0
      %2859 = vmatmul.mubr.bf16.gmra.mxu0 %v1459
      %v2860 = vpop.f32.mrf.mxu0
      %v2861 = vadd.f32 0.0, %v2860
      %v2862 = vpop.f32.mrf.mxu0
      %v2863 = vpop.f32.mrf.mxu0
      %v2864 = vadd.f32 0.0, %v2863
      %v2865 = vpop.f32.mrf.mxu0
      %2866 = vmatprep.mubr.bf16.mxu0 0
      %2867 = vmatmul.mubr.bf16.gmra.mxu0 %v1462
      %v2868 = vpop.f32.mrf.mxu0
      %v2869 = vadd.f32 0.0, %v2868
      %v2870 = vpop.f32.mrf.mxu0
      %v2871 = vpop.f32.mrf.mxu0
      %v2872 = vadd.f32 0.0, %v2871
      %v2873 = vpop.f32.mrf.mxu0
      %2874 = vmatprep.mubr.bf16.mxu0 0
      %2875 = vmatmul.mubr.bf16.gmra.mxu0 %v1465
      %v2876 = vpop.f32.mrf.mxu0
      %v2877 = vadd.f32 0.0, %v2876
      %v2878 = vpop.f32.mrf.mxu0
      %v2879 = vpop.f32.mrf.mxu0
      %v2880 = vadd.f32 0.0, %v2879
      %v2881 = vpop.f32.mrf.mxu0
      %2882 = vmatprep.mubr.bf16.mxu0 0
      %2883 = vmatmul.mubr.bf16.gmra.mxu0 %v1468
      %v2884 = vpop.f32.mrf.mxu0
      %v2885 = vadd.f32 0.0, %v2884
      %v2886 = vpop.f32.mrf.mxu0
      %v2887 = vpop.f32.mrf.mxu0
      %v2888 = vadd.f32 0.0, %v2887
      %v2889 = vpop.f32.mrf.mxu0
      %2890 = vmatprep.mubr.bf16.mxu0 0
      %2891 = vmatmul.mubr.bf16.gmra.mxu0 %v1471
      %v2892 = vpop.f32.mrf.mxu0
      %v2893 = vadd.f32 0.0, %v2892
      %v2894 = vpop.f32.mrf.mxu0
      %v2895 = vpop.f32.mrf.mxu0
      %v2896 = vadd.f32 0.0, %v2895
      %v2897 = vpop.f32.mrf.mxu0
      %2898 = vmatprep.mubr.bf16.mxu0 0
      %2899 = vmatmul.mubr.bf16.gmra.mxu0 %v1474
      %v2900 = vpop.f32.mrf.mxu0
      %v2901 = vadd.f32 0.0, %v2900
      %v2902 = vpop.f32.mrf.mxu0
      %v2903 = vpop.f32.mrf.mxu0
      %v2904 = vadd.f32 0.0, %v2903
      %v2905 = vpop.f32.mrf.mxu0
      %2906 = vmatprep.mubr.bf16.mxu0 0
      %2907 = vmatmul.mubr.bf16.gmra.mxu0 %v1477
      %v2908 = vpop.f32.mrf.mxu0
      %v2909 = vadd.f32 0.0, %v2908
      %v2910 = vpop.f32.mrf.mxu0
      %v2911 = vpop.f32.mrf.mxu0
      %v2912 = vadd.f32 0.0, %v2911
      %v2913 = vpop.f32.mrf.mxu0
      %2914 = vmatprep.mubr.bf16.mxu0 0
      %2915 = vmatmul.mubr.bf16.gmra.mxu0 %v1480
      %v2916 = vpop.f32.mrf.mxu0
      %v2917 = vadd.f32 0.0, %v2916
      %v2918 = vpop.f32.mrf.mxu0
      %v2919 = vpop.f32.mrf.mxu0
      %v2920 = vadd.f32 0.0, %v2919
      %v2921 = vpop.f32.mrf.mxu0
      %2922 = vmatprep.mubr.bf16.mxu0 0
      %2923 = vmatmul.mubr.bf16.gmra.mxu0 %v1483
      %v2924 = vpop.f32.mrf.mxu0
      %v2925 = vadd.f32 0.0, %v2924
      %v2926 = vpop.f32.mrf.mxu0
      %v2927 = vpop.f32.mrf.mxu0
      %v2928 = vadd.f32 0.0, %v2927
      %v2929 = vpop.f32.mrf.mxu0
      %2930 = vmatprep.mubr.bf16.mxu0 0
      %2931 = vmatmul.mubr.bf16.gmra.mxu0 %v1486
      %v2932 = vpop.f32.mrf.mxu0
      %v2933 = vadd.f32 0.0, %v2932
      %v2934 = vpop.f32.mrf.mxu0
      %v2935 = vpop.f32.mrf.mxu0
      %v2936 = vadd.f32 0.0, %v2935
      %v2937 = vpop.f32.mrf.mxu0
      %2938 = vmatprep.mubr.bf16.mxu0 0
      %2939 = vmatmul.mubr.bf16.gmra.mxu0 %v1489
      %v2940 = vpop.f32.mrf.mxu0
      %v2941 = vadd.f32 0.0, %v2940
      %v2942 = vpop.f32.mrf.mxu0
      %v2943 = vpop.f32.mrf.mxu0
      %v2944 = vadd.f32 0.0, %v2943
      %v2945 = vpop.f32.mrf.mxu0
      %2946 = vmatprep.mubr.bf16.mxu0 0
      %2947 = vmatmul.mubr.bf16.gmra.mxu0 %v1492
      %v2948 = vpop.f32.mrf.mxu0
      %v2949 = vadd.f32 0.0, %v2948
      %v2950 = vpop.f32.mrf.mxu0
      %v2951 = vpop.f32.mrf.mxu0
      %v2952 = vadd.f32 0.0, %v2951
      %v2953 = vpop.f32.mrf.mxu0
      %2954 = vmatprep.mubr.bf16.mxu0 0
      %2955 = vmatmul.mubr.bf16.gmra.mxu0 %v2150
      %v2956 = vpop.f32.mrf.mxu0
      %v2957 = vadd.f32 0.0, %v2956
      %v2958 = vpop.f32.mrf.mxu0
      %v2959 = vpop.f32.mrf.mxu0
      %v2960 = vadd.f32 0.0, %v2959
      %v2961 = vpop.f32.mrf.mxu0
      %2962 = vmatprep.mubr.bf16.mxu0 0
      %2963 = vmatmul.mubr.bf16.gmra.mxu0 %v2808
      %v2964 = vpop.f32.mrf.mxu0
      %v2965 = vadd.f32 0.0, %v2964
      %v2966 = vpop.f32.mrf.mxu0
      %v2967 = vpop.f32.mrf.mxu0
      %v2968 = vadd.f32 0.0, %v2967
      %v2969 = vpop.f32.mrf.mxu0
      %2970 = vdwg.mxu0
      %v2971 = vadd.f32 %v2755, %v2845
      %v2972 = vadd.f32 %v2756, %v2848
      %v2973 = vadd.f32 %v2757, %v2853
      %v2974 = vadd.f32 %v2758, %v2856
      %v2975 = vadd.f32 %v2759, %v2861
      %v2976 = vadd.f32 %v2760, %v2864
      %v2977 = vadd.f32 %v2761, %v2869
      %v2978 = vadd.f32 %v2762, %v2872
      %v2979 = vadd.f32 %v2763, %v2877
      %v2980 = vadd.f32 %v2764, %v2880
      %v2981 = vadd.f32 %v2765, %v2885
      %v2982 = vadd.f32 %v2766, %v2888
      %v2983 = vadd.f32 %v2767, %v2893
      %v2984 = vadd.f32 %v2768, %v2896
      %v2985 = vadd.f32 %v2769, %v2901
      %v2986 = vadd.f32 %v2770, %v2904
      %v2987 = vadd.f32 %v2771, %v2909
      %v2988 = vadd.f32 %v2772, %v2912
      %v2989 = vadd.f32 %v2773, %v2917
      %v2990 = vadd.f32 %v2774, %v2920
      %v2991 = vadd.f32 %v2775, %v2925
      %v2992 = vadd.f32 %v2776, %v2928
      %v2993 = vadd.f32 %v2777, %v2933
      %v2994 = vadd.f32 %v2778, %v2936
      %v2995 = vadd.f32 %v2779, %v2941
      %v2996 = vadd.f32 %v2780, %v2944
      %v2997 = vadd.f32 %v2781, %v2949
      %v2998 = vadd.f32 %v2782, %v2952
      %v2999 = vadd.f32 %v2783, %v2957
      %v3000 = vadd.f32 %v2784, %v2960
      %v3001 = vadd.f32 %v2785, %v2965
      %v3002 = vadd.f32 %v2786, %v2968
      %v3003 = vstv %s252
      %v3004 = vmul.f32 %v2971, %v3003
      %v3005 = vmul.f32 %v2972, %v3003
      %v3006 = vmul.f32 %v2973, %v3003
      %v3007 = vmul.f32 %v2974, %v3003
      %v3008 = vmul.f32 %v2975, %v3003
      %v3009 = vmul.f32 %v2976, %v3003
      %v3010 = vmul.f32 %v2977, %v3003
      %v3011 = vmul.f32 %v2978, %v3003
      %v3012 = vmul.f32 %v2979, %v3003
      %v3013 = vmul.f32 %v2980, %v3003
      %v3014 = vmul.f32 %v2981, %v3003
      %v3015 = vmul.f32 %v2982, %v3003
      %v3016 = vmul.f32 %v2983, %v3003
      %v3017 = vmul.f32 %v2984, %v3003
      %v3018 = vmul.f32 %v2985, %v3003
      %v3019 = vmul.f32 %v2986, %v3003
      %v3020 = vmul.f32 %v2987, %v3003
      %v3021 = vmul.f32 %v2988, %v3003
      %v3022 = vmul.f32 %v2989, %v3003
      %v3023 = vmul.f32 %v2990, %v3003
      %v3024 = vmul.f32 %v2991, %v3003
      %v3025 = vmul.f32 %v2992, %v3003
      %v3026 = vmul.f32 %v2993, %v3003
      %v3027 = vmul.f32 %v2994, %v3003
      %v3028 = vmul.f32 %v2995, %v3003
      %v3029 = vmul.f32 %v2996, %v3003
      %v3030 = vmul.f32 %v2997, %v3003
      %v3031 = vmul.f32 %v2998, %v3003
      %v3032 = vmul.f32 %v2999, %v3003
      %v3033 = vmul.f32 %v3000, %v3003
      %v3034 = vmul.f32 %v3001, %v3003
      %v3035 = vmul.f32 %v3002, %v3003
      %v3036 = vld [vmem:[%s241] sm:$0x1]
      %v3038 = vlaneseq
      %v3039 = vshrl.u32 %v3038, 7
      %v3040 = vsub.s32 0, %v3039
      %v3041 = vrot.slane %v3036, %v3040
      %v3043 = vadd.f32 %v3004, %v3041
      %v3044 = vadd.f32 %v3005, %v3041
      %v3045 = vadd.f32 %v3006, %v3041
      %v3046 = vadd.f32 %v3007, %v3041
      %v3047 = vadd.f32 %v3008, %v3041
      %v3048 = vadd.f32 %v3009, %v3041
      %v3049 = vadd.f32 %v3010, %v3041
      %v3050 = vadd.f32 %v3011, %v3041
      %v3051 = vadd.f32 %v3012, %v3041
      %v3052 = vadd.f32 %v3013, %v3041
      %v3053 = vadd.f32 %v3014, %v3041
      %v3054 = vadd.f32 %v3015, %v3041
      %v3055 = vadd.f32 %v3016, %v3041
      %v3056 = vadd.f32 %v3017, %v3041
      %v3057 = vadd.f32 %v3018, %v3041
      %v3058 = vadd.f32 %v3019, %v3041
      %v3059 = vadd.f32 %v3020, %v3041
      %v3060 = vadd.f32 %v3021, %v3041
      %v3061 = vadd.f32 %v3022, %v3041
      %v3062 = vadd.f32 %v3023, %v3041
      %v3063 = vadd.f32 %v3024, %v3041
      %v3064 = vadd.f32 %v3025, %v3041
      %v3065 = vadd.f32 %v3026, %v3041
      %v3066 = vadd.f32 %v3027, %v3041
      %v3067 = vadd.f32 %v3028, %v3041
      %v3068 = vadd.f32 %v3029, %v3041
      %v3069 = vadd.f32 %v3030, %v3041
      %v3070 = vadd.f32 %v3031, %v3041
      %v3071 = vadd.f32 %v3032, %v3041
      %v3072 = vadd.f32 %v3033, %v3041
      %v3073 = vadd.f32 %v3034, %v3041
      %v3074 = vadd.f32 %v3035, %v3041
      %3075 = vst [vmem:[%s249] sm:$0xff] %v3043
      %3076 = vst [vmem:[%s249 + $0x8] sm:$0xff] %v3044
      %3077 = vst [vmem:[%s249 + $0x10] sm:$0xff] %v3045
      %3078 = vst [vmem:[%s249 + $0x18] sm:$0xff] %v3046
      %3079 = vst [vmem:[%s249 + $0x20] sm:$0xff] %v3047
      %3080 = vst [vmem:[%s249 + $0x28] sm:$0xff] %v3048
      %3081 = vst [vmem:[%s249 + $0x30] sm:$0xff] %v3049
      %3082 = vst [vmem:[%s249 + $0x38] sm:$0xff] %v3050
      %3083 = vst [vmem:[%s249 + $0x40] sm:$0xff] %v3051
      %3084 = vst [vmem:[%s249 + $0x48] sm:$0xff] %v3052
      %3085 = vst [vmem:[%s249 + $0x50] sm:$0xff] %v3053
      %3086 = vst [vmem:[%s249 + $0x58] sm:$0xff] %v3054
      %3087 = vst [vmem:[%s249 + $0x60] sm:$0xff] %v3055
      %3088 = vst [vmem:[%s249 + $0x68] sm:$0xff] %v3056
      %3089 = vst [vmem:[%s249 + $0x70] sm:$0xff] %v3057
      %3090 = vst [vmem:[%s249 + $0x78] sm:$0xff] %v3058
      %3091 = vst [vmem:[%s249 + $0x80] sm:$0xff] %v3059
      %3092 = vst [vmem:[%s249 + $0x88] sm:$0xff] %v3060
      %3093 = vst [vmem:[%s249 + $0x90] sm:$0xff] %v3061
      %3094 = vst [vmem:[%s249 + $0x98] sm:$0xff] %v3062
      %3095 = vst [vmem:[%s249 + $0xa0] sm:$0xff] %v3063
      %3096 = vst [vmem:[%s249 + $0xa8] sm:$0xff] %v3064
      %3097 = vst [vmem:[%s249 + $0xb0] sm:$0xff] %v3065
      %3098 = vst [vmem:[%s249 + $0xb8] sm:$0xff] %v3066
      %3099 = vst [vmem:[%s249 + $0xc0] sm:$0xff] %v3067
      %3100 = vst [vmem:[%s249 + $0xc8] sm:$0xff] %v3068
      %3101 = vst [vmem:[%s249 + $0xd0] sm:$0xff] %v3069
      %3102 = vst [vmem:[%s249 + $0xd8] sm:$0xff] %v3070
      %3103 = vst [vmem:[%s249 + $0xe0] sm:$0xff] %v3071
      %3104 = vst [vmem:[%s249 + $0xe8] sm:$0xff] %v3072
      %3105 = vst [vmem:[%s249 + $0xf0] sm:$0xff] %v3073
      %3106 = vst [vmem:[%s249 + $0xf8] sm:$0xff] %v3074
      %s3107 = smul.u32 32, %s21
      %p3108 = scmp.lt.s32.totalorder %s3107, 63
      %s3109 = scalar_select %p3108, %s3107, 63
      %p3110 = scmp.lt.s32.totalorder %s20, 0
      %s3111 = scalar_select %p3110, %s20, 0
      %s3112 = sadd.s32 %s3111, %s3109
      %s3113 = smul.addr %s3112, 8
      %s3114 = scalar_lea.vmem %s4, %s3113
      // Predicated region
      $region37: #{spectral_norm_conv_forward.3} parent=35 // pred_check
        %p3115 = pneg %p147
      $region38: #{spectral_norm_conv_forward.3} parent=35 // pred_check_branch
        %3117 = sbr.rel (%p3115) target = $region40
      $region39: #{spectral_norm_conv_forward.3} parent=35 // pred_region
        %s3118 = smul.u32 32, %s21
      $region40: #{spectral_norm_conv_forward.3} parent=35 // pred_fallthru
        _
    $region36: #{spectral_norm_conv_forward.3} parent=5 // pred_fallthru
      _
    %p3119 = scmp.le.s32.totalorder 2, %s11
    // Predicated region
    $region41: #{spectral_norm_conv_forward.3} parent=5 // pred_check
      %p3120 = pneg %p3119
    $region42: #{spectral_norm_conv_forward.3} parent=5 // pred_check_branch
      %3122 = sbr.rel (%p3120) target = $region44
    $region43: #{spectral_norm_conv_forward.3} parent=5 // pred_region
      %s3123 = ssub.s32 %s11, 2
      // Predicated region
      $region45: #{spectral_norm_conv_forward.3} parent=43 // pred_check
        %p3124 = pneg %p153
      $region46: #{spectral_norm_conv_forward.3} parent=43 // pred_check_branch
        %3126 = sbr.rel (%p3124) target = $region48
      $region47: #{spectral_norm_conv_forward.3} parent=43 // pred_region
        %s3127 = smul.u32 32, %s23
        %p3128 = scmp.lt.s32.totalorder %s3127, 63
        %s3129 = scalar_select %p3128, %s3127, 63
        %p3130 = scmp.lt.s32.totalorder %s22, 0
        %s3131 = scalar_select %p3130, %s22, 0
        %s3132 = sadd.s32 %s3131, %s3129
        %s3133 = smul.addr %s3132, 8
        %s3134 = scalar_lea.vmem %s4, %s3133
      $region48: #{spectral_norm_conv_forward.3} parent=43 // pred_fallthru
        _
    $region44: #{spectral_norm_conv_forward.3} parent=5 // pred_fallthru
      _
  $region6: #{spectral_norm_conv_forward.3} parent=0 // loop_footer
    %s15 = sadd.s32 1, %s11
  $region7: #{spectral_norm_conv_forward.3} parent=0 // loop_footer_branch
    %10 = sbr.rel target = $region3
  $region8: #{spectral_norm_conv_forward.3} parent=0 // loop_exit
    _

</llo_original>
